<compile_context>
chip_gen: v5e
topology: v5e:2x2
jax: 0.10.0
libtpu: 0.0.40
codegen_flags: <defaults>
</compile_context>

<pallas_src>
import functools

import jax
import jax.numpy as jnp
from jax.experimental import pallas as pl
from jax.experimental.pallas import tpu as pltpu

# Logical (PyTorch) dims.
IN_DIM = 784    # kept un-padded (784 = 49*16: sublane-aligned for bf16)
HID_DIM = 400
OUT_DIM = 10

# 128-lane-aligned padded dims used inside the kernel.
HID_PAD = 512   # ceil(400/128)*128
OUT_PAD = 128   # ceil(10/128)*128


def mlp_kernel(x_ref, w1_ref, b1_ref, w2_ref, b2_ref, w3_ref, b3_ref, o_ref):
    # fc1: bf16 MXU inputs, f32 accumulation; fused bias+ReLU+bf16 epilogue.
    h1 = jnp.dot(x_ref[...], w1_ref[...], preferred_element_type=jnp.float32)
    h1 = jnp.maximum(h1 + b1_ref[...], 0.0).astype(jnp.bfloat16)
    # fc2 + ReLU (same fused epilogue).
    h2 = jnp.dot(h1, w2_ref[...], preferred_element_type=jnp.float32)
    h2 = jnp.maximum(h2 + b2_ref[...], 0.0).astype(jnp.bfloat16)
    # fc3 logits; lane-dense (block_b, 128) bf16 store.
    out = jnp.dot(h2, w3_ref[...], preferred_element_type=jnp.float32)
    o_ref[...] = (out + b3_ref[...]).astype(o_ref.dtype)


def prepare_params(w1, b1, w2, b2, w3, b3):
    """One-time prep: PyTorch (out, in) f32 -> (in, out_padded) bf16 weights
    plus lane-padded f32 bias rows.  Call once and reuse across steps."""
    w1t = jnp.zeros((IN_DIM, HID_PAD), jnp.bfloat16)
    w1t = w1t.at[:, :HID_DIM].set(w1.T.astype(jnp.bfloat16))
    w2t = jnp.zeros((HID_PAD, HID_PAD), jnp.bfloat16)
    w2t = w2t.at[:HID_DIM, :HID_DIM].set(w2.T.astype(jnp.bfloat16))
    w3t = jnp.zeros((HID_PAD, OUT_PAD), jnp.bfloat16)
    w3t = w3t.at[:HID_DIM, :OUT_DIM].set(w3.T.astype(jnp.bfloat16))

    b1r = jnp.zeros((1, HID_PAD), jnp.float32).at[:, :HID_DIM].set(b1.reshape(1, -1))
    b2r = jnp.zeros((1, HID_PAD), jnp.float32).at[:, :HID_DIM].set(b2.reshape(1, -1))
    b3r = jnp.zeros((1, OUT_PAD), jnp.float32).at[:, :OUT_DIM].set(b3.reshape(1, -1))
    return w1t, b1r, w2t, b2r, w3t, b3r


def choose_block_b(batch_size):
    """128-row-aligned batch tile: <=512 rows/step (amortizes ~0.35us/step grid
    overhead on v6e) and >=2 grid steps whenever the batch allows it, so the
    'parallel' axis can feed both v7x TensorCores."""
    if batch_size <= 128:
        return 128
    half = -(-batch_size // 2)              # ceil(B/2): guarantees >= 2 steps
    half = ((half + 127) // 128) * 128      # 128-row alignment
    return min(512, half)


@functools.partial(jax.jit, static_argnames=("block_b",))
def mlp_forward(x, w1t, b1r, w2t, b2r, w3t, b3r, *, block_b=512):
    """x: (B, 784) f32. Weights/biases already prepared via prepare_params."""
    B = x.shape[0]
    num_steps = (B + block_b - 1) // block_b
    b_pad = num_steps * block_b

    # Single cheap prep pass: cast to bf16 (halves the dominant HBM stream)
    # and pad only the batch dim, only when ragged.
    x_bf = x.astype(jnp.bfloat16)
    if b_pad != B:
        x_bf = jnp.pad(x_bf, ((0, b_pad - B), (0, 0)))

    const = lambda i: (0, 0)  # weights/biases resident for the whole call

    flops = 2 * b_pad * (IN_DIM * HID_PAD + HID_PAD * HID_PAD + HID_PAD * OUT_PAD)
    bytes_accessed = (
        b_pad * IN_DIM * 2                                                # x (bf16)
        + (IN_DIM * HID_PAD + HID_PAD * HID_PAD + HID_PAD * OUT_PAD) * 2  # weights (bf16)
        + (2 * HID_PAD + OUT_PAD) * 4                                     # biases (f32)
        + b_pad * OUT_PAD * 2                                             # logits (bf16)
    )

    out_pad = pl.pallas_call(
        mlp_kernel,
        out_shape=jax.ShapeDtypeStruct((b_pad, OUT_PAD), jnp.bfloat16),
        grid_spec=pl.GridSpec(
            grid=(num_steps,),
            in_specs=[
                pl.BlockSpec((block_b, IN_DIM), lambda i: (i, 0)),  # x tile (bf16)
                pl.BlockSpec((IN_DIM, HID_PAD), const),             # W1^T (bf16)
                pl.BlockSpec((1, HID_PAD), const),                  # b1 (f32)
                pl.BlockSpec((HID_PAD, HID_PAD), const),            # W2^T (bf16)
                pl.BlockSpec((1, HID_PAD), const),                  # b2 (f32)
                pl.BlockSpec((HID_PAD, OUT_PAD), const),            # W3^T (bf16)
                pl.BlockSpec((1, OUT_PAD), const),                  # b3 (f32)
            ],
            out_specs=pl.BlockSpec((block_b, OUT_PAD), lambda i: (i, 0)),
        ),
        compiler_params=pltpu.CompilerParams(
            dimension_semantics=("parallel",),
        ),
        cost_estimate=pl.CostEstimate(
            flops=flops, transcendentals=0, bytes_accessed=bytes_accessed),
    )(x_bf, w1t, b1r, w2t, b2r, w3t, b3r)

    # Drop batch padding + the 118 zero logit columns; return f32 like the
    # PyTorch module (tiny (B, 10) cast).
    return out_pad[:B, :OUT_DIM].astype(jnp.float32)


def init_params(key):
    """Deterministic init matching nn.Linear shapes (out_features, in_features)."""
    ks = jax.random.split(key, 6)

    def linear_init(kw, kb, out_f, in_f):
        bound = 1.0 / (in_f ** 0.5)  # PyTorch default U(-1/sqrt(in), 1/sqrt(in))
        w = jax.random.uniform(kw, (out_f, in_f), jnp.float32, -bound, bound)
        b = jax.random.uniform(kb, (out_f,), jnp.float32, -bound, bound)
        return w, b

    w1, b1 = linear_init(ks[0], ks[1], HID_DIM, IN_DIM)
    w2, b2 = linear_init(ks[2], ks[3], HID_DIM, HID_DIM)
    w3, b3 = linear_init(ks[4], ks[5], OUT_DIM, HID_DIM)
    return w1, b1, w2, b2, w3, b3


def reference_forward(x, w1, b1, w2, b2, w3, b3):
    h1 = jnp.maximum(x @ w1.T + b1, 0.0)
    h2 = jnp.maximum(h1 @ w2.T + b2, 0.0)
    return h2 @ w3.T + b3


if __name__ == "__main__":
    key = jax.random.PRNGKey(0)
    k_x, k_p = jax.random.split(key)

    # Ragged batch (200) exercises the batch-pad path; choose_block_b picks 128
    # -> a 2-step "parallel" grid (feeds both TensorCores on v7x).
    B = 200
    x = jax.random.normal(k_x, (B, IN_DIM), jnp.float32)

    params = init_params(k_p)
    prepped = prepare_params(*params)  # one-time transpose/pad/bf16 cast

    block_b = choose_block_b(B)
    out = mlp_forward(x, *prepped, block_b=block_b)
    out = jax.block_until_ready(out)

    ref = reference_forward(x, *params)
    assert out.shape == (B, OUT_DIM)
    # bf16 matmul inputs + bf16 logits with f32 accumulation -> loose tolerance.
    assert jnp.allclose(out, ref, atol=3e-2, rtol=3e-2), "mismatch vs JAX reference"

    print("KERNEL_OK")
</pallas_src>

<mosaic_0001>
module attributes {stable_mosaic.version = 11 : i64} {
  func.func @mlp_kernel(%arg0: i32, %arg1: memref<128x784xbf16, #tpu.memory_space<vmem>>, %arg2: memref<784x512xbf16, #tpu.memory_space<vmem>>, %arg3: memref<1x512xf32, #tpu.memory_space<vmem>>, %arg4: memref<512x512xbf16, #tpu.memory_space<vmem>>, %arg5: memref<1x512xf32, #tpu.memory_space<vmem>>, %arg6: memref<512x128xbf16, #tpu.memory_space<vmem>>, %arg7: memref<1x128xf32, #tpu.memory_space<vmem>>, %arg8: memref<128x128xbf16, #tpu.memory_space<vmem>>) attributes {dimension_semantics = [#tpu.dimension_semantics<parallel>], iteration_bounds = array<i64: 2>, scalar_prefetch = 0 : i64, scratch_operands = 0 : i64, tpu.core_type = #tpu.core_type<tc>, window_params = [{transform_indices = @transform_0, window_bounds = array<i64: 128, 784>}, {pipeline_mode = #tpu.pipeline_mode<synchronous>, transform_indices = @transform_1, window_bounds = array<i64: 784, 512>}, {pipeline_mode = #tpu.pipeline_mode<synchronous>, transform_indices = @transform_2, window_bounds = array<i64: 1, 512>}, {pipeline_mode = #tpu.pipeline_mode<synchronous>, transform_indices = @transform_3, window_bounds = array<i64: 512, 512>}, {pipeline_mode = #tpu.pipeline_mode<synchronous>, transform_indices = @transform_4, window_bounds = array<i64: 1, 512>}, {pipeline_mode = #tpu.pipeline_mode<synchronous>, transform_indices = @transform_5, window_bounds = array<i64: 512, 128>}, {pipeline_mode = #tpu.pipeline_mode<synchronous>, transform_indices = @transform_6, window_bounds = array<i64: 1, 128>}, {transform_indices = @transform_7, window_bounds = array<i64: 128, 128>}]} {
    %c0 = arith.constant 0 : index
    %c0_0 = arith.constant 0 : index
    %0 = vector.load %arg1[%c0, %c0_0] : memref<128x784xbf16, #tpu.memory_space<vmem>>, vector<128x784xbf16>
    %c0_1 = arith.constant 0 : index
    %c0_2 = arith.constant 0 : index
    %1 = vector.load %arg2[%c0_1, %c0_2] : memref<784x512xbf16, #tpu.memory_space<vmem>>, vector<784x512xbf16>
    %cst = arith.constant dense<0.000000e+00> : vector<128x512xf32>
    %2 = tpu.matmul %0, %1, %cst {dimension_numbers = #tpu.dot_dimension_numbers<[1], [0], [0], [1], [0, 0, 1, 1], [], []>} : vector<128x784xbf16>, vector<784x512xbf16>, vector<128x512xf32> -> vector<128x512xf32>
    %c0_3 = arith.constant 0 : index
    %c0_4 = arith.constant 0 : index
    %3 = vector.load %arg3[%c0_3, %c0_4] : memref<1x512xf32, #tpu.memory_space<vmem>>, vector<1x512xf32>
    %4 = vector.broadcast %3 : vector<1x512xf32> to vector<128x512xf32>
    %5 = arith.addf %2, %4 : vector<128x512xf32>
    %cst_5 = arith.constant 0.000000e+00 : f32
    %6 = vector.broadcast %cst_5 : f32 to vector<128x512xf32>
    %7 = arith.maximumf %5, %6 : vector<128x512xf32>
    %8 = arith.truncf %7 : vector<128x512xf32> to vector<128x512xbf16>
    %c0_6 = arith.constant 0 : index
    %c0_7 = arith.constant 0 : index
    %9 = vector.load %arg4[%c0_6, %c0_7] : memref<512x512xbf16, #tpu.memory_space<vmem>>, vector<512x512xbf16>
    %cst_8 = arith.constant dense<0.000000e+00> : vector<128x512xf32>
    %10 = tpu.matmul %8, %9, %cst_8 {dimension_numbers = #tpu.dot_dimension_numbers<[1], [0], [0], [1], [0, 0, 1, 1], [], []>} : vector<128x512xbf16>, vector<512x512xbf16>, vector<128x512xf32> -> vector<128x512xf32>
    %c0_9 = arith.constant 0 : index
    %c0_10 = arith.constant 0 : index
    %11 = vector.load %arg5[%c0_9, %c0_10] : memref<1x512xf32, #tpu.memory_space<vmem>>, vector<1x512xf32>
    %12 = vector.broadcast %11 : vector<1x512xf32> to vector<128x512xf32>
    %13 = arith.addf %10, %12 : vector<128x512xf32>
    %cst_11 = arith.constant 0.000000e+00 : f32
    %14 = vector.broadcast %cst_11 : f32 to vector<128x512xf32>
    %15 = arith.maximumf %13, %14 : vector<128x512xf32>
    %16 = arith.truncf %15 : vector<128x512xf32> to vector<128x512xbf16>
    %c0_12 = arith.constant 0 : index
    %c0_13 = arith.constant 0 : index
    %17 = vector.load %arg6[%c0_12, %c0_13] : memref<512x128xbf16, #tpu.memory_space<vmem>>, vector<512x128xbf16>
    %cst_14 = arith.constant dense<0.000000e+00> : vector<128x128xf32>
    %18 = tpu.matmul %16, %17, %cst_14 {dimension_numbers = #tpu.dot_dimension_numbers<[1], [0], [0], [1], [0, 0, 1, 1], [], []>} : vector<128x512xbf16>, vector<512x128xbf16>, vector<128x128xf32> -> vector<128x128xf32>
    %c0_15 = arith.constant 0 : index
    %c0_16 = arith.constant 0 : index
    %19 = vector.load %arg7[%c0_15, %c0_16] : memref<1x128xf32, #tpu.memory_space<vmem>>, vector<1x128xf32>
    %20 = vector.broadcast %19 : vector<1x128xf32> to vector<128x128xf32>
    %21 = arith.addf %18, %20 : vector<128x128xf32>
    %22 = arith.truncf %21 : vector<128x128xf32> to vector<128x128xbf16>
    %c0_17 = arith.constant 0 : index
    %c0_18 = arith.constant 0 : index
    %23 = vector.load %arg8[%c0_17, %c0_18] : memref<128x128xbf16, #tpu.memory_space<vmem>>, vector<128x128xbf16>
    tpu.vector_store %arg8[%c0_17, %c0_18], %22 {strides = array<i32>} : memref<128x128xbf16, #tpu.memory_space<vmem>>, vector<128x128xbf16>,
    return
  }
  func.func @transform_0(%arg0: i32) -> (i32, i32) {
    %c0_i32 = arith.constant 0 : i32
    %c0_i32_0 = arith.constant 0 : i32
    return %arg0, %c0_i32 : i32, i32
  }
  func.func @transform_1(%arg0: i32) -> (i32, i32) {
    %c0_i32 = arith.constant 0 : i32
    %c0_i32_0 = arith.constant 0 : i32
    %c0_i32_1 = arith.constant 0 : i32
    return %c0_i32, %c0_i32_0 : i32, i32
  }
  func.func @transform_2(%arg0: i32) -> (i32, i32) {
    %c0_i32 = arith.constant 0 : i32
    %c0_i32_0 = arith.constant 0 : i32
    %c0_i32_1 = arith.constant 0 : i32
    return %c0_i32, %c0_i32_0 : i32, i32
  }
  func.func @transform_3(%arg0: i32) -> (i32, i32) {
    %c0_i32 = arith.constant 0 : i32
    %c0_i32_0 = arith.constant 0 : i32
    %c0_i32_1 = arith.constant 0 : i32
    return %c0_i32, %c0_i32_0 : i32, i32
  }
  func.func @transform_4(%arg0: i32) -> (i32, i32) {
    %c0_i32 = arith.constant 0 : i32
    %c0_i32_0 = arith.constant 0 : i32
    %c0_i32_1 = arith.constant 0 : i32
    return %c0_i32, %c0_i32_0 : i32, i32
  }
  func.func @transform_5(%arg0: i32) -> (i32, i32) {
    %c0_i32 = arith.constant 0 : i32
    %c0_i32_0 = arith.constant 0 : i32
    %c0_i32_1 = arith.constant 0 : i32
    return %c0_i32, %c0_i32_0 : i32, i32
  }
  func.func @transform_6(%arg0: i32) -> (i32, i32) {
    %c0_i32 = arith.constant 0 : i32
    %c0_i32_0 = arith.constant 0 : i32
    %c0_i32_1 = arith.constant 0 : i32
    return %c0_i32, %c0_i32_0 : i32, i32
  }
  func.func @transform_7(%arg0: i32) -> (i32, i32) {
    %c0_i32 = arith.constant 0 : i32
    %c0_i32_0 = arith.constant 0 : i32
    return %arg0, %c0_i32 : i32, i32
  }
}

</mosaic_0001>

<llo_original>
// kernel: mlp_forward.1
$region0: #{mlp_forward.1}
  #allocation0 [shape = 'u32[]', space=smem, size = 0x4, offset = 0x4, fixed_abs, tag = 'smem constant byte address 0x4 - core index']
  #allocation1 [shape = 'u32[72,128]{1,0:T(1,128)}', space=vmem, size = 0x9000, scoped, tag = 'internal scratch']
  %s0 = inlined_call_operand.vmem [shape: bf16[256,784], index: 0, kind: input, shape index: {}]
  %s1 = inlined_call_operand.vmem [shape: bf16[784,512], index: 1, kind: input, shape index: {}]
  %s2 = inlined_call_operand.vmem [shape: f32[1,512], index: 2, kind: input, shape index: {}]
  %s3 = inlined_call_operand.vmem [shape: bf16[512,512], index: 3, kind: input, shape index: {}]
  %s4 = inlined_call_operand.vmem [shape: f32[1,512], index: 4, kind: input, shape index: {}]
  %s5 = inlined_call_operand.vmem [shape: bf16[512,128], index: 5, kind: input, shape index: {}]
  %s6 = inlined_call_operand.vmem [shape: f32[1,128], index: 6, kind: input, shape index: {}]
  %s7 = inlined_call_operand.vmem [shape: bf16[256,128], index: 7, kind: output, shape index: {}]
  %s8 = sld [smem:[#allocation0]]
  $region61: #{mlp_forward.1} parent=0
    _
  %s10 = ssub.s32 1, %s8
  %s11 = scalar_select 0, %s10, %s8
  loop: start=0, step=1, limit=4
  $region2: #{mlp_forward.1} parent=0 // loop_pre_header
    _
  $region3: #{mlp_forward.1} parent=0 // loop_header
    %s13 = sphi 0, %s17
    %p14 = scmp.ge.s32.totalorder %s13, 4
    %s23 = sphi 0, %s25
    %s26 = sphi 0, %s23
    %s27 = sphi 0, %s26
    %s43 = sphi 0, %s27
    %s47 = sphi 0, %s47
    %s49 = sphi 0, %s47
    %s50 = sphi 0, %s49
    %s64 = sphi 0, %s50
    %s68 = sphi 0, %s68
    %s70 = sphi 0, %s68
    %s71 = sphi 0, %s70
    %s85 = sphi 0, %s71
    %s89 = sphi 0, %s89
    %s91 = sphi 0, %s89
    %s92 = sphi 0, %s91
    %s106 = sphi 0, %s92
    %s110 = sphi 0, %s110
    %s112 = sphi 0, %s110
    %s113 = sphi 0, %s112
    %s127 = sphi 0, %s113
    %s131 = sphi 0, %s131
    %s133 = sphi 0, %s131
    %s134 = sphi 0, %s133
    %s148 = sphi 0, %s134
    %s152 = sphi 0, %s152
    %s154 = sphi 0, %s152
    %s155 = sphi 0, %s154
    %s169 = sphi 0, %s155
    %s175 = sphi 0, %s177
    %s178 = sphi 0, %s175
    %s179 = sphi 0, %s178
    %s195 = sphi 0, %s179
  $region4: #{mlp_forward.1} parent=0 // loop_header_branch
    %16 = sbr.rel (%p14) target = $region8
  $region5: #{mlp_forward.1} parent=0 // loop_body
    %s18 = ssub.s32 %s13, 1
    %s19 = ssub.s32 %s13, 2
    %s20 = sadd.s32 %s13, 1
    %s21 = ssub.s32 %s13, %s20
    %p22 = scmp.eq.s32.totalorder %s21, 0
    %s24 = sadd.s32 %s23, 1
    %s25 = scalar_select %p22, %s23, %s24
    %p28 = pneg %p22
    %p29 = scmp.eq.s32.totalorder %s13, 1
    %p30 = por %p28, %p29
    %p31 = scmp.ne.s32.totalorder %s23, %s26
    %p32 = scmp.eq.s32.totalorder %s13, 0
    %p33 = por %p31, %p32
    %p34 = scmp.ne.s32.totalorder %s23, %s26
    %p35 = scmp.eq.s32.totalorder %s18, 1
    %p36 = por %p34, %p35
    %p37 = scmp.ne.s32.totalorder %s26, %s27
    %p38 = scmp.eq.s32.totalorder %s18, 0
    %p39 = por %p37, %p38
    %p40 = scmp.ne.s32.totalorder %s26, %s27
    %p41 = scmp.eq.s32.totalorder %s19, 1
    %p42 = por %p40, %p41
    %p44 = scmp.ne.s32.totalorder %s27, %s43
    %p45 = scmp.eq.s32.totalorder %s19, 0
    %p46 = por %p44, %p45
    %s48 = sadd.s32 %s47, 1
    %p51 = scmp.eq.s32.totalorder %s13, 1
    %p52 = scmp.ne.s32.totalorder %s47, %s49
    %p53 = scmp.eq.s32.totalorder %s13, 0
    %p54 = por %p52, %p53
    %p55 = scmp.ne.s32.totalorder %s47, %s49
    %p56 = scmp.eq.s32.totalorder %s18, 1
    %p57 = por %p55, %p56
    %p58 = scmp.ne.s32.totalorder %s49, %s50
    %p59 = scmp.eq.s32.totalorder %s18, 0
    %p60 = por %p58, %p59
    %p61 = scmp.ne.s32.totalorder %s49, %s50
    %p62 = scmp.eq.s32.totalorder %s19, 1
    %p63 = por %p61, %p62
    %p65 = scmp.ne.s32.totalorder %s50, %s64
    %p66 = scmp.eq.s32.totalorder %s19, 0
    %p67 = por %p65, %p66
    %s69 = sadd.s32 %s68, 1
    %p72 = scmp.eq.s32.totalorder %s13, 1
    %p73 = scmp.ne.s32.totalorder %s68, %s70
    %p74 = scmp.eq.s32.totalorder %s13, 0
    %p75 = por %p73, %p74
    %p76 = scmp.ne.s32.totalorder %s68, %s70
    %p77 = scmp.eq.s32.totalorder %s18, 1
    %p78 = por %p76, %p77
    %p79 = scmp.ne.s32.totalorder %s70, %s71
    %p80 = scmp.eq.s32.totalorder %s18, 0
    %p81 = por %p79, %p80
    %p82 = scmp.ne.s32.totalorder %s70, %s71
    %p83 = scmp.eq.s32.totalorder %s19, 1
    %p84 = por %p82, %p83
    %p86 = scmp.ne.s32.totalorder %s71, %s85
    %p87 = scmp.eq.s32.totalorder %s19, 0
    %p88 = por %p86, %p87
    %s90 = sadd.s32 %s89, 1
    %p93 = scmp.eq.s32.totalorder %s13, 1
    %p94 = scmp.ne.s32.totalorder %s89, %s91
    %p95 = scmp.eq.s32.totalorder %s13, 0
    %p96 = por %p94, %p95
    %p97 = scmp.ne.s32.totalorder %s89, %s91
    %p98 = scmp.eq.s32.totalorder %s18, 1
    %p99 = por %p97, %p98
    %p100 = scmp.ne.s32.totalorder %s91, %s92
    %p101 = scmp.eq.s32.totalorder %s18, 0
    %p102 = por %p100, %p101
    %p103 = scmp.ne.s32.totalorder %s91, %s92
    %p104 = scmp.eq.s32.totalorder %s19, 1
    %p105 = por %p103, %p104
    %p107 = scmp.ne.s32.totalorder %s92, %s106
    %p108 = scmp.eq.s32.totalorder %s19, 0
    %p109 = por %p107, %p108
    %s111 = sadd.s32 %s110, 1
    %p114 = scmp.eq.s32.totalorder %s13, 1
    %p115 = scmp.ne.s32.totalorder %s110, %s112
    %p116 = scmp.eq.s32.totalorder %s13, 0
    %p117 = por %p115, %p116
    %p118 = scmp.ne.s32.totalorder %s110, %s112
    %p119 = scmp.eq.s32.totalorder %s18, 1
    %p120 = por %p118, %p119
    %p121 = scmp.ne.s32.totalorder %s112, %s113
    %p122 = scmp.eq.s32.totalorder %s18, 0
    %p123 = por %p121, %p122
    %p124 = scmp.ne.s32.totalorder %s112, %s113
    %p125 = scmp.eq.s32.totalorder %s19, 1
    %p126 = por %p124, %p125
    %p128 = scmp.ne.s32.totalorder %s113, %s127
    %p129 = scmp.eq.s32.totalorder %s19, 0
    %p130 = por %p128, %p129
    %s132 = sadd.s32 %s131, 1
    %p135 = scmp.eq.s32.totalorder %s13, 1
    %p136 = scmp.ne.s32.totalorder %s131, %s133
    %p137 = scmp.eq.s32.totalorder %s13, 0
    %p138 = por %p136, %p137
    %p139 = scmp.ne.s32.totalorder %s131, %s133
    %p140 = scmp.eq.s32.totalorder %s18, 1
    %p141 = por %p139, %p140
    %p142 = scmp.ne.s32.totalorder %s133, %s134
    %p143 = scmp.eq.s32.totalorder %s18, 0
    %p144 = por %p142, %p143
    %p145 = scmp.ne.s32.totalorder %s133, %s134
    %p146 = scmp.eq.s32.totalorder %s19, 1
    %p147 = por %p145, %p146
    %p149 = scmp.ne.s32.totalorder %s134, %s148
    %p150 = scmp.eq.s32.totalorder %s19, 0
    %p151 = por %p149, %p150
    %s153 = sadd.s32 %s152, 1
    %p156 = scmp.eq.s32.totalorder %s13, 1
    %p157 = scmp.ne.s32.totalorder %s152, %s154
    %p158 = scmp.eq.s32.totalorder %s13, 0
    %p159 = por %p157, %p158
    %p160 = scmp.ne.s32.totalorder %s152, %s154
    %p161 = scmp.eq.s32.totalorder %s18, 1
    %p162 = por %p160, %p161
    %p163 = scmp.ne.s32.totalorder %s154, %s155
    %p164 = scmp.eq.s32.totalorder %s18, 0
    %p165 = por %p163, %p164
    %p166 = scmp.ne.s32.totalorder %s154, %s155
    %p167 = scmp.eq.s32.totalorder %s19, 1
    %p168 = por %p166, %p167
    %p170 = scmp.ne.s32.totalorder %s155, %s169
    %p171 = scmp.eq.s32.totalorder %s19, 0
    %p172 = por %p170, %p171
    %s173 = ssub.s32 %s13, %s20
    %p174 = scmp.eq.s32.totalorder %s173, 0
    %s176 = sadd.s32 %s175, 1
    %s177 = scalar_select %p174, %s175, %s176
    %p180 = pneg %p174
    %p181 = scmp.eq.s32.totalorder %s13, 1
    %p182 = por %p180, %p181
    %p183 = scmp.ne.s32.totalorder %s175, %s178
    %p184 = scmp.eq.s32.totalorder %s13, 0
    %p185 = por %p183, %p184
    %p186 = scmp.ne.s32.totalorder %s175, %s178
    %p187 = scmp.eq.s32.totalorder %s18, 1
    %p188 = por %p186, %p187
    %p189 = scmp.ne.s32.totalorder %s178, %s179
    %p190 = scmp.eq.s32.totalorder %s18, 0
    %p191 = por %p189, %p190
    %p192 = scmp.ne.s32.totalorder %s178, %s179
    %p193 = scmp.eq.s32.totalorder %s19, 1
    %p194 = por %p192, %p193
    %p196 = scmp.ne.s32.totalorder %s179, %s195
    %p197 = scmp.eq.s32.totalorder %s19, 0
    %p198 = por %p196, %p197
    %p199 = scmp.le.s32.totalorder 1, %s13
    %p200 = scmp.lt.s32.totalorder %s13, 3
    %p201 = pnand %p199, %p200
    %p202 = pneg %p201
    // Predicated region
    $region9: #{mlp_forward.1} parent=5 // pred_check
      _
    $region10: #{mlp_forward.1} parent=5 // pred_check_branch
      %204 = sbr.rel (%p201) target = $region12
    $region11: #{mlp_forward.1} parent=5 // pred_region
      %s205 = ssub.s32 %s13, 1
      // Predicated region
      $region13: #{mlp_forward.1} parent=11 // pred_check
        %p206 = pneg %p60
      $region14: #{mlp_forward.1} parent=11 // pred_check_branch
        %208 = sbr.rel (%p206) target = $region16
      $region15: #{mlp_forward.1} parent=11 // pred_region
        _
      $region16: #{mlp_forward.1} parent=11 // pred_fallthru
        _
      // Predicated region
      $region17: #{mlp_forward.1} parent=11 // pred_check
        %p209 = pneg %p81
      $region18: #{mlp_forward.1} parent=11 // pred_check_branch
        %211 = sbr.rel (%p209) target = $region20
      $region19: #{mlp_forward.1} parent=11 // pred_region
        _
      $region20: #{mlp_forward.1} parent=11 // pred_fallthru
        _
      // Predicated region
      $region21: #{mlp_forward.1} parent=11 // pred_check
        %p212 = pneg %p102
      $region22: #{mlp_forward.1} parent=11 // pred_check_branch
        %214 = sbr.rel (%p212) target = $region24
      $region23: #{mlp_forward.1} parent=11 // pred_region
        _
      $region24: #{mlp_forward.1} parent=11 // pred_fallthru
        _
      // Predicated region
      $region25: #{mlp_forward.1} parent=11 // pred_check
        %p215 = pneg %p123
      $region26: #{mlp_forward.1} parent=11 // pred_check_branch
        %217 = sbr.rel (%p215) target = $region28
      $region27: #{mlp_forward.1} parent=11 // pred_region
        _
      $region28: #{mlp_forward.1} parent=11 // pred_fallthru
        _
      // Predicated region
      $region29: #{mlp_forward.1} parent=11 // pred_check
        %p218 = pneg %p144
      $region30: #{mlp_forward.1} parent=11 // pred_check_branch
        %220 = sbr.rel (%p218) target = $region32
      $region31: #{mlp_forward.1} parent=11 // pred_region
        _
      $region32: #{mlp_forward.1} parent=11 // pred_fallthru
        _
      // Predicated region
      $region33: #{mlp_forward.1} parent=11 // pred_check
        %p221 = pneg %p165
      $region34: #{mlp_forward.1} parent=11 // pred_check_branch
        %223 = sbr.rel (%p221) target = $region36
      $region35: #{mlp_forward.1} parent=11 // pred_region
        _
      $region36: #{mlp_forward.1} parent=11 // pred_fallthru
        _
    $region12: #{mlp_forward.1} parent=5 // pred_fallthru
      _
    %p224 = scmp.lt.s32.totalorder %s13, 2
    // Predicated region
    $region37: #{mlp_forward.1} parent=5 // pred_check
      %p225 = pneg %p224
    $region38: #{mlp_forward.1} parent=5 // pred_check_branch
      %227 = sbr.rel (%p225) target = $region40
    $region39: #{mlp_forward.1} parent=5 // pred_region
      // Predicated region
      $region41: #{mlp_forward.1} parent=39 // pred_check
        %p228 = pneg %p33
      $region42: #{mlp_forward.1} parent=39 // pred_check_branch
        %230 = sbr.rel (%p228) target = $region44
      $region43: #{mlp_forward.1} parent=39 // pred_region
        %s231 = smul.u32 16, %s13
        %p232 = scmp.lt.s32.totalorder %s231, 31
        %s233 = scalar_select %p232, %s231, 31
        %s234 = smul.addr %s233, 7
        %s235 = smul.addr %s234, 4
        %s236 = scalar_lea.vmem %s0, %s235
        %s237 = smul.u32 16, %s13
      $region44: #{mlp_forward.1} parent=39 // pred_fallthru
        _
    $region40: #{mlp_forward.1} parent=5 // pred_fallthru
      _
    %p238 = scmp.le.s32.totalorder 1, %s13
    %p239 = scmp.lt.s32.totalorder %s13, 3
    %p240 = pnand %p238, %p239
    %p241 = pneg %p240
    // Predicated region
    $region45: #{mlp_forward.1} parent=5 // pred_check
      _
    $region46: #{mlp_forward.1} parent=5 // pred_check_branch
      %243 = sbr.rel (%p240) target = $region48
    $region47: #{mlp_forward.1} parent=5 // pred_region
      %s244 = ssub.s32 %s13, 1
      %s245 = smul.u32 16, %s18
      %p246 = scmp.lt.s32.totalorder %s245, 31
      %s247 = scalar_select %p246, %s245, 31
      %s248 = smul.addr %s247, 7
      %s249 = smul.addr %s248, 4
      %s250 = scalar_lea.vmem %s0, %s249
      %p251 = pneg %p39
      %p252 = pneg %p36
      %p253 = pneg %p60
      %p254 = pneg %p57
      %p255 = pneg %p81
      %p256 = pneg %p78
      %p257 = pneg %p102
      %p258 = pneg %p99
      %p259 = pneg %p123
      %p260 = pneg %p120
      %p261 = pneg %p144
      %p262 = pneg %p141
      %p263 = pneg %p165
      %p264 = pneg %p162
      %p265 = pneg %p191
      %p266 = pneg %p188
      %s267 = smul.u32 16, %s18
      %p268 = scmp.lt.s32.totalorder %s267, 31
      %s269 = scalar_select %p268, %s267, 31
      %s270 = smul.addr %s269, 4
      %s271 = scalar_lea.vmem %s7, %s270
      %s272 = smul.u32 16, %s18
      %p273 = scmp.lt.s32.totalorder %s272, 31
      %s274 = scalar_select %p273, %s272, 31
      %s275 = smul.addr %s274, 7
      %s276 = smul.addr %s275, 4
      %s277 = scalar_lea.vmem %s0, %s276
      %s278 = smul.u32 16, %s18
      %s279 = smul.u32 16, %s18
      %p280 = scmp.lt.s32.totalorder %s279, 31
      %s281 = scalar_select %p280, %s279, 31
      %s282 = smul.addr %s281, 4
      %s283 = scalar_lea.vmem %s7, %s282
      %s284 = smul.u32 16, %s18
      %v286 = vld [vmem:[%s277] sm:$0xff]
      %v287 = vld [vmem:[%s277 + $0x8] sm:$0xff]
      %v288 = vld [vmem:[%s277 + $0x10] sm:$0xff]
      %v289 = vld [vmem:[%s277 + $0x18] sm:$0xf]
      %v290 = vld [vmem:[%s277 + $0x1c] sm:$0xff]
      %v291 = vld [vmem:[%s277 + $0x24] sm:$0xff]
      %v292 = vld [vmem:[%s277 + $0x2c] sm:$0xff]
      %v293 = vld [vmem:[%s277 + $0x34] sm:$0xf]
      %v294 = vld [vmem:[%s277 + $0x38] sm:$0xff]
      %v295 = vld [vmem:[%s277 + $0x40] sm:$0xff]
      %v296 = vld [vmem:[%s277 + $0x48] sm:$0xff]
      %v297 = vld [vmem:[%s277 + $0x50] sm:$0xf]
      %v298 = vld [vmem:[%s277 + $0x54] sm:$0xff]
      %v299 = vld [vmem:[%s277 + $0x5c] sm:$0xff]
      %v300 = vld [vmem:[%s277 + $0x64] sm:$0xff]
      %v301 = vld [vmem:[%s277 + $0x6c] sm:$0xf]
      %v302 = vld [vmem:[%s277 + $0x70] sm:$0xff]
      %v303 = vld [vmem:[%s277 + $0x78] sm:$0xff]
      %v304 = vld [vmem:[%s277 + $0x80] sm:$0xff]
      %v305 = vld [vmem:[%s277 + $0x88] sm:$0xf]
      %v306 = vld [vmem:[%s277 + $0x8c] sm:$0xff]
      %v307 = vld [vmem:[%s277 + $0x94] sm:$0xff]
      %v308 = vld [vmem:[%s277 + $0x9c] sm:$0xff]
      %v309 = vld [vmem:[%s277 + $0xa4] sm:$0xf]
      %v310 = vld [vmem:[%s277 + $0xa8] sm:$0xff]
      %v311 = vld [vmem:[%s277 + $0xb0] sm:$0xff]
      %v312 = vld [vmem:[%s277 + $0xb8] sm:$0xff]
      %v313 = vld [vmem:[%s277 + $0xc0] sm:$0xf]
      %v314 = vld [vmem:[%s277 + $0xc4] sm:$0xff]
      %v315 = vld [vmem:[%s277 + $0xcc] sm:$0xff]
      %v316 = vld [vmem:[%s277 + $0xd4] sm:$0xff]
      %v317 = vld [vmem:[%s277 + $0xdc] sm:$0xf]
      %v318 = vld [vmem:[%s277 + $0xe0] sm:$0xff]
      %v319 = vld [vmem:[%s277 + $0xe8] sm:$0xff]
      %v320 = vld [vmem:[%s277 + $0xf0] sm:$0xff]
      %v321 = vld [vmem:[%s277 + $0xf8] sm:$0xf]
      %v322 = vld [vmem:[%s277 + $0xfc] sm:$0xff]
      %v323 = vld [vmem:[%s277 + $0x104] sm:$0xff]
      %v324 = vld [vmem:[%s277 + $0x10c] sm:$0xff]
      %v325 = vld [vmem:[%s277 + $0x114] sm:$0xf]
      %v326 = vld [vmem:[%s277 + $0x118] sm:$0xff]
      %v327 = vld [vmem:[%s277 + $0x120] sm:$0xff]
      %v328 = vld [vmem:[%s277 + $0x128] sm:$0xff]
      %v329 = vld [vmem:[%s277 + $0x130] sm:$0xf]
      %v330 = vld [vmem:[%s277 + $0x134] sm:$0xff]
      %v331 = vld [vmem:[%s277 + $0x13c] sm:$0xff]
      %v332 = vld [vmem:[%s277 + $0x144] sm:$0xff]
      %v333 = vld [vmem:[%s277 + $0x14c] sm:$0xf]
      %v334 = vld [vmem:[%s277 + $0x150] sm:$0xff]
      %v335 = vld [vmem:[%s277 + $0x158] sm:$0xff]
      %v336 = vld [vmem:[%s277 + $0x160] sm:$0xff]
      %v337 = vld [vmem:[%s277 + $0x168] sm:$0xf]
      %v338 = vld [vmem:[%s277 + $0x16c] sm:$0xff]
      %v339 = vld [vmem:[%s277 + $0x174] sm:$0xff]
      %v340 = vld [vmem:[%s277 + $0x17c] sm:$0xff]
      %v341 = vld [vmem:[%s277 + $0x184] sm:$0xf]
      %v342 = vld [vmem:[%s277 + $0x188] sm:$0xff]
      %v343 = vld [vmem:[%s277 + $0x190] sm:$0xff]
      %v344 = vld [vmem:[%s277 + $0x198] sm:$0xff]
      %v345 = vld [vmem:[%s277 + $0x1a0] sm:$0xf]
      %v346 = vld [vmem:[%s277 + $0x1a4] sm:$0xff]
      %v347 = vld [vmem:[%s277 + $0x1ac] sm:$0xff]
      %v348 = vld [vmem:[%s277 + $0x1b4] sm:$0xff]
      %v349 = vld [vmem:[%s277 + $0x1bc] sm:$0xf]
      %v350 = vld [vmem:[%s1] sm:$0xff]
      %v351 = vld [vmem:[%s1 + $0x8] sm:$0xff]
      %v352 = vld [vmem:[%s1 + $0x10] sm:$0xff]
      %v353 = vld [vmem:[%s1 + $0x18] sm:$0xff]
      %v354 = vld [vmem:[%s1 + $0x20] sm:$0xff]
      %v355 = vld [vmem:[%s1 + $0x28] sm:$0xff]
      %v356 = vld [vmem:[%s1 + $0x30] sm:$0xff]
      %v357 = vld [vmem:[%s1 + $0x38] sm:$0xff]
      %v358 = vld [vmem:[%s1 + $0x40] sm:$0xff]
      %v359 = vld [vmem:[%s1 + $0x48] sm:$0xff]
      %v360 = vld [vmem:[%s1 + $0x50] sm:$0xff]
      %v361 = vld [vmem:[%s1 + $0x58] sm:$0xff]
      %v362 = vld [vmem:[%s1 + $0x60] sm:$0xff]
      %v363 = vld [vmem:[%s1 + $0x68] sm:$0xff]
      %v364 = vld [vmem:[%s1 + $0x70] sm:$0xff]
      %v365 = vld [vmem:[%s1 + $0x78] sm:$0xff]
      %v366 = vld [vmem:[%s1 + $0x80] sm:$0xff]
      %v367 = vld [vmem:[%s1 + $0x88] sm:$0xff]
      %v368 = vld [vmem:[%s1 + $0x90] sm:$0xff]
      %v369 = vld [vmem:[%s1 + $0x98] sm:$0xff]
      %v370 = vld [vmem:[%s1 + $0xa0] sm:$0xff]
      %v371 = vld [vmem:[%s1 + $0xa8] sm:$0xff]
      %v372 = vld [vmem:[%s1 + $0xb0] sm:$0xff]
      %v373 = vld [vmem:[%s1 + $0xb8] sm:$0xff]
      %v374 = vld [vmem:[%s1 + $0xc0] sm:$0xff]
      %v375 = vld [vmem:[%s1 + $0xc8] sm:$0xff]
      %v376 = vld [vmem:[%s1 + $0xd0] sm:$0xff]
      %v377 = vld [vmem:[%s1 + $0xd8] sm:$0xff]
      %v378 = vld [vmem:[%s1 + $0xe0] sm:$0xff]
      %v379 = vld [vmem:[%s1 + $0xe8] sm:$0xff]
      %v380 = vld [vmem:[%s1 + $0xf0] sm:$0xff]
      %v381 = vld [vmem:[%s1 + $0xf8] sm:$0xff]
      %v382 = vld [vmem:[%s1 + $0x100] sm:$0xff]
      %v383 = vld [vmem:[%s1 + $0x108] sm:$0xff]
      %v384 = vld [vmem:[%s1 + $0x110] sm:$0xff]
      %v385 = vld [vmem:[%s1 + $0x118] sm:$0xff]
      %v386 = vld [vmem:[%s1 + $0x120] sm:$0xff]
      %v387 = vld [vmem:[%s1 + $0x128] sm:$0xff]
      %v388 = vld [vmem:[%s1 + $0x130] sm:$0xff]
      %v389 = vld [vmem:[%s1 + $0x138] sm:$0xff]
      %v390 = vld [vmem:[%s1 + $0x140] sm:$0xff]
      %v391 = vld [vmem:[%s1 + $0x148] sm:$0xff]
      %v392 = vld [vmem:[%s1 + $0x150] sm:$0xff]
      %v393 = vld [vmem:[%s1 + $0x158] sm:$0xff]
      %v394 = vld [vmem:[%s1 + $0x160] sm:$0xff]
      %v395 = vld [vmem:[%s1 + $0x168] sm:$0xff]
      %v396 = vld [vmem:[%s1 + $0x170] sm:$0xff]
      %v397 = vld [vmem:[%s1 + $0x178] sm:$0xff]
      %v398 = vld [vmem:[%s1 + $0x180] sm:$0xff]
      %v399 = vld [vmem:[%s1 + $0x188] sm:$0xff]
      %v400 = vld [vmem:[%s1 + $0x190] sm:$0xff]
      %v401 = vld [vmem:[%s1 + $0x198] sm:$0xff]
      %v402 = vld [vmem:[%s1 + $0x1a0] sm:$0xff]
      %v403 = vld [vmem:[%s1 + $0x1a8] sm:$0xff]
      %v404 = vld [vmem:[%s1 + $0x1b0] sm:$0xff]
      %v405 = vld [vmem:[%s1 + $0x1b8] sm:$0xff]
      %v406 = vld [vmem:[%s1 + $0x1c0] sm:$0xff]
      %v407 = vld [vmem:[%s1 + $0x1c8] sm:$0xff]
      %v408 = vld [vmem:[%s1 + $0x1d0] sm:$0xff]
      %v409 = vld [vmem:[%s1 + $0x1d8] sm:$0xff]
      %v410 = vld [vmem:[%s1 + $0x1e0] sm:$0xff]
      %v411 = vld [vmem:[%s1 + $0x1e8] sm:$0xff]
      %v412 = vld [vmem:[%s1 + $0x1f0] sm:$0xff]
      %v413 = vld [vmem:[%s1 + $0x1f8] sm:$0xff]
      %v414 = vld [vmem:[%s1 + $0x200] sm:$0xff]
      %v415 = vld [vmem:[%s1 + $0x208] sm:$0xff]
      %v416 = vld [vmem:[%s1 + $0x210] sm:$0xff]
      %v417 = vld [vmem:[%s1 + $0x218] sm:$0xff]
      %v418 = vld [vmem:[%s1 + $0x220] sm:$0xff]
      %v419 = vld [vmem:[%s1 + $0x228] sm:$0xff]
      %v420 = vld [vmem:[%s1 + $0x230] sm:$0xff]
      %v421 = vld [vmem:[%s1 + $0x238] sm:$0xff]
      %v422 = vld [vmem:[%s1 + $0x240] sm:$0xff]
      %v423 = vld [vmem:[%s1 + $0x248] sm:$0xff]
      %v424 = vld [vmem:[%s1 + $0x250] sm:$0xff]
      %v425 = vld [vmem:[%s1 + $0x258] sm:$0xff]
      %v426 = vld [vmem:[%s1 + $0x260] sm:$0xff]
      %v427 = vld [vmem:[%s1 + $0x268] sm:$0xff]
      %v428 = vld [vmem:[%s1 + $0x270] sm:$0xff]
      %v429 = vld [vmem:[%s1 + $0x278] sm:$0xff]
      %v430 = vld [vmem:[%s1 + $0x280] sm:$0xff]
      %v431 = vld [vmem:[%s1 + $0x288] sm:$0xff]
      %v432 = vld [vmem:[%s1 + $0x290] sm:$0xff]
      %v433 = vld [vmem:[%s1 + $0x298] sm:$0xff]
      %v434 = vld [vmem:[%s1 + $0x2a0] sm:$0xff]
      %v435 = vld [vmem:[%s1 + $0x2a8] sm:$0xff]
      %v436 = vld [vmem:[%s1 + $0x2b0] sm:$0xff]
      %v437 = vld [vmem:[%s1 + $0x2b8] sm:$0xff]
      %v438 = vld [vmem:[%s1 + $0x2c0] sm:$0xff]
      %v439 = vld [vmem:[%s1 + $0x2c8] sm:$0xff]
      %v440 = vld [vmem:[%s1 + $0x2d0] sm:$0xff]
      %v441 = vld [vmem:[%s1 + $0x2d8] sm:$0xff]
      %v442 = vld [vmem:[%s1 + $0x2e0] sm:$0xff]
      %v443 = vld [vmem:[%s1 + $0x2e8] sm:$0xff]
      %v444 = vld [vmem:[%s1 + $0x2f0] sm:$0xff]
      %v445 = vld [vmem:[%s1 + $0x2f8] sm:$0xff]
      %v446 = vld [vmem:[%s1 + $0x300] sm:$0xff]
      %v447 = vld [vmem:[%s1 + $0x308] sm:$0xff]
      %v448 = vld [vmem:[%s1 + $0x310] sm:$0xff]
      %v449 = vld [vmem:[%s1 + $0x318] sm:$0xff]
      %v450 = vld [vmem:[%s1 + $0x320] sm:$0xff]
      %v451 = vld [vmem:[%s1 + $0x328] sm:$0xff]
      %v452 = vld [vmem:[%s1 + $0x330] sm:$0xff]
      %v453 = vld [vmem:[%s1 + $0x338] sm:$0xff]
      %v454 = vld [vmem:[%s1 + $0x340] sm:$0xff]
      %v455 = vld [vmem:[%s1 + $0x348] sm:$0xff]
      %v456 = vld [vmem:[%s1 + $0x350] sm:$0xff]
      %v457 = vld [vmem:[%s1 + $0x358] sm:$0xff]
      %v458 = vld [vmem:[%s1 + $0x360] sm:$0xff]
      %v459 = vld [vmem:[%s1 + $0x368] sm:$0xff]
      %v460 = vld [vmem:[%s1 + $0x370] sm:$0xff]
      %v461 = vld [vmem:[%s1 + $0x378] sm:$0xff]
      %v462 = vld [vmem:[%s1 + $0x380] sm:$0xff]
      %v463 = vld [vmem:[%s1 + $0x388] sm:$0xff]
      %v464 = vld [vmem:[%s1 + $0x390] sm:$0xff]
      %v465 = vld [vmem:[%s1 + $0x398] sm:$0xff]
      %v466 = vld [vmem:[%s1 + $0x3a0] sm:$0xff]
      %v467 = vld [vmem:[%s1 + $0x3a8] sm:$0xff]
      %v468 = vld [vmem:[%s1 + $0x3b0] sm:$0xff]
      %v469 = vld [vmem:[%s1 + $0x3b8] sm:$0xff]
      %v470 = vld [vmem:[%s1 + $0x3c0] sm:$0xff]
      %v471 = vld [vmem:[%s1 + $0x3c8] sm:$0xff]
      %v472 = vld [vmem:[%s1 + $0x3d0] sm:$0xff]
      %v473 = vld [vmem:[%s1 + $0x3d8] sm:$0xff]
      %v474 = vld [vmem:[%s1 + $0x3e0] sm:$0xff]
      %v475 = vld [vmem:[%s1 + $0x3e8] sm:$0xff]
      %v476 = vld [vmem:[%s1 + $0x3f0] sm:$0xff]
      %v477 = vld [vmem:[%s1 + $0x3f8] sm:$0xff]
      %v478 = vld [vmem:[%s1 + $0x400] sm:$0xff]
      %v479 = vld [vmem:[%s1 + $0x408] sm:$0xff]
      %v480 = vld [vmem:[%s1 + $0x410] sm:$0xff]
      %v481 = vld [vmem:[%s1 + $0x418] sm:$0xff]
      %v482 = vld [vmem:[%s1 + $0x420] sm:$0xff]
      %v483 = vld [vmem:[%s1 + $0x428] sm:$0xff]
      %v484 = vld [vmem:[%s1 + $0x430] sm:$0xff]
      %v485 = vld [vmem:[%s1 + $0x438] sm:$0xff]
      %v486 = vld [vmem:[%s1 + $0x440] sm:$0xff]
      %v487 = vld [vmem:[%s1 + $0x448] sm:$0xff]
      %v488 = vld [vmem:[%s1 + $0x450] sm:$0xff]
      %v489 = vld [vmem:[%s1 + $0x458] sm:$0xff]
      %v490 = vld [vmem:[%s1 + $0x460] sm:$0xff]
      %v491 = vld [vmem:[%s1 + $0x468] sm:$0xff]
      %v492 = vld [vmem:[%s1 + $0x470] sm:$0xff]
      %v493 = vld [vmem:[%s1 + $0x478] sm:$0xff]
      %v494 = vld [vmem:[%s1 + $0x480] sm:$0xff]
      %v495 = vld [vmem:[%s1 + $0x488] sm:$0xff]
      %v496 = vld [vmem:[%s1 + $0x490] sm:$0xff]
      %v497 = vld [vmem:[%s1 + $0x498] sm:$0xff]
      %v498 = vld [vmem:[%s1 + $0x4a0] sm:$0xff]
      %v499 = vld [vmem:[%s1 + $0x4a8] sm:$0xff]
      %v500 = vld [vmem:[%s1 + $0x4b0] sm:$0xff]
      %v501 = vld [vmem:[%s1 + $0x4b8] sm:$0xff]
      %v502 = vld [vmem:[%s1 + $0x4c0] sm:$0xff]
      %v503 = vld [vmem:[%s1 + $0x4c8] sm:$0xff]
      %v504 = vld [vmem:[%s1 + $0x4d0] sm:$0xff]
      %v505 = vld [vmem:[%s1 + $0x4d8] sm:$0xff]
      %v506 = vld [vmem:[%s1 + $0x4e0] sm:$0xff]
      %v507 = vld [vmem:[%s1 + $0x4e8] sm:$0xff]
      %v508 = vld [vmem:[%s1 + $0x4f0] sm:$0xff]
      %v509 = vld [vmem:[%s1 + $0x4f8] sm:$0xff]
      %v510 = vld [vmem:[%s1 + $0x500] sm:$0xff]
      %v511 = vld [vmem:[%s1 + $0x508] sm:$0xff]
      %v512 = vld [vmem:[%s1 + $0x510] sm:$0xff]
      %v513 = vld [vmem:[%s1 + $0x518] sm:$0xff]
      %v514 = vld [vmem:[%s1 + $0x520] sm:$0xff]
      %v515 = vld [vmem:[%s1 + $0x528] sm:$0xff]
      %v516 = vld [vmem:[%s1 + $0x530] sm:$0xff]
      %v517 = vld [vmem:[%s1 + $0x538] sm:$0xff]
      %v518 = vld [vmem:[%s1 + $0x540] sm:$0xff]
      %v519 = vld [vmem:[%s1 + $0x548] sm:$0xff]
      %v520 = vld [vmem:[%s1 + $0x550] sm:$0xff]
      %v521 = vld [vmem:[%s1 + $0x558] sm:$0xff]
      %v522 = vld [vmem:[%s1 + $0x560] sm:$0xff]
      %v523 = vld [vmem:[%s1 + $0x568] sm:$0xff]
      %v524 = vld [vmem:[%s1 + $0x570] sm:$0xff]
      %v525 = vld [vmem:[%s1 + $0x578] sm:$0xff]
      %v526 = vld [vmem:[%s1 + $0x580] sm:$0xff]
      %v527 = vld [vmem:[%s1 + $0x588] sm:$0xff]
      %v528 = vld [vmem:[%s1 + $0x590] sm:$0xff]
      %v529 = vld [vmem:[%s1 + $0x598] sm:$0xff]
      %v530 = vld [vmem:[%s1 + $0x5a0] sm:$0xff]
      %v531 = vld [vmem:[%s1 + $0x5a8] sm:$0xff]
      %v532 = vld [vmem:[%s1 + $0x5b0] sm:$0xff]
      %v533 = vld [vmem:[%s1 + $0x5b8] sm:$0xff]
      %v534 = vld [vmem:[%s1 + $0x5c0] sm:$0xff]
      %v535 = vld [vmem:[%s1 + $0x5c8] sm:$0xff]
      %v536 = vld [vmem:[%s1 + $0x5d0] sm:$0xff]
      %v537 = vld [vmem:[%s1 + $0x5d8] sm:$0xff]
      %v538 = vld [vmem:[%s1 + $0x5e0] sm:$0xff]
      %v539 = vld [vmem:[%s1 + $0x5e8] sm:$0xff]
      %v540 = vld [vmem:[%s1 + $0x5f0] sm:$0xff]
      %v541 = vld [vmem:[%s1 + $0x5f8] sm:$0xff]
      %v542 = vld [vmem:[%s1 + $0x600] sm:$0xff]
      %v543 = vld [vmem:[%s1 + $0x608] sm:$0xff]
      %v544 = vld [vmem:[%s1 + $0x610] sm:$0xff]
      %v545 = vld [vmem:[%s1 + $0x618] sm:$0xff]
      %v546 = vld [vmem:[%s2] sm:$0xf]
      %v548 = vperm.slane %v546, 0
      %v549 = vperm.slane %v546, 1
      %v550 = vperm.slane %v546, 2
      %v551 = vperm.slane %v546, 3
      %v620 = vunpack.c.l.b16 %v286
      %v621 = vunpack.c.h.b16 %v286
      %v622 = vunpack.c.l.b16 %v287
      %v623 = vunpack.c.h.b16 %v287
      %v624 = vunpack.c.l.b16 %v288
      %v625 = vunpack.c.h.b16 %v288
      %v626 = vunpack.c.l.b16 %v289
      %v627 = vunpack.c.l.b16 %v290
      %v628 = vunpack.c.h.b16 %v290
      %v629 = vunpack.c.l.b16 %v291
      %v630 = vunpack.c.h.b16 %v291
      %v631 = vunpack.c.l.b16 %v292
      %v632 = vunpack.c.h.b16 %v292
      %v633 = vunpack.c.l.b16 %v293
      %v634 = vunpack.c.l.b16 %v294
      %v635 = vunpack.c.h.b16 %v294
      %v636 = vunpack.c.l.b16 %v295
      %v637 = vunpack.c.h.b16 %v295
      %v638 = vunpack.c.l.b16 %v296
      %v639 = vunpack.c.h.b16 %v296
      %v640 = vunpack.c.l.b16 %v297
      %v641 = vunpack.c.l.b16 %v298
      %v642 = vunpack.c.h.b16 %v298
      %v643 = vunpack.c.l.b16 %v299
      %v644 = vunpack.c.h.b16 %v299
      %v645 = vunpack.c.l.b16 %v300
      %v646 = vunpack.c.h.b16 %v300
      %v647 = vunpack.c.l.b16 %v301
      %v648 = vunpack.c.l.b16 %v302
      %v649 = vunpack.c.h.b16 %v302
      %v650 = vunpack.c.l.b16 %v303
      %v651 = vunpack.c.h.b16 %v303
      %v652 = vunpack.c.l.b16 %v304
      %v653 = vunpack.c.h.b16 %v304
      %v654 = vunpack.c.l.b16 %v305
      %v655 = vunpack.c.l.b16 %v306
      %v656 = vunpack.c.h.b16 %v306
      %v657 = vunpack.c.l.b16 %v307
      %v658 = vunpack.c.h.b16 %v307
      %v659 = vunpack.c.l.b16 %v308
      %v660 = vunpack.c.h.b16 %v308
      %v661 = vunpack.c.l.b16 %v309
      %v662 = vunpack.c.l.b16 %v310
      %v663 = vunpack.c.h.b16 %v310
      %v664 = vunpack.c.l.b16 %v311
      %v665 = vunpack.c.h.b16 %v311
      %v666 = vunpack.c.l.b16 %v312
      %v667 = vunpack.c.h.b16 %v312
      %v668 = vunpack.c.l.b16 %v313
      %v669 = vunpack.c.l.b16 %v314
      %v670 = vunpack.c.h.b16 %v314
      %v671 = vunpack.c.l.b16 %v315
      %v672 = vunpack.c.h.b16 %v315
      %v673 = vunpack.c.l.b16 %v316
      %v674 = vunpack.c.h.b16 %v316
      %v675 = vunpack.c.l.b16 %v317
      %v676 = vunpack.c.l.b16 %v318
      %v677 = vunpack.c.h.b16 %v318
      %v678 = vunpack.c.l.b16 %v319
      %v679 = vunpack.c.h.b16 %v319
      %v680 = vunpack.c.l.b16 %v320
      %v681 = vunpack.c.h.b16 %v320
      %v682 = vunpack.c.l.b16 %v321
      %v683 = vunpack.c.l.b16 %v322
      %v684 = vunpack.c.h.b16 %v322
      %v685 = vunpack.c.l.b16 %v323
      %v686 = vunpack.c.h.b16 %v323
      %v687 = vunpack.c.l.b16 %v324
      %v688 = vunpack.c.h.b16 %v324
      %v689 = vunpack.c.l.b16 %v325
      %v690 = vunpack.c.l.b16 %v326
      %v691 = vunpack.c.h.b16 %v326
      %v692 = vunpack.c.l.b16 %v327
      %v693 = vunpack.c.h.b16 %v327
      %v694 = vunpack.c.l.b16 %v328
      %v695 = vunpack.c.h.b16 %v328
      %v696 = vunpack.c.l.b16 %v329
      %v697 = vunpack.c.l.b16 %v330
      %v698 = vunpack.c.h.b16 %v330
      %v699 = vunpack.c.l.b16 %v331
      %v700 = vunpack.c.h.b16 %v331
      %v701 = vunpack.c.l.b16 %v332
      %v702 = vunpack.c.h.b16 %v332
      %v703 = vunpack.c.l.b16 %v333
      %v704 = vunpack.c.l.b16 %v334
      %v705 = vunpack.c.h.b16 %v334
      %v706 = vunpack.c.l.b16 %v335
      %v707 = vunpack.c.h.b16 %v335
      %v708 = vunpack.c.l.b16 %v336
      %v709 = vunpack.c.h.b16 %v336
      %v710 = vunpack.c.l.b16 %v337
      %v711 = vunpack.c.l.b16 %v338
      %v712 = vunpack.c.h.b16 %v338
      %v713 = vunpack.c.l.b16 %v339
      %v714 = vunpack.c.h.b16 %v339
      %v715 = vunpack.c.l.b16 %v340
      %v716 = vunpack.c.h.b16 %v340
      %v717 = vunpack.c.l.b16 %v341
      %v718 = vunpack.c.l.b16 %v342
      %v719 = vunpack.c.h.b16 %v342
      %v720 = vunpack.c.l.b16 %v343
      %v721 = vunpack.c.h.b16 %v343
      %v722 = vunpack.c.l.b16 %v344
      %v723 = vunpack.c.h.b16 %v344
      %v724 = vunpack.c.l.b16 %v345
      %v725 = vunpack.c.l.b16 %v346
      %v726 = vunpack.c.h.b16 %v346
      %v727 = vunpack.c.l.b16 %v347
      %v728 = vunpack.c.h.b16 %v347
      %v729 = vunpack.c.l.b16 %v348
      %v730 = vunpack.c.h.b16 %v348
      %v731 = vunpack.c.l.b16 %v349
      %v732 = vpack.c.b16 %v627, %v620
      %v733 = vpack.c.b16 %v628, %v621
      %v734 = vpack.c.b16 %v629, %v622
      %v735 = vpack.c.b16 %v630, %v623
      %v736 = vpack.c.b16 %v631, %v624
      %v737 = vpack.c.b16 %v632, %v625
      %v738 = vpack.c.b16 %v633, %v626
      %v739 = vpack.c.b16 %v641, %v634
      %v740 = vpack.c.b16 %v642, %v635
      %v741 = vpack.c.b16 %v643, %v636
      %v742 = vpack.c.b16 %v644, %v637
      %v743 = vpack.c.b16 %v645, %v638
      %v744 = vpack.c.b16 %v646, %v639
      %v745 = vpack.c.b16 %v647, %v640
      %v746 = vpack.c.b16 %v655, %v648
      %v747 = vpack.c.b16 %v656, %v649
      %v748 = vpack.c.b16 %v657, %v650
      %v749 = vpack.c.b16 %v658, %v651
      %v750 = vpack.c.b16 %v659, %v652
      %v751 = vpack.c.b16 %v660, %v653
      %v752 = vpack.c.b16 %v661, %v654
      %v753 = vpack.c.b16 %v669, %v662
      %v754 = vpack.c.b16 %v670, %v663
      %v755 = vpack.c.b16 %v671, %v664
      %v756 = vpack.c.b16 %v672, %v665
      %v757 = vpack.c.b16 %v673, %v666
      %v758 = vpack.c.b16 %v674, %v667
      %v759 = vpack.c.b16 %v675, %v668
      %v760 = vpack.c.b16 %v683, %v676
      %v761 = vpack.c.b16 %v684, %v677
      %v762 = vpack.c.b16 %v685, %v678
      %v763 = vpack.c.b16 %v686, %v679
      %v764 = vpack.c.b16 %v687, %v680
      %v765 = vpack.c.b16 %v688, %v681
      %v766 = vpack.c.b16 %v689, %v682
      %v767 = vpack.c.b16 %v697, %v690
      %v768 = vpack.c.b16 %v698, %v691
      %v769 = vpack.c.b16 %v699, %v692
      %v770 = vpack.c.b16 %v700, %v693
      %v771 = vpack.c.b16 %v701, %v694
      %v772 = vpack.c.b16 %v702, %v695
      %v773 = vpack.c.b16 %v703, %v696
      %v774 = vpack.c.b16 %v711, %v704
      %v775 = vpack.c.b16 %v712, %v705
      %v776 = vpack.c.b16 %v713, %v706
      %v777 = vpack.c.b16 %v714, %v707
      %v778 = vpack.c.b16 %v715, %v708
      %v779 = vpack.c.b16 %v716, %v709
      %v780 = vpack.c.b16 %v717, %v710
      %v781 = vpack.c.b16 %v725, %v718
      %v782 = vpack.c.b16 %v726, %v719
      %v783 = vpack.c.b16 %v727, %v720
      %v784 = vpack.c.b16 %v728, %v721
      %v785 = vpack.c.b16 %v729, %v722
      %v786 = vpack.c.b16 %v730, %v723
      %v787 = vpack.c.b16 %v731, %v724
      %v1032 = vunpack.c.l.b16 %v350
      %v1033 = vunpack.c.h.b16 %v350
      %v1034 = vunpack.c.l.b16 %v351
      %v1035 = vunpack.c.h.b16 %v351
      %v1036 = vunpack.c.l.b16 %v352
      %v1037 = vunpack.c.h.b16 %v352
      %v1038 = vunpack.c.l.b16 %v353
      %v1039 = vunpack.c.h.b16 %v353
      %v1040 = vunpack.c.l.b16 %v354
      %v1041 = vunpack.c.h.b16 %v354
      %v1042 = vunpack.c.l.b16 %v355
      %v1043 = vunpack.c.h.b16 %v355
      %v1044 = vunpack.c.l.b16 %v356
      %v1045 = vunpack.c.h.b16 %v356
      %v1046 = vunpack.c.l.b16 %v357
      %v1047 = vunpack.c.h.b16 %v357
      %v1048 = vunpack.c.l.b16 %v358
      %v1049 = vunpack.c.h.b16 %v358
      %v1050 = vunpack.c.l.b16 %v359
      %v1051 = vunpack.c.h.b16 %v359
      %v1052 = vunpack.c.l.b16 %v360
      %v1053 = vunpack.c.h.b16 %v360
      %v1054 = vunpack.c.l.b16 %v361
      %v1055 = vunpack.c.h.b16 %v361
      %v1056 = vunpack.c.l.b16 %v362
      %v1057 = vunpack.c.h.b16 %v362
      %v1058 = vunpack.c.l.b16 %v363
      %v1059 = vunpack.c.h.b16 %v363
      %v1060 = vunpack.c.l.b16 %v364
      %v1061 = vunpack.c.h.b16 %v364
      %v1062 = vunpack.c.l.b16 %v365
      %v1063 = vunpack.c.h.b16 %v365
      %v1064 = vunpack.c.l.b16 %v366
      %v1065 = vunpack.c.h.b16 %v366
      %v1066 = vunpack.c.l.b16 %v367
      %v1067 = vunpack.c.h.b16 %v367
      %v1068 = vunpack.c.l.b16 %v368
      %v1069 = vunpack.c.h.b16 %v368
      %v1070 = vunpack.c.l.b16 %v369
      %v1071 = vunpack.c.h.b16 %v369
      %v1072 = vunpack.c.l.b16 %v370
      %v1073 = vunpack.c.h.b16 %v370
      %v1074 = vunpack.c.l.b16 %v371
      %v1075 = vunpack.c.h.b16 %v371
      %v1076 = vunpack.c.l.b16 %v372
      %v1077 = vunpack.c.h.b16 %v372
      %v1078 = vunpack.c.l.b16 %v373
      %v1079 = vunpack.c.h.b16 %v373
      %v1080 = vunpack.c.l.b16 %v374
      %v1081 = vunpack.c.h.b16 %v374
      %v1082 = vunpack.c.l.b16 %v375
      %v1083 = vunpack.c.h.b16 %v375
      %v1084 = vunpack.c.l.b16 %v376
      %v1085 = vunpack.c.h.b16 %v376
      %v1086 = vunpack.c.l.b16 %v377
      %v1087 = vunpack.c.h.b16 %v377
      %v1088 = vunpack.c.l.b16 %v378
      %v1089 = vunpack.c.h.b16 %v378
      %v1090 = vunpack.c.l.b16 %v379
      %v1091 = vunpack.c.h.b16 %v379
      %v1092 = vunpack.c.l.b16 %v380
      %v1093 = vunpack.c.h.b16 %v380
      %v1094 = vunpack.c.l.b16 %v381
      %v1095 = vunpack.c.h.b16 %v381
      %v1096 = vunpack.c.l.b16 %v382
      %v1097 = vunpack.c.h.b16 %v382
      %v1098 = vunpack.c.l.b16 %v383
      %v1099 = vunpack.c.h.b16 %v383
      %v1100 = vunpack.c.l.b16 %v384
      %v1101 = vunpack.c.h.b16 %v384
      %v1102 = vunpack.c.l.b16 %v385
      %v1103 = vunpack.c.h.b16 %v385
      %v1104 = vunpack.c.l.b16 %v386
      %v1105 = vunpack.c.h.b16 %v386
      %v1106 = vunpack.c.l.b16 %v387
      %v1107 = vunpack.c.h.b16 %v387
      %v1108 = vunpack.c.l.b16 %v388
      %v1109 = vunpack.c.h.b16 %v388
      %v1110 = vunpack.c.l.b16 %v389
      %v1111 = vunpack.c.h.b16 %v389
      %v1112 = vunpack.c.l.b16 %v390
      %v1113 = vunpack.c.h.b16 %v390
      %v1114 = vunpack.c.l.b16 %v391
      %v1115 = vunpack.c.h.b16 %v391
      %v1116 = vunpack.c.l.b16 %v392
      %v1117 = vunpack.c.h.b16 %v392
      %v1118 = vunpack.c.l.b16 %v393
      %v1119 = vunpack.c.h.b16 %v393
      %v1120 = vunpack.c.l.b16 %v394
      %v1121 = vunpack.c.h.b16 %v394
      %v1122 = vunpack.c.l.b16 %v395
      %v1123 = vunpack.c.h.b16 %v395
      %v1124 = vunpack.c.l.b16 %v396
      %v1125 = vunpack.c.h.b16 %v396
      %v1126 = vunpack.c.l.b16 %v397
      %v1127 = vunpack.c.h.b16 %v397
      %v1128 = vunpack.c.l.b16 %v398
      %v1129 = vunpack.c.h.b16 %v398
      %v1130 = vunpack.c.l.b16 %v399
      %v1131 = vunpack.c.h.b16 %v399
      %v1132 = vunpack.c.l.b16 %v400
      %v1133 = vunpack.c.h.b16 %v400
      %v1134 = vunpack.c.l.b16 %v401
      %v1135 = vunpack.c.h.b16 %v401
      %v1136 = vunpack.c.l.b16 %v402
      %v1137 = vunpack.c.h.b16 %v402
      %v1138 = vunpack.c.l.b16 %v403
      %v1139 = vunpack.c.h.b16 %v403
      %v1140 = vunpack.c.l.b16 %v404
      %v1141 = vunpack.c.h.b16 %v404
      %v1142 = vunpack.c.l.b16 %v405
      %v1143 = vunpack.c.h.b16 %v405
      %v1144 = vunpack.c.l.b16 %v406
      %v1145 = vunpack.c.h.b16 %v406
      %v1146 = vunpack.c.l.b16 %v407
      %v1147 = vunpack.c.h.b16 %v407
      %v1148 = vunpack.c.l.b16 %v408
      %v1149 = vunpack.c.h.b16 %v408
      %v1150 = vunpack.c.l.b16 %v409
      %v1151 = vunpack.c.h.b16 %v409
      %v1152 = vunpack.c.l.b16 %v410
      %v1153 = vunpack.c.h.b16 %v410
      %v1154 = vunpack.c.l.b16 %v411
      %v1155 = vunpack.c.h.b16 %v411
      %v1156 = vunpack.c.l.b16 %v412
      %v1157 = vunpack.c.h.b16 %v412
      %v1158 = vunpack.c.l.b16 %v413
      %v1159 = vunpack.c.h.b16 %v413
      %v1160 = vunpack.c.l.b16 %v414
      %v1161 = vunpack.c.h.b16 %v414
      %v1162 = vunpack.c.l.b16 %v415
      %v1163 = vunpack.c.h.b16 %v415
      %v1164 = vunpack.c.l.b16 %v416
      %v1165 = vunpack.c.h.b16 %v416
      %v1166 = vunpack.c.l.b16 %v417
      %v1167 = vunpack.c.h.b16 %v417
      %v1168 = vunpack.c.l.b16 %v418
      %v1169 = vunpack.c.h.b16 %v418
      %v1170 = vunpack.c.l.b16 %v419
      %v1171 = vunpack.c.h.b16 %v419
      %v1172 = vunpack.c.l.b16 %v420
      %v1173 = vunpack.c.h.b16 %v420
      %v1174 = vunpack.c.l.b16 %v421
      %v1175 = vunpack.c.h.b16 %v421
      %v1176 = vunpack.c.l.b16 %v422
      %v1177 = vunpack.c.h.b16 %v422
      %v1178 = vunpack.c.l.b16 %v423
      %v1179 = vunpack.c.h.b16 %v423
      %v1180 = vunpack.c.l.b16 %v424
      %v1181 = vunpack.c.h.b16 %v424
      %v1182 = vunpack.c.l.b16 %v425
      %v1183 = vunpack.c.h.b16 %v425
      %v1184 = vunpack.c.l.b16 %v426
      %v1185 = vunpack.c.h.b16 %v426
      %v1186 = vunpack.c.l.b16 %v427
      %v1187 = vunpack.c.h.b16 %v427
      %v1188 = vunpack.c.l.b16 %v428
      %v1189 = vunpack.c.h.b16 %v428
      %v1190 = vunpack.c.l.b16 %v429
      %v1191 = vunpack.c.h.b16 %v429
      %v1192 = vunpack.c.l.b16 %v430
      %v1193 = vunpack.c.h.b16 %v430
      %v1194 = vunpack.c.l.b16 %v431
      %v1195 = vunpack.c.h.b16 %v431
      %v1196 = vunpack.c.l.b16 %v432
      %v1197 = vunpack.c.h.b16 %v432
      %v1198 = vunpack.c.l.b16 %v433
      %v1199 = vunpack.c.h.b16 %v433
      %v1200 = vunpack.c.l.b16 %v434
      %v1201 = vunpack.c.h.b16 %v434
      %v1202 = vunpack.c.l.b16 %v435
      %v1203 = vunpack.c.h.b16 %v435
      %v1204 = vunpack.c.l.b16 %v436
      %v1205 = vunpack.c.h.b16 %v436
      %v1206 = vunpack.c.l.b16 %v437
      %v1207 = vunpack.c.h.b16 %v437
      %v1208 = vunpack.c.l.b16 %v438
      %v1209 = vunpack.c.h.b16 %v438
      %v1210 = vunpack.c.l.b16 %v439
      %v1211 = vunpack.c.h.b16 %v439
      %v1212 = vunpack.c.l.b16 %v440
      %v1213 = vunpack.c.h.b16 %v440
      %v1214 = vunpack.c.l.b16 %v441
      %v1215 = vunpack.c.h.b16 %v441
      %v1216 = vunpack.c.l.b16 %v442
      %v1217 = vunpack.c.h.b16 %v442
      %v1218 = vunpack.c.l.b16 %v443
      %v1219 = vunpack.c.h.b16 %v443
      %v1220 = vunpack.c.l.b16 %v444
      %v1221 = vunpack.c.h.b16 %v444
      %v1222 = vunpack.c.l.b16 %v445
      %v1223 = vunpack.c.h.b16 %v445
      %v1224 = vunpack.c.l.b16 %v446
      %v1225 = vunpack.c.h.b16 %v446
      %v1226 = vunpack.c.l.b16 %v447
      %v1227 = vunpack.c.h.b16 %v447
      %v1228 = vunpack.c.l.b16 %v448
      %v1229 = vunpack.c.h.b16 %v448
      %v1230 = vunpack.c.l.b16 %v449
      %v1231 = vunpack.c.h.b16 %v449
      %v1232 = vunpack.c.l.b16 %v450
      %v1233 = vunpack.c.h.b16 %v450
      %v1234 = vunpack.c.l.b16 %v451
      %v1235 = vunpack.c.h.b16 %v451
      %v1236 = vunpack.c.l.b16 %v452
      %v1237 = vunpack.c.h.b16 %v452
      %v1238 = vunpack.c.l.b16 %v453
      %v1239 = vunpack.c.h.b16 %v453
      %v1240 = vunpack.c.l.b16 %v454
      %v1241 = vunpack.c.h.b16 %v454
      %v1242 = vunpack.c.l.b16 %v455
      %v1243 = vunpack.c.h.b16 %v455
      %v1244 = vunpack.c.l.b16 %v456
      %v1245 = vunpack.c.h.b16 %v456
      %v1246 = vunpack.c.l.b16 %v457
      %v1247 = vunpack.c.h.b16 %v457
      %v1248 = vunpack.c.l.b16 %v458
      %v1249 = vunpack.c.h.b16 %v458
      %v1250 = vunpack.c.l.b16 %v459
      %v1251 = vunpack.c.h.b16 %v459
      %v1252 = vunpack.c.l.b16 %v460
      %v1253 = vunpack.c.h.b16 %v460
      %v1254 = vunpack.c.l.b16 %v461
      %v1255 = vunpack.c.h.b16 %v461
      %v1256 = vunpack.c.l.b16 %v462
      %v1257 = vunpack.c.h.b16 %v462
      %v1258 = vunpack.c.l.b16 %v463
      %v1259 = vunpack.c.h.b16 %v463
      %v1260 = vunpack.c.l.b16 %v464
      %v1261 = vunpack.c.h.b16 %v464
      %v1262 = vunpack.c.l.b16 %v465
      %v1263 = vunpack.c.h.b16 %v465
      %v1264 = vunpack.c.l.b16 %v466
      %v1265 = vunpack.c.h.b16 %v466
      %v1266 = vunpack.c.l.b16 %v467
      %v1267 = vunpack.c.h.b16 %v467
      %v1268 = vunpack.c.l.b16 %v468
      %v1269 = vunpack.c.h.b16 %v468
      %v1270 = vunpack.c.l.b16 %v469
      %v1271 = vunpack.c.h.b16 %v469
      %v1272 = vunpack.c.l.b16 %v470
      %v1273 = vunpack.c.h.b16 %v470
      %v1274 = vunpack.c.l.b16 %v471
      %v1275 = vunpack.c.h.b16 %v471
      %v1276 = vunpack.c.l.b16 %v472
      %v1277 = vunpack.c.h.b16 %v472
      %v1278 = vunpack.c.l.b16 %v473
      %v1279 = vunpack.c.h.b16 %v473
      %v1280 = vunpack.c.l.b16 %v474
      %v1281 = vunpack.c.h.b16 %v474
      %v1282 = vunpack.c.l.b16 %v475
      %v1283 = vunpack.c.h.b16 %v475
      %v1284 = vunpack.c.l.b16 %v476
      %v1285 = vunpack.c.h.b16 %v476
      %v1286 = vunpack.c.l.b16 %v477
      %v1287 = vunpack.c.h.b16 %v477
      %v1288 = vunpack.c.l.b16 %v478
      %v1289 = vunpack.c.h.b16 %v478
      %v1290 = vunpack.c.l.b16 %v479
      %v1291 = vunpack.c.h.b16 %v479
      %v1292 = vunpack.c.l.b16 %v480
      %v1293 = vunpack.c.h.b16 %v480
      %v1294 = vunpack.c.l.b16 %v481
      %v1295 = vunpack.c.h.b16 %v481
      %v1296 = vunpack.c.l.b16 %v482
      %v1297 = vunpack.c.h.b16 %v482
      %v1298 = vunpack.c.l.b16 %v483
      %v1299 = vunpack.c.h.b16 %v483
      %v1300 = vunpack.c.l.b16 %v484
      %v1301 = vunpack.c.h.b16 %v484
      %v1302 = vunpack.c.l.b16 %v485
      %v1303 = vunpack.c.h.b16 %v485
      %v1304 = vunpack.c.l.b16 %v486
      %v1305 = vunpack.c.h.b16 %v486
      %v1306 = vunpack.c.l.b16 %v487
      %v1307 = vunpack.c.h.b16 %v487
      %v1308 = vunpack.c.l.b16 %v488
      %v1309 = vunpack.c.h.b16 %v488
      %v1310 = vunpack.c.l.b16 %v489
      %v1311 = vunpack.c.h.b16 %v489
      %v1312 = vunpack.c.l.b16 %v490
      %v1313 = vunpack.c.h.b16 %v490
      %v1314 = vunpack.c.l.b16 %v491
      %v1315 = vunpack.c.h.b16 %v491
      %v1316 = vunpack.c.l.b16 %v492
      %v1317 = vunpack.c.h.b16 %v492
      %v1318 = vunpack.c.l.b16 %v493
      %v1319 = vunpack.c.h.b16 %v493
      %v1320 = vunpack.c.l.b16 %v494
      %v1321 = vunpack.c.h.b16 %v494
      %v1322 = vunpack.c.l.b16 %v495
      %v1323 = vunpack.c.h.b16 %v495
      %v1324 = vunpack.c.l.b16 %v496
      %v1325 = vunpack.c.h.b16 %v496
      %v1326 = vunpack.c.l.b16 %v497
      %v1327 = vunpack.c.h.b16 %v497
      %v1328 = vunpack.c.l.b16 %v498
      %v1329 = vunpack.c.h.b16 %v498
      %v1330 = vunpack.c.l.b16 %v499
      %v1331 = vunpack.c.h.b16 %v499
      %v1332 = vunpack.c.l.b16 %v500
      %v1333 = vunpack.c.h.b16 %v500
      %v1334 = vunpack.c.l.b16 %v501
      %v1335 = vunpack.c.h.b16 %v501
      %v1336 = vunpack.c.l.b16 %v502
      %v1337 = vunpack.c.h.b16 %v502
      %v1338 = vunpack.c.l.b16 %v503
      %v1339 = vunpack.c.h.b16 %v503
      %v1340 = vunpack.c.l.b16 %v504
      %v1341 = vunpack.c.h.b16 %v504
      %v1342 = vunpack.c.l.b16 %v505
      %v1343 = vunpack.c.h.b16 %v505
      %v1344 = vunpack.c.l.b16 %v506
      %v1345 = vunpack.c.h.b16 %v506
      %v1346 = vunpack.c.l.b16 %v507
      %v1347 = vunpack.c.h.b16 %v507
      %v1348 = vunpack.c.l.b16 %v508
      %v1349 = vunpack.c.h.b16 %v508
      %v1350 = vunpack.c.l.b16 %v509
      %v1351 = vunpack.c.h.b16 %v509
      %v1352 = vunpack.c.l.b16 %v510
      %v1353 = vunpack.c.h.b16 %v510
      %v1354 = vunpack.c.l.b16 %v511
      %v1355 = vunpack.c.h.b16 %v511
      %v1356 = vunpack.c.l.b16 %v512
      %v1357 = vunpack.c.h.b16 %v512
      %v1358 = vunpack.c.l.b16 %v513
      %v1359 = vunpack.c.h.b16 %v513
      %v1360 = vunpack.c.l.b16 %v514
      %v1361 = vunpack.c.h.b16 %v514
      %v1362 = vunpack.c.l.b16 %v515
      %v1363 = vunpack.c.h.b16 %v515
      %v1364 = vunpack.c.l.b16 %v516
      %v1365 = vunpack.c.h.b16 %v516
      %v1366 = vunpack.c.l.b16 %v517
      %v1367 = vunpack.c.h.b16 %v517
      %v1368 = vunpack.c.l.b16 %v518
      %v1369 = vunpack.c.h.b16 %v518
      %v1370 = vunpack.c.l.b16 %v519
      %v1371 = vunpack.c.h.b16 %v519
      %v1372 = vunpack.c.l.b16 %v520
      %v1373 = vunpack.c.h.b16 %v520
      %v1374 = vunpack.c.l.b16 %v521
      %v1375 = vunpack.c.h.b16 %v521
      %v1376 = vunpack.c.l.b16 %v522
      %v1377 = vunpack.c.h.b16 %v522
      %v1378 = vunpack.c.l.b16 %v523
      %v1379 = vunpack.c.h.b16 %v523
      %v1380 = vunpack.c.l.b16 %v524
      %v1381 = vunpack.c.h.b16 %v524
      %v1382 = vunpack.c.l.b16 %v525
      %v1383 = vunpack.c.h.b16 %v525
      %v1384 = vunpack.c.l.b16 %v526
      %v1385 = vunpack.c.h.b16 %v526
      %v1386 = vunpack.c.l.b16 %v527
      %v1387 = vunpack.c.h.b16 %v527
      %v1388 = vunpack.c.l.b16 %v528
      %v1389 = vunpack.c.h.b16 %v528
      %v1390 = vunpack.c.l.b16 %v529
      %v1391 = vunpack.c.h.b16 %v529
      %v1392 = vunpack.c.l.b16 %v530
      %v1393 = vunpack.c.h.b16 %v530
      %v1394 = vunpack.c.l.b16 %v531
      %v1395 = vunpack.c.h.b16 %v531
      %v1396 = vunpack.c.l.b16 %v532
      %v1397 = vunpack.c.h.b16 %v532
      %v1398 = vunpack.c.l.b16 %v533
      %v1399 = vunpack.c.h.b16 %v533
      %v1400 = vunpack.c.l.b16 %v534
      %v1401 = vunpack.c.h.b16 %v534
      %v1402 = vunpack.c.l.b16 %v535
      %v1403 = vunpack.c.h.b16 %v535
      %v1404 = vunpack.c.l.b16 %v536
      %v1405 = vunpack.c.h.b16 %v536
      %v1406 = vunpack.c.l.b16 %v537
      %v1407 = vunpack.c.h.b16 %v537
      %v1408 = vunpack.c.l.b16 %v538
      %v1409 = vunpack.c.h.b16 %v538
      %v1410 = vunpack.c.l.b16 %v539
      %v1411 = vunpack.c.h.b16 %v539
      %v1412 = vunpack.c.l.b16 %v540
      %v1413 = vunpack.c.h.b16 %v540
      %v1414 = vunpack.c.l.b16 %v541
      %v1415 = vunpack.c.h.b16 %v541
      %v1416 = vunpack.c.l.b16 %v542
      %v1417 = vunpack.c.h.b16 %v542
      %v1418 = vunpack.c.l.b16 %v543
      %v1419 = vunpack.c.h.b16 %v543
      %v1420 = vunpack.c.l.b16 %v544
      %v1421 = vunpack.c.h.b16 %v544
      %v1422 = vunpack.c.l.b16 %v545
      %v1423 = vunpack.c.h.b16 %v545
      %v1424 = vpack.c.b16 %v1036, %v1032
      %v1425 = vpack.c.b16 %v1037, %v1033
      %v1426 = vpack.c.b16 %v1038, %v1034
      %v1427 = vpack.c.b16 %v1039, %v1035
      %v1428 = vpack.c.b16 %v1044, %v1040
      %v1429 = vpack.c.b16 %v1045, %v1041
      %v1430 = vpack.c.b16 %v1046, %v1042
      %v1431 = vpack.c.b16 %v1047, %v1043
      %v1432 = vpack.c.b16 %v1052, %v1048
      %v1433 = vpack.c.b16 %v1053, %v1049
      %v1434 = vpack.c.b16 %v1054, %v1050
      %v1435 = vpack.c.b16 %v1055, %v1051
      %v1436 = vpack.c.b16 %v1060, %v1056
      %v1437 = vpack.c.b16 %v1061, %v1057
      %v1438 = vpack.c.b16 %v1062, %v1058
      %v1439 = vpack.c.b16 %v1063, %v1059
      %v1440 = vpack.c.b16 %v1068, %v1064
      %v1441 = vpack.c.b16 %v1069, %v1065
      %v1442 = vpack.c.b16 %v1070, %v1066
      %v1443 = vpack.c.b16 %v1071, %v1067
      %v1444 = vpack.c.b16 %v1076, %v1072
      %v1445 = vpack.c.b16 %v1077, %v1073
      %v1446 = vpack.c.b16 %v1078, %v1074
      %v1447 = vpack.c.b16 %v1079, %v1075
      %v1448 = vpack.c.b16 %v1084, %v1080
      %v1449 = vpack.c.b16 %v1085, %v1081
      %v1450 = vpack.c.b16 %v1086, %v1082
      %v1451 = vpack.c.b16 %v1087, %v1083
      %v1452 = vpack.c.b16 %v1092, %v1088
      %v1453 = vpack.c.b16 %v1093, %v1089
      %v1454 = vpack.c.b16 %v1094, %v1090
      %v1455 = vpack.c.b16 %v1095, %v1091
      %v1456 = vpack.c.b16 %v1100, %v1096
      %v1457 = vpack.c.b16 %v1101, %v1097
      %v1458 = vpack.c.b16 %v1102, %v1098
      %v1459 = vpack.c.b16 %v1103, %v1099
      %v1460 = vpack.c.b16 %v1108, %v1104
      %v1461 = vpack.c.b16 %v1109, %v1105
      %v1462 = vpack.c.b16 %v1110, %v1106
      %v1463 = vpack.c.b16 %v1111, %v1107
      %v1464 = vpack.c.b16 %v1116, %v1112
      %v1465 = vpack.c.b16 %v1117, %v1113
      %v1466 = vpack.c.b16 %v1118, %v1114
      %v1467 = vpack.c.b16 %v1119, %v1115
      %v1468 = vpack.c.b16 %v1124, %v1120
      %v1469 = vpack.c.b16 %v1125, %v1121
      %v1470 = vpack.c.b16 %v1126, %v1122
      %v1471 = vpack.c.b16 %v1127, %v1123
      %v1472 = vpack.c.b16 %v1132, %v1128
      %v1473 = vpack.c.b16 %v1133, %v1129
      %v1474 = vpack.c.b16 %v1134, %v1130
      %v1475 = vpack.c.b16 %v1135, %v1131
      %v1476 = vpack.c.b16 %v1140, %v1136
      %v1477 = vpack.c.b16 %v1141, %v1137
      %v1478 = vpack.c.b16 %v1142, %v1138
      %v1479 = vpack.c.b16 %v1143, %v1139
      %v1480 = vpack.c.b16 %v1148, %v1144
      %v1481 = vpack.c.b16 %v1149, %v1145
      %v1482 = vpack.c.b16 %v1150, %v1146
      %v1483 = vpack.c.b16 %v1151, %v1147
      %v1484 = vpack.c.b16 %v1156, %v1152
      %v1485 = vpack.c.b16 %v1157, %v1153
      %v1486 = vpack.c.b16 %v1158, %v1154
      %v1487 = vpack.c.b16 %v1159, %v1155
      %v1488 = vpack.c.b16 %v1164, %v1160
      %v1489 = vpack.c.b16 %v1165, %v1161
      %v1490 = vpack.c.b16 %v1166, %v1162
      %v1491 = vpack.c.b16 %v1167, %v1163
      %v1492 = vpack.c.b16 %v1172, %v1168
      %v1493 = vpack.c.b16 %v1173, %v1169
      %v1494 = vpack.c.b16 %v1174, %v1170
      %v1495 = vpack.c.b16 %v1175, %v1171
      %v1496 = vpack.c.b16 %v1180, %v1176
      %v1497 = vpack.c.b16 %v1181, %v1177
      %v1498 = vpack.c.b16 %v1182, %v1178
      %v1499 = vpack.c.b16 %v1183, %v1179
      %v1500 = vpack.c.b16 %v1188, %v1184
      %v1501 = vpack.c.b16 %v1189, %v1185
      %v1502 = vpack.c.b16 %v1190, %v1186
      %v1503 = vpack.c.b16 %v1191, %v1187
      %v1504 = vpack.c.b16 %v1196, %v1192
      %v1505 = vpack.c.b16 %v1197, %v1193
      %v1506 = vpack.c.b16 %v1198, %v1194
      %v1507 = vpack.c.b16 %v1199, %v1195
      %v1508 = vpack.c.b16 %v1204, %v1200
      %v1509 = vpack.c.b16 %v1205, %v1201
      %v1510 = vpack.c.b16 %v1206, %v1202
      %v1511 = vpack.c.b16 %v1207, %v1203
      %v1512 = vpack.c.b16 %v1212, %v1208
      %v1513 = vpack.c.b16 %v1213, %v1209
      %v1514 = vpack.c.b16 %v1214, %v1210
      %v1515 = vpack.c.b16 %v1215, %v1211
      %v1516 = vpack.c.b16 %v1220, %v1216
      %v1517 = vpack.c.b16 %v1221, %v1217
      %v1518 = vpack.c.b16 %v1222, %v1218
      %v1519 = vpack.c.b16 %v1223, %v1219
      %v1520 = vpack.c.b16 %v1228, %v1224
      %v1521 = vpack.c.b16 %v1229, %v1225
      %v1522 = vpack.c.b16 %v1230, %v1226
      %v1523 = vpack.c.b16 %v1231, %v1227
      %v1524 = vpack.c.b16 %v1236, %v1232
      %v1525 = vpack.c.b16 %v1237, %v1233
      %v1526 = vpack.c.b16 %v1238, %v1234
      %v1527 = vpack.c.b16 %v1239, %v1235
      %v1528 = vpack.c.b16 %v1244, %v1240
      %v1529 = vpack.c.b16 %v1245, %v1241
      %v1530 = vpack.c.b16 %v1246, %v1242
      %v1531 = vpack.c.b16 %v1247, %v1243
      %v1532 = vpack.c.b16 %v1252, %v1248
      %v1533 = vpack.c.b16 %v1253, %v1249
      %v1534 = vpack.c.b16 %v1254, %v1250
      %v1535 = vpack.c.b16 %v1255, %v1251
      %v1536 = vpack.c.b16 %v1260, %v1256
      %v1537 = vpack.c.b16 %v1261, %v1257
      %v1538 = vpack.c.b16 %v1262, %v1258
      %v1539 = vpack.c.b16 %v1263, %v1259
      %v1540 = vpack.c.b16 %v1268, %v1264
      %v1541 = vpack.c.b16 %v1269, %v1265
      %v1542 = vpack.c.b16 %v1270, %v1266
      %v1543 = vpack.c.b16 %v1271, %v1267
      %v1544 = vpack.c.b16 %v1276, %v1272
      %v1545 = vpack.c.b16 %v1277, %v1273
      %v1546 = vpack.c.b16 %v1278, %v1274
      %v1547 = vpack.c.b16 %v1279, %v1275
      %v1548 = vpack.c.b16 %v1284, %v1280
      %v1549 = vpack.c.b16 %v1285, %v1281
      %v1550 = vpack.c.b16 %v1286, %v1282
      %v1551 = vpack.c.b16 %v1287, %v1283
      %v1552 = vpack.c.b16 %v1292, %v1288
      %v1553 = vpack.c.b16 %v1293, %v1289
      %v1554 = vpack.c.b16 %v1294, %v1290
      %v1555 = vpack.c.b16 %v1295, %v1291
      %v1556 = vpack.c.b16 %v1300, %v1296
      %v1557 = vpack.c.b16 %v1301, %v1297
      %v1558 = vpack.c.b16 %v1302, %v1298
      %v1559 = vpack.c.b16 %v1303, %v1299
      %v1560 = vpack.c.b16 %v1308, %v1304
      %v1561 = vpack.c.b16 %v1309, %v1305
      %v1562 = vpack.c.b16 %v1310, %v1306
      %v1563 = vpack.c.b16 %v1311, %v1307
      %v1564 = vpack.c.b16 %v1316, %v1312
      %v1565 = vpack.c.b16 %v1317, %v1313
      %v1566 = vpack.c.b16 %v1318, %v1314
      %v1567 = vpack.c.b16 %v1319, %v1315
      %v1568 = vpack.c.b16 %v1324, %v1320
      %v1569 = vpack.c.b16 %v1325, %v1321
      %v1570 = vpack.c.b16 %v1326, %v1322
      %v1571 = vpack.c.b16 %v1327, %v1323
      %v1572 = vpack.c.b16 %v1332, %v1328
      %v1573 = vpack.c.b16 %v1333, %v1329
      %v1574 = vpack.c.b16 %v1334, %v1330
      %v1575 = vpack.c.b16 %v1335, %v1331
      %v1576 = vpack.c.b16 %v1340, %v1336
      %v1577 = vpack.c.b16 %v1341, %v1337
      %v1578 = vpack.c.b16 %v1342, %v1338
      %v1579 = vpack.c.b16 %v1343, %v1339
      %v1580 = vpack.c.b16 %v1348, %v1344
      %v1581 = vpack.c.b16 %v1349, %v1345
      %v1582 = vpack.c.b16 %v1350, %v1346
      %v1583 = vpack.c.b16 %v1351, %v1347
      %v1584 = vpack.c.b16 %v1356, %v1352
      %v1585 = vpack.c.b16 %v1357, %v1353
      %v1586 = vpack.c.b16 %v1358, %v1354
      %v1587 = vpack.c.b16 %v1359, %v1355
      %v1588 = vpack.c.b16 %v1364, %v1360
      %v1589 = vpack.c.b16 %v1365, %v1361
      %v1590 = vpack.c.b16 %v1366, %v1362
      %v1591 = vpack.c.b16 %v1367, %v1363
      %v1592 = vpack.c.b16 %v1372, %v1368
      %v1593 = vpack.c.b16 %v1373, %v1369
      %v1594 = vpack.c.b16 %v1374, %v1370
      %v1595 = vpack.c.b16 %v1375, %v1371
      %v1596 = vpack.c.b16 %v1380, %v1376
      %v1597 = vpack.c.b16 %v1381, %v1377
      %v1598 = vpack.c.b16 %v1382, %v1378
      %v1599 = vpack.c.b16 %v1383, %v1379
      %v1600 = vpack.c.b16 %v1388, %v1384
      %v1601 = vpack.c.b16 %v1389, %v1385
      %v1602 = vpack.c.b16 %v1390, %v1386
      %v1603 = vpack.c.b16 %v1391, %v1387
      %v1604 = vpack.c.b16 %v1396, %v1392
      %v1605 = vpack.c.b16 %v1397, %v1393
      %v1606 = vpack.c.b16 %v1398, %v1394
      %v1607 = vpack.c.b16 %v1399, %v1395
      %v1608 = vpack.c.b16 %v1404, %v1400
      %v1609 = vpack.c.b16 %v1405, %v1401
      %v1610 = vpack.c.b16 %v1406, %v1402
      %v1611 = vpack.c.b16 %v1407, %v1403
      %v1612 = vpack.c.b16 %v1412, %v1408
      %v1613 = vpack.c.b16 %v1413, %v1409
      %v1614 = vpack.c.b16 %v1414, %v1410
      %v1615 = vpack.c.b16 %v1415, %v1411
      %v1616 = vpack.c.b16 %v1420, %v1416
      %v1617 = vpack.c.b16 %v1421, %v1417
      %v1618 = vpack.c.b16 %v1422, %v1418
      %v1619 = vpack.c.b16 %v1423, %v1419
      %vm1816 = vcmask 130048
      %v1818 = vsel %vm1816, %v738, 0
      %v1821 = vsel %vm1816, %v745, 0
      %v1824 = vsel %vm1816, %v752, 0
      %v1827 = vsel %vm1816, %v759, 0
      %v1830 = vsel %vm1816, %v766, 0
      %v1833 = vsel %vm1816, %v773, 0
      %v1836 = vsel %vm1816, %v780, 0
      %v1839 = vsel %vm1816, %v787, 0
      %1841 = vmatpush.bf16.msra.mxu0 %v1452
      %1842 = vmatpush.bf16.msra.mxu0 %v1448
      %1843 = vmatpush.bf16.msra.mxu0 %v1444
      %1844 = vmatpush.bf16.msra.mxu0 %v1440
      %1845 = vmatpush.bf16.msra.mxu0 %v1436
      %1846 = vmatpush.bf16.msra.mxu0 %v1432
      %1847 = vmatpush.bf16.msra.mxu0 %v1428
      %1848 = vmatpush.bf16.msra.mxu0 %v1424
      %1849 = vmatmul.bf16.gmra.mxu0 %v732
      %v1850 = vpop.f32.mrf.mxu0
      %v1851 = vadd.f32 %v548, %v1850
      %v1852 = vpop.f32.mrf.mxu0
      %v1853 = vadd.f32 %v548, %v1852
      %1854 = vmatmul.bf16.gmra.mxu0 %v739
      %v1855 = vpop.f32.mrf.mxu0
      %v1856 = vadd.f32 %v548, %v1855
      %v1857 = vpop.f32.mrf.mxu0
      %v1858 = vadd.f32 %v548, %v1857
      %1859 = vmatmul.bf16.gmra.mxu0 %v746
      %v1860 = vpop.f32.mrf.mxu0
      %v1861 = vadd.f32 %v548, %v1860
      %v1862 = vpop.f32.mrf.mxu0
      %v1863 = vadd.f32 %v548, %v1862
      %1864 = vmatmul.bf16.gmra.mxu0 %v753
      %v1865 = vpop.f32.mrf.mxu0
      %v1866 = vadd.f32 %v548, %v1865
      %v1867 = vpop.f32.mrf.mxu0
      %v1868 = vadd.f32 %v548, %v1867
      %1869 = vmatmul.bf16.gmra.mxu0 %v760
      %v1870 = vpop.f32.mrf.mxu0
      %v1871 = vadd.f32 %v548, %v1870
      %v1872 = vpop.f32.mrf.mxu0
      %v1873 = vadd.f32 %v548, %v1872
      %1874 = vmatmul.bf16.gmra.mxu0 %v767
      %v1875 = vpop.f32.mrf.mxu0
      %v1876 = vadd.f32 %v548, %v1875
      %v1877 = vpop.f32.mrf.mxu0
      %v1878 = vadd.f32 %v548, %v1877
      %1879 = vmatmul.bf16.gmra.mxu0 %v774
      %v1880 = vpop.f32.mrf.mxu0
      %v1881 = vadd.f32 %v548, %v1880
      %v1882 = vpop.f32.mrf.mxu0
      %v1883 = vadd.f32 %v548, %v1882
      %1884 = vmatmul.bf16.gmra.mxu0 %v781
      %v1885 = vpop.f32.mrf.mxu0
      %v1886 = vadd.f32 %v548, %v1885
      %v1887 = vpop.f32.mrf.mxu0
      %v1888 = vadd.f32 %v548, %v1887
      %1889 = vdwg.mxu0
      %1890 = vmatpush.bf16.msra.mxu0 %v1484
      %1891 = vmatpush.bf16.msra.mxu0 %v1480
      %1892 = vmatpush.bf16.msra.mxu0 %v1476
      %1893 = vmatpush.bf16.msra.mxu0 %v1472
      %1894 = vmatpush.bf16.msra.mxu0 %v1468
      %1895 = vmatpush.bf16.msra.mxu0 %v1464
      %1896 = vmatpush.bf16.msra.mxu0 %v1460
      %1897 = vmatpush.bf16.msra.mxu0 %v1456
      %1898 = vmatmul.bf16.gmra.mxu0 %v733
      %v1899 = vpop.f32.mrf.mxu0
      %v1900 = vadd.f32 %v1851, %v1899
      %v1901 = vpop.f32.mrf.mxu0
      %v1902 = vadd.f32 %v1853, %v1901
      %1903 = vmatmul.bf16.gmra.mxu0 %v740
      %v1904 = vpop.f32.mrf.mxu0
      %v1905 = vadd.f32 %v1856, %v1904
      %v1906 = vpop.f32.mrf.mxu0
      %v1907 = vadd.f32 %v1858, %v1906
      %1908 = vmatmul.bf16.gmra.mxu0 %v747
      %v1909 = vpop.f32.mrf.mxu0
      %v1910 = vadd.f32 %v1861, %v1909
      %v1911 = vpop.f32.mrf.mxu0
      %v1912 = vadd.f32 %v1863, %v1911
      %1913 = vmatmul.bf16.gmra.mxu0 %v754
      %v1914 = vpop.f32.mrf.mxu0
      %v1915 = vadd.f32 %v1866, %v1914
      %v1916 = vpop.f32.mrf.mxu0
      %v1917 = vadd.f32 %v1868, %v1916
      %1918 = vmatmul.bf16.gmra.mxu0 %v761
      %v1919 = vpop.f32.mrf.mxu0
      %v1920 = vadd.f32 %v1871, %v1919
      %v1921 = vpop.f32.mrf.mxu0
      %v1922 = vadd.f32 %v1873, %v1921
      %1923 = vmatmul.bf16.gmra.mxu0 %v768
      %v1924 = vpop.f32.mrf.mxu0
      %v1925 = vadd.f32 %v1876, %v1924
      %v1926 = vpop.f32.mrf.mxu0
      %v1927 = vadd.f32 %v1878, %v1926
      %1928 = vmatmul.bf16.gmra.mxu0 %v775
      %v1929 = vpop.f32.mrf.mxu0
      %v1930 = vadd.f32 %v1881, %v1929
      %v1931 = vpop.f32.mrf.mxu0
      %v1932 = vadd.f32 %v1883, %v1931
      %1933 = vmatmul.bf16.gmra.mxu0 %v782
      %v1934 = vpop.f32.mrf.mxu0
      %v1935 = vadd.f32 %v1886, %v1934
      %v1936 = vpop.f32.mrf.mxu0
      %v1937 = vadd.f32 %v1888, %v1936
      %1938 = vdwg.mxu0
      %1939 = vmatpush.bf16.msra.mxu0 %v1516
      %1940 = vmatpush.bf16.msra.mxu0 %v1512
      %1941 = vmatpush.bf16.msra.mxu0 %v1508
      %1942 = vmatpush.bf16.msra.mxu0 %v1504
      %1943 = vmatpush.bf16.msra.mxu0 %v1500
      %1944 = vmatpush.bf16.msra.mxu0 %v1496
      %1945 = vmatpush.bf16.msra.mxu0 %v1492
      %1946 = vmatpush.bf16.msra.mxu0 %v1488
      %1947 = vmatmul.bf16.gmra.mxu0 %v734
      %v1948 = vpop.f32.mrf.mxu0
      %v1949 = vadd.f32 %v1900, %v1948
      %v1950 = vpop.f32.mrf.mxu0
      %v1951 = vadd.f32 %v1902, %v1950
      %1952 = vmatmul.bf16.gmra.mxu0 %v741
      %v1953 = vpop.f32.mrf.mxu0
      %v1954 = vadd.f32 %v1905, %v1953
      %v1955 = vpop.f32.mrf.mxu0
      %v1956 = vadd.f32 %v1907, %v1955
      %1957 = vmatmul.bf16.gmra.mxu0 %v748
      %v1958 = vpop.f32.mrf.mxu0
      %v1959 = vadd.f32 %v1910, %v1958
      %v1960 = vpop.f32.mrf.mxu0
      %v1961 = vadd.f32 %v1912, %v1960
      %1962 = vmatmul.bf16.gmra.mxu0 %v755
      %v1963 = vpop.f32.mrf.mxu0
      %v1964 = vadd.f32 %v1915, %v1963
      %v1965 = vpop.f32.mrf.mxu0
      %v1966 = vadd.f32 %v1917, %v1965
      %1967 = vmatmul.bf16.gmra.mxu0 %v762
      %v1968 = vpop.f32.mrf.mxu0
      %v1969 = vadd.f32 %v1920, %v1968
      %v1970 = vpop.f32.mrf.mxu0
      %v1971 = vadd.f32 %v1922, %v1970
      %1972 = vmatmul.bf16.gmra.mxu0 %v769
      %v1973 = vpop.f32.mrf.mxu0
      %v1974 = vadd.f32 %v1925, %v1973
      %v1975 = vpop.f32.mrf.mxu0
      %v1976 = vadd.f32 %v1927, %v1975
      %1977 = vmatmul.bf16.gmra.mxu0 %v776
      %v1978 = vpop.f32.mrf.mxu0
      %v1979 = vadd.f32 %v1930, %v1978
      %v1980 = vpop.f32.mrf.mxu0
      %v1981 = vadd.f32 %v1932, %v1980
      %1982 = vmatmul.bf16.gmra.mxu0 %v783
      %v1983 = vpop.f32.mrf.mxu0
      %v1984 = vadd.f32 %v1935, %v1983
      %v1985 = vpop.f32.mrf.mxu0
      %v1986 = vadd.f32 %v1937, %v1985
      %1987 = vdwg.mxu0
      %1988 = vmatpush.bf16.msra.mxu0 %v1548
      %1989 = vmatpush.bf16.msra.mxu0 %v1544
      %1990 = vmatpush.bf16.msra.mxu0 %v1540
      %1991 = vmatpush.bf16.msra.mxu0 %v1536
      %1992 = vmatpush.bf16.msra.mxu0 %v1532
      %1993 = vmatpush.bf16.msra.mxu0 %v1528
      %1994 = vmatpush.bf16.msra.mxu0 %v1524
      %1995 = vmatpush.bf16.msra.mxu0 %v1520
      %1996 = vmatmul.bf16.gmra.mxu0 %v735
      %v1997 = vpop.f32.mrf.mxu0
      %v1998 = vadd.f32 %v1949, %v1997
      %v1999 = vpop.f32.mrf.mxu0
      %v2000 = vadd.f32 %v1951, %v1999
      %2001 = vmatmul.bf16.gmra.mxu0 %v742
      %v2002 = vpop.f32.mrf.mxu0
      %v2003 = vadd.f32 %v1954, %v2002
      %v2004 = vpop.f32.mrf.mxu0
      %v2005 = vadd.f32 %v1956, %v2004
      %2006 = vmatmul.bf16.gmra.mxu0 %v749
      %v2007 = vpop.f32.mrf.mxu0
      %v2008 = vadd.f32 %v1959, %v2007
      %v2009 = vpop.f32.mrf.mxu0
      %v2010 = vadd.f32 %v1961, %v2009
      %2011 = vmatmul.bf16.gmra.mxu0 %v756
      %v2012 = vpop.f32.mrf.mxu0
      %v2013 = vadd.f32 %v1964, %v2012
      %v2014 = vpop.f32.mrf.mxu0
      %v2015 = vadd.f32 %v1966, %v2014
      %2016 = vmatmul.bf16.gmra.mxu0 %v763
      %v2017 = vpop.f32.mrf.mxu0
      %v2018 = vadd.f32 %v1969, %v2017
      %v2019 = vpop.f32.mrf.mxu0
      %v2020 = vadd.f32 %v1971, %v2019
      %2021 = vmatmul.bf16.gmra.mxu0 %v770
      %v2022 = vpop.f32.mrf.mxu0
      %v2023 = vadd.f32 %v1974, %v2022
      %v2024 = vpop.f32.mrf.mxu0
      %v2025 = vadd.f32 %v1976, %v2024
      %2026 = vmatmul.bf16.gmra.mxu0 %v777
      %v2027 = vpop.f32.mrf.mxu0
      %v2028 = vadd.f32 %v1979, %v2027
      %v2029 = vpop.f32.mrf.mxu0
      %v2030 = vadd.f32 %v1981, %v2029
      %2031 = vmatmul.bf16.gmra.mxu0 %v784
      %v2032 = vpop.f32.mrf.mxu0
      %v2033 = vadd.f32 %v1984, %v2032
      %v2034 = vpop.f32.mrf.mxu0
      %v2035 = vadd.f32 %v1986, %v2034
      %2036 = vdwg.mxu0
      %2037 = vmatpush.bf16.msra.mxu0 %v1580
      %2038 = vmatpush.bf16.msra.mxu0 %v1576
      %2039 = vmatpush.bf16.msra.mxu0 %v1572
      %2040 = vmatpush.bf16.msra.mxu0 %v1568
      %2041 = vmatpush.bf16.msra.mxu0 %v1564
      %2042 = vmatpush.bf16.msra.mxu0 %v1560
      %2043 = vmatpush.bf16.msra.mxu0 %v1556
      %2044 = vmatpush.bf16.msra.mxu0 %v1552
      %2045 = vmatmul.bf16.gmra.mxu0 %v736
      %v2046 = vpop.f32.mrf.mxu0
      %v2047 = vadd.f32 %v1998, %v2046
      %v2048 = vpop.f32.mrf.mxu0
      %v2049 = vadd.f32 %v2000, %v2048
      %2050 = vmatmul.bf16.gmra.mxu0 %v743
      %v2051 = vpop.f32.mrf.mxu0
      %v2052 = vadd.f32 %v2003, %v2051
      %v2053 = vpop.f32.mrf.mxu0
      %v2054 = vadd.f32 %v2005, %v2053
      %2055 = vmatmul.bf16.gmra.mxu0 %v750
      %v2056 = vpop.f32.mrf.mxu0
      %v2057 = vadd.f32 %v2008, %v2056
      %v2058 = vpop.f32.mrf.mxu0
      %v2059 = vadd.f32 %v2010, %v2058
      %2060 = vmatmul.bf16.gmra.mxu0 %v757
      %v2061 = vpop.f32.mrf.mxu0
      %v2062 = vadd.f32 %v2013, %v2061
      %v2063 = vpop.f32.mrf.mxu0
      %v2064 = vadd.f32 %v2015, %v2063
      %2065 = vmatmul.bf16.gmra.mxu0 %v764
      %v2066 = vpop.f32.mrf.mxu0
      %v2067 = vadd.f32 %v2018, %v2066
      %v2068 = vpop.f32.mrf.mxu0
      %v2069 = vadd.f32 %v2020, %v2068
      %2070 = vmatmul.bf16.gmra.mxu0 %v771
      %v2071 = vpop.f32.mrf.mxu0
      %v2072 = vadd.f32 %v2023, %v2071
      %v2073 = vpop.f32.mrf.mxu0
      %v2074 = vadd.f32 %v2025, %v2073
      %2075 = vmatmul.bf16.gmra.mxu0 %v778
      %v2076 = vpop.f32.mrf.mxu0
      %v2077 = vadd.f32 %v2028, %v2076
      %v2078 = vpop.f32.mrf.mxu0
      %v2079 = vadd.f32 %v2030, %v2078
      %2080 = vmatmul.bf16.gmra.mxu0 %v785
      %v2081 = vpop.f32.mrf.mxu0
      %v2082 = vadd.f32 %v2033, %v2081
      %v2083 = vpop.f32.mrf.mxu0
      %v2084 = vadd.f32 %v2035, %v2083
      %2085 = vdwg.mxu0
      %2086 = vmatpush.bf16.msra.mxu0 %v1612
      %2087 = vmatpush.bf16.msra.mxu0 %v1608
      %2088 = vmatpush.bf16.msra.mxu0 %v1604
      %2089 = vmatpush.bf16.msra.mxu0 %v1600
      %2090 = vmatpush.bf16.msra.mxu0 %v1596
      %2091 = vmatpush.bf16.msra.mxu0 %v1592
      %2092 = vmatpush.bf16.msra.mxu0 %v1588
      %2093 = vmatpush.bf16.msra.mxu0 %v1584
      %2094 = vmatmul.bf16.gmra.mxu0 %v737
      %v2095 = vpop.f32.mrf.mxu0
      %v2096 = vadd.f32 %v2047, %v2095
      %v2097 = vpop.f32.mrf.mxu0
      %v2098 = vadd.f32 %v2049, %v2097
      %2099 = vmatmul.bf16.gmra.mxu0 %v744
      %v2100 = vpop.f32.mrf.mxu0
      %v2101 = vadd.f32 %v2052, %v2100
      %v2102 = vpop.f32.mrf.mxu0
      %v2103 = vadd.f32 %v2054, %v2102
      %2104 = vmatmul.bf16.gmra.mxu0 %v751
      %v2105 = vpop.f32.mrf.mxu0
      %v2106 = vadd.f32 %v2057, %v2105
      %v2107 = vpop.f32.mrf.mxu0
      %v2108 = vadd.f32 %v2059, %v2107
      %2109 = vmatmul.bf16.gmra.mxu0 %v758
      %v2110 = vpop.f32.mrf.mxu0
      %v2111 = vadd.f32 %v2062, %v2110
      %v2112 = vpop.f32.mrf.mxu0
      %v2113 = vadd.f32 %v2064, %v2112
      %2114 = vmatmul.bf16.gmra.mxu0 %v765
      %v2115 = vpop.f32.mrf.mxu0
      %v2116 = vadd.f32 %v2067, %v2115
      %v2117 = vpop.f32.mrf.mxu0
      %v2118 = vadd.f32 %v2069, %v2117
      %2119 = vmatmul.bf16.gmra.mxu0 %v772
      %v2120 = vpop.f32.mrf.mxu0
      %v2121 = vadd.f32 %v2072, %v2120
      %v2122 = vpop.f32.mrf.mxu0
      %v2123 = vadd.f32 %v2074, %v2122
      %2124 = vmatmul.bf16.gmra.mxu0 %v779
      %v2125 = vpop.f32.mrf.mxu0
      %v2126 = vadd.f32 %v2077, %v2125
      %v2127 = vpop.f32.mrf.mxu0
      %v2128 = vadd.f32 %v2079, %v2127
      %2129 = vmatmul.bf16.gmra.mxu0 %v786
      %v2130 = vpop.f32.mrf.mxu0
      %v2131 = vadd.f32 %v2082, %v2130
      %v2132 = vpop.f32.mrf.mxu0
      %v2133 = vadd.f32 %v2084, %v2132
      %2134 = vdwg.mxu0
      %2135 = vmatpush.bf16.msra.mxu0 0
      %2136 = vmatpush.bf16.msra.mxu0 0
      %2137 = vmatpush.bf16.msra.mxu0 0
      %2138 = vmatpush.bf16.msra.mxu0 0
      %2139 = vmatpush.bf16.msra.mxu0 0
      %2140 = vmatpush.bf16.msra.mxu0 0
      %2141 = vmatpush.bf16.msra.mxu0 0
      %2142 = vmatpush.bf16.msra.mxu0 %v1616
      %2143 = vmatmul.bf16.gmra.mxu0 %v1818
      %v2144 = vpop.f32.mrf.mxu0
      %v2145 = vadd.f32 %v2096, %v2144
      %v2146 = vpop.f32.mrf.mxu0
      %v2147 = vadd.f32 %v2098, %v2146
      %2148 = vmatmul.bf16.gmra.mxu0 %v1821
      %v2149 = vpop.f32.mrf.mxu0
      %v2150 = vadd.f32 %v2101, %v2149
      %v2151 = vpop.f32.mrf.mxu0
      %v2152 = vadd.f32 %v2103, %v2151
      %2153 = vmatmul.bf16.gmra.mxu0 %v1824
      %v2154 = vpop.f32.mrf.mxu0
      %v2155 = vadd.f32 %v2106, %v2154
      %v2156 = vpop.f32.mrf.mxu0
      %v2157 = vadd.f32 %v2108, %v2156
      %2158 = vmatmul.bf16.gmra.mxu0 %v1827
      %v2159 = vpop.f32.mrf.mxu0
      %v2160 = vadd.f32 %v2111, %v2159
      %v2161 = vpop.f32.mrf.mxu0
      %v2162 = vadd.f32 %v2113, %v2161
      %2163 = vmatmul.bf16.gmra.mxu0 %v1830
      %v2164 = vpop.f32.mrf.mxu0
      %v2165 = vadd.f32 %v2116, %v2164
      %v2166 = vpop.f32.mrf.mxu0
      %v2167 = vadd.f32 %v2118, %v2166
      %2168 = vmatmul.bf16.gmra.mxu0 %v1833
      %v2169 = vpop.f32.mrf.mxu0
      %v2170 = vadd.f32 %v2121, %v2169
      %v2171 = vpop.f32.mrf.mxu0
      %v2172 = vadd.f32 %v2123, %v2171
      %2173 = vmatmul.bf16.gmra.mxu0 %v1836
      %v2174 = vpop.f32.mrf.mxu0
      %v2175 = vadd.f32 %v2126, %v2174
      %v2176 = vpop.f32.mrf.mxu0
      %v2177 = vadd.f32 %v2128, %v2176
      %2178 = vmatmul.bf16.gmra.mxu0 %v1839
      %v2179 = vpop.f32.mrf.mxu0
      %v2180 = vadd.f32 %v2131, %v2179
      %v2181 = vpop.f32.mrf.mxu0
      %v2182 = vadd.f32 %v2133, %v2181
      %2183 = vdwg.mxu0
      %2184 = vmatpush.bf16.msra.mxu0 %v1453
      %2185 = vmatpush.bf16.msra.mxu0 %v1449
      %2186 = vmatpush.bf16.msra.mxu0 %v1445
      %2187 = vmatpush.bf16.msra.mxu0 %v1441
      %2188 = vmatpush.bf16.msra.mxu0 %v1437
      %2189 = vmatpush.bf16.msra.mxu0 %v1433
      %2190 = vmatpush.bf16.msra.mxu0 %v1429
      %2191 = vmatpush.bf16.msra.mxu0 %v1425
      %2192 = vmatmul.bf16.gmra.mxu0 %v732
      %v2193 = vpop.f32.mrf.mxu0
      %v2194 = vadd.f32 %v549, %v2193
      %v2195 = vpop.f32.mrf.mxu0
      %v2196 = vadd.f32 %v549, %v2195
      %2197 = vmatmul.bf16.gmra.mxu0 %v739
      %v2198 = vpop.f32.mrf.mxu0
      %v2199 = vadd.f32 %v549, %v2198
      %v2200 = vpop.f32.mrf.mxu0
      %v2201 = vadd.f32 %v549, %v2200
      %2202 = vmatmul.bf16.gmra.mxu0 %v746
      %v2203 = vpop.f32.mrf.mxu0
      %v2204 = vadd.f32 %v549, %v2203
      %v2205 = vpop.f32.mrf.mxu0
      %v2206 = vadd.f32 %v549, %v2205
      %2207 = vmatmul.bf16.gmra.mxu0 %v753
      %v2208 = vpop.f32.mrf.mxu0
      %v2209 = vadd.f32 %v549, %v2208
      %v2210 = vpop.f32.mrf.mxu0
      %v2211 = vadd.f32 %v549, %v2210
      %2212 = vmatmul.bf16.gmra.mxu0 %v760
      %v2213 = vpop.f32.mrf.mxu0
      %v2214 = vadd.f32 %v549, %v2213
      %v2215 = vpop.f32.mrf.mxu0
      %v2216 = vadd.f32 %v549, %v2215
      %2217 = vmatmul.bf16.gmra.mxu0 %v767
      %v2218 = vpop.f32.mrf.mxu0
      %v2219 = vadd.f32 %v549, %v2218
      %v2220 = vpop.f32.mrf.mxu0
      %v2221 = vadd.f32 %v549, %v2220
      %2222 = vmatmul.bf16.gmra.mxu0 %v774
      %v2223 = vpop.f32.mrf.mxu0
      %v2224 = vadd.f32 %v549, %v2223
      %v2225 = vpop.f32.mrf.mxu0
      %v2226 = vadd.f32 %v549, %v2225
      %2227 = vmatmul.bf16.gmra.mxu0 %v781
      %v2228 = vpop.f32.mrf.mxu0
      %v2229 = vadd.f32 %v549, %v2228
      %v2230 = vpop.f32.mrf.mxu0
      %v2231 = vadd.f32 %v549, %v2230
      %2232 = vdwg.mxu0
      %2233 = vmatpush.bf16.msra.mxu0 %v1485
      %2234 = vmatpush.bf16.msra.mxu0 %v1481
      %2235 = vmatpush.bf16.msra.mxu0 %v1477
      %2236 = vmatpush.bf16.msra.mxu0 %v1473
      %2237 = vmatpush.bf16.msra.mxu0 %v1469
      %2238 = vmatpush.bf16.msra.mxu0 %v1465
      %2239 = vmatpush.bf16.msra.mxu0 %v1461
      %2240 = vmatpush.bf16.msra.mxu0 %v1457
      %2241 = vmatmul.bf16.gmra.mxu0 %v733
      %v2242 = vpop.f32.mrf.mxu0
      %v2243 = vadd.f32 %v2194, %v2242
      %v2244 = vpop.f32.mrf.mxu0
      %v2245 = vadd.f32 %v2196, %v2244
      %2246 = vmatmul.bf16.gmra.mxu0 %v740
      %v2247 = vpop.f32.mrf.mxu0
      %v2248 = vadd.f32 %v2199, %v2247
      %v2249 = vpop.f32.mrf.mxu0
      %v2250 = vadd.f32 %v2201, %v2249
      %2251 = vmatmul.bf16.gmra.mxu0 %v747
      %v2252 = vpop.f32.mrf.mxu0
      %v2253 = vadd.f32 %v2204, %v2252
      %v2254 = vpop.f32.mrf.mxu0
      %v2255 = vadd.f32 %v2206, %v2254
      %2256 = vmatmul.bf16.gmra.mxu0 %v754
      %v2257 = vpop.f32.mrf.mxu0
      %v2258 = vadd.f32 %v2209, %v2257
      %v2259 = vpop.f32.mrf.mxu0
      %v2260 = vadd.f32 %v2211, %v2259
      %2261 = vmatmul.bf16.gmra.mxu0 %v761
      %v2262 = vpop.f32.mrf.mxu0
      %v2263 = vadd.f32 %v2214, %v2262
      %v2264 = vpop.f32.mrf.mxu0
      %v2265 = vadd.f32 %v2216, %v2264
      %2266 = vmatmul.bf16.gmra.mxu0 %v768
      %v2267 = vpop.f32.mrf.mxu0
      %v2268 = vadd.f32 %v2219, %v2267
      %v2269 = vpop.f32.mrf.mxu0
      %v2270 = vadd.f32 %v2221, %v2269
      %2271 = vmatmul.bf16.gmra.mxu0 %v775
      %v2272 = vpop.f32.mrf.mxu0
      %v2273 = vadd.f32 %v2224, %v2272
      %v2274 = vpop.f32.mrf.mxu0
      %v2275 = vadd.f32 %v2226, %v2274
      %2276 = vmatmul.bf16.gmra.mxu0 %v782
      %v2277 = vpop.f32.mrf.mxu0
      %v2278 = vadd.f32 %v2229, %v2277
      %v2279 = vpop.f32.mrf.mxu0
      %v2280 = vadd.f32 %v2231, %v2279
      %2281 = vdwg.mxu0
      %2282 = vmatpush.bf16.msra.mxu0 %v1517
      %2283 = vmatpush.bf16.msra.mxu0 %v1513
      %2284 = vmatpush.bf16.msra.mxu0 %v1509
      %2285 = vmatpush.bf16.msra.mxu0 %v1505
      %2286 = vmatpush.bf16.msra.mxu0 %v1501
      %2287 = vmatpush.bf16.msra.mxu0 %v1497
      %2288 = vmatpush.bf16.msra.mxu0 %v1493
      %2289 = vmatpush.bf16.msra.mxu0 %v1489
      %2290 = vmatmul.bf16.gmra.mxu0 %v734
      %v2291 = vpop.f32.mrf.mxu0
      %v2292 = vadd.f32 %v2243, %v2291
      %v2293 = vpop.f32.mrf.mxu0
      %v2294 = vadd.f32 %v2245, %v2293
      %2295 = vmatmul.bf16.gmra.mxu0 %v741
      %v2296 = vpop.f32.mrf.mxu0
      %v2297 = vadd.f32 %v2248, %v2296
      %v2298 = vpop.f32.mrf.mxu0
      %v2299 = vadd.f32 %v2250, %v2298
      %2300 = vmatmul.bf16.gmra.mxu0 %v748
      %v2301 = vpop.f32.mrf.mxu0
      %v2302 = vadd.f32 %v2253, %v2301
      %v2303 = vpop.f32.mrf.mxu0
      %v2304 = vadd.f32 %v2255, %v2303
      %2305 = vmatmul.bf16.gmra.mxu0 %v755
      %v2306 = vpop.f32.mrf.mxu0
      %v2307 = vadd.f32 %v2258, %v2306
      %v2308 = vpop.f32.mrf.mxu0
      %v2309 = vadd.f32 %v2260, %v2308
      %2310 = vmatmul.bf16.gmra.mxu0 %v762
      %v2311 = vpop.f32.mrf.mxu0
      %v2312 = vadd.f32 %v2263, %v2311
      %v2313 = vpop.f32.mrf.mxu0
      %v2314 = vadd.f32 %v2265, %v2313
      %2315 = vmatmul.bf16.gmra.mxu0 %v769
      %v2316 = vpop.f32.mrf.mxu0
      %v2317 = vadd.f32 %v2268, %v2316
      %v2318 = vpop.f32.mrf.mxu0
      %v2319 = vadd.f32 %v2270, %v2318
      %2320 = vmatmul.bf16.gmra.mxu0 %v776
      %v2321 = vpop.f32.mrf.mxu0
      %v2322 = vadd.f32 %v2273, %v2321
      %v2323 = vpop.f32.mrf.mxu0
      %v2324 = vadd.f32 %v2275, %v2323
      %2325 = vmatmul.bf16.gmra.mxu0 %v783
      %v2326 = vpop.f32.mrf.mxu0
      %v2327 = vadd.f32 %v2278, %v2326
      %v2328 = vpop.f32.mrf.mxu0
      %v2329 = vadd.f32 %v2280, %v2328
      %2330 = vdwg.mxu0
      %2331 = vmatpush.bf16.msra.mxu0 %v1549
      %2332 = vmatpush.bf16.msra.mxu0 %v1545
      %2333 = vmatpush.bf16.msra.mxu0 %v1541
      %2334 = vmatpush.bf16.msra.mxu0 %v1537
      %2335 = vmatpush.bf16.msra.mxu0 %v1533
      %2336 = vmatpush.bf16.msra.mxu0 %v1529
      %2337 = vmatpush.bf16.msra.mxu0 %v1525
      %2338 = vmatpush.bf16.msra.mxu0 %v1521
      %2339 = vmatmul.bf16.gmra.mxu0 %v735
      %v2340 = vpop.f32.mrf.mxu0
      %v2341 = vadd.f32 %v2292, %v2340
      %v2342 = vpop.f32.mrf.mxu0
      %v2343 = vadd.f32 %v2294, %v2342
      %2344 = vmatmul.bf16.gmra.mxu0 %v742
      %v2345 = vpop.f32.mrf.mxu0
      %v2346 = vadd.f32 %v2297, %v2345
      %v2347 = vpop.f32.mrf.mxu0
      %v2348 = vadd.f32 %v2299, %v2347
      %2349 = vmatmul.bf16.gmra.mxu0 %v749
      %v2350 = vpop.f32.mrf.mxu0
      %v2351 = vadd.f32 %v2302, %v2350
      %v2352 = vpop.f32.mrf.mxu0
      %v2353 = vadd.f32 %v2304, %v2352
      %2354 = vmatmul.bf16.gmra.mxu0 %v756
      %v2355 = vpop.f32.mrf.mxu0
      %v2356 = vadd.f32 %v2307, %v2355
      %v2357 = vpop.f32.mrf.mxu0
      %v2358 = vadd.f32 %v2309, %v2357
      %2359 = vmatmul.bf16.gmra.mxu0 %v763
      %v2360 = vpop.f32.mrf.mxu0
      %v2361 = vadd.f32 %v2312, %v2360
      %v2362 = vpop.f32.mrf.mxu0
      %v2363 = vadd.f32 %v2314, %v2362
      %2364 = vmatmul.bf16.gmra.mxu0 %v770
      %v2365 = vpop.f32.mrf.mxu0
      %v2366 = vadd.f32 %v2317, %v2365
      %v2367 = vpop.f32.mrf.mxu0
      %v2368 = vadd.f32 %v2319, %v2367
      %2369 = vmatmul.bf16.gmra.mxu0 %v777
      %v2370 = vpop.f32.mrf.mxu0
      %v2371 = vadd.f32 %v2322, %v2370
      %v2372 = vpop.f32.mrf.mxu0
      %v2373 = vadd.f32 %v2324, %v2372
      %2374 = vmatmul.bf16.gmra.mxu0 %v784
      %v2375 = vpop.f32.mrf.mxu0
      %v2376 = vadd.f32 %v2327, %v2375
      %v2377 = vpop.f32.mrf.mxu0
      %v2378 = vadd.f32 %v2329, %v2377
      %2379 = vdwg.mxu0
      %2380 = vmatpush.bf16.msra.mxu0 %v1581
      %2381 = vmatpush.bf16.msra.mxu0 %v1577
      %2382 = vmatpush.bf16.msra.mxu0 %v1573
      %2383 = vmatpush.bf16.msra.mxu0 %v1569
      %2384 = vmatpush.bf16.msra.mxu0 %v1565
      %2385 = vmatpush.bf16.msra.mxu0 %v1561
      %2386 = vmatpush.bf16.msra.mxu0 %v1557
      %2387 = vmatpush.bf16.msra.mxu0 %v1553
      %2388 = vmatmul.bf16.gmra.mxu0 %v736
      %v2389 = vpop.f32.mrf.mxu0
      %v2390 = vadd.f32 %v2341, %v2389
      %v2391 = vpop.f32.mrf.mxu0
      %v2392 = vadd.f32 %v2343, %v2391
      %2393 = vmatmul.bf16.gmra.mxu0 %v743
      %v2394 = vpop.f32.mrf.mxu0
      %v2395 = vadd.f32 %v2346, %v2394
      %v2396 = vpop.f32.mrf.mxu0
      %v2397 = vadd.f32 %v2348, %v2396
      %2398 = vmatmul.bf16.gmra.mxu0 %v750
      %v2399 = vpop.f32.mrf.mxu0
      %v2400 = vadd.f32 %v2351, %v2399
      %v2401 = vpop.f32.mrf.mxu0
      %v2402 = vadd.f32 %v2353, %v2401
      %2403 = vmatmul.bf16.gmra.mxu0 %v757
      %v2404 = vpop.f32.mrf.mxu0
      %v2405 = vadd.f32 %v2356, %v2404
      %v2406 = vpop.f32.mrf.mxu0
      %v2407 = vadd.f32 %v2358, %v2406
      %2408 = vmatmul.bf16.gmra.mxu0 %v764
      %v2409 = vpop.f32.mrf.mxu0
      %v2410 = vadd.f32 %v2361, %v2409
      %v2411 = vpop.f32.mrf.mxu0
      %v2412 = vadd.f32 %v2363, %v2411
      %2413 = vmatmul.bf16.gmra.mxu0 %v771
      %v2414 = vpop.f32.mrf.mxu0
      %v2415 = vadd.f32 %v2366, %v2414
      %v2416 = vpop.f32.mrf.mxu0
      %v2417 = vadd.f32 %v2368, %v2416
      %2418 = vmatmul.bf16.gmra.mxu0 %v778
      %v2419 = vpop.f32.mrf.mxu0
      %v2420 = vadd.f32 %v2371, %v2419
      %v2421 = vpop.f32.mrf.mxu0
      %v2422 = vadd.f32 %v2373, %v2421
      %2423 = vmatmul.bf16.gmra.mxu0 %v785
      %v2424 = vpop.f32.mrf.mxu0
      %v2425 = vadd.f32 %v2376, %v2424
      %v2426 = vpop.f32.mrf.mxu0
      %v2427 = vadd.f32 %v2378, %v2426
      %2428 = vdwg.mxu0
      %2429 = vmatpush.bf16.msra.mxu0 %v1613
      %2430 = vmatpush.bf16.msra.mxu0 %v1609
      %2431 = vmatpush.bf16.msra.mxu0 %v1605
      %2432 = vmatpush.bf16.msra.mxu0 %v1601
      %2433 = vmatpush.bf16.msra.mxu0 %v1597
      %2434 = vmatpush.bf16.msra.mxu0 %v1593
      %2435 = vmatpush.bf16.msra.mxu0 %v1589
      %2436 = vmatpush.bf16.msra.mxu0 %v1585
      %2437 = vmatmul.bf16.gmra.mxu0 %v737
      %v2438 = vpop.f32.mrf.mxu0
      %v2439 = vadd.f32 %v2390, %v2438
      %v2440 = vpop.f32.mrf.mxu0
      %v2441 = vadd.f32 %v2392, %v2440
      %2442 = vmatmul.bf16.gmra.mxu0 %v744
      %v2443 = vpop.f32.mrf.mxu0
      %v2444 = vadd.f32 %v2395, %v2443
      %v2445 = vpop.f32.mrf.mxu0
      %v2446 = vadd.f32 %v2397, %v2445
      %2447 = vmatmul.bf16.gmra.mxu0 %v751
      %v2448 = vpop.f32.mrf.mxu0
      %v2449 = vadd.f32 %v2400, %v2448
      %v2450 = vpop.f32.mrf.mxu0
      %v2451 = vadd.f32 %v2402, %v2450
      %2452 = vmatmul.bf16.gmra.mxu0 %v758
      %v2453 = vpop.f32.mrf.mxu0
      %v2454 = vadd.f32 %v2405, %v2453
      %v2455 = vpop.f32.mrf.mxu0
      %v2456 = vadd.f32 %v2407, %v2455
      %2457 = vmatmul.bf16.gmra.mxu0 %v765
      %v2458 = vpop.f32.mrf.mxu0
      %v2459 = vadd.f32 %v2410, %v2458
      %v2460 = vpop.f32.mrf.mxu0
      %v2461 = vadd.f32 %v2412, %v2460
      %2462 = vmatmul.bf16.gmra.mxu0 %v772
      %v2463 = vpop.f32.mrf.mxu0
      %v2464 = vadd.f32 %v2415, %v2463
      %v2465 = vpop.f32.mrf.mxu0
      %v2466 = vadd.f32 %v2417, %v2465
      %2467 = vmatmul.bf16.gmra.mxu0 %v779
      %v2468 = vpop.f32.mrf.mxu0
      %v2469 = vadd.f32 %v2420, %v2468
      %v2470 = vpop.f32.mrf.mxu0
      %v2471 = vadd.f32 %v2422, %v2470
      %2472 = vmatmul.bf16.gmra.mxu0 %v786
      %v2473 = vpop.f32.mrf.mxu0
      %v2474 = vadd.f32 %v2425, %v2473
      %v2475 = vpop.f32.mrf.mxu0
      %v2476 = vadd.f32 %v2427, %v2475
      %2477 = vdwg.mxu0
      %2478 = vmatpush.bf16.msra.mxu0 0
      %2479 = vmatpush.bf16.msra.mxu0 0
      %2480 = vmatpush.bf16.msra.mxu0 0
      %2481 = vmatpush.bf16.msra.mxu0 0
      %2482 = vmatpush.bf16.msra.mxu0 0
      %2483 = vmatpush.bf16.msra.mxu0 0
      %2484 = vmatpush.bf16.msra.mxu0 0
      %2485 = vmatpush.bf16.msra.mxu0 %v1617
      %2486 = vmatmul.bf16.gmra.mxu0 %v1818
      %v2487 = vpop.f32.mrf.mxu0
      %v2488 = vadd.f32 %v2439, %v2487
      %v2489 = vpop.f32.mrf.mxu0
      %v2490 = vadd.f32 %v2441, %v2489
      %2491 = vmatmul.bf16.gmra.mxu0 %v1821
      %v2492 = vpop.f32.mrf.mxu0
      %v2493 = vadd.f32 %v2444, %v2492
      %v2494 = vpop.f32.mrf.mxu0
      %v2495 = vadd.f32 %v2446, %v2494
      %2496 = vmatmul.bf16.gmra.mxu0 %v1824
      %v2497 = vpop.f32.mrf.mxu0
      %v2498 = vadd.f32 %v2449, %v2497
      %v2499 = vpop.f32.mrf.mxu0
      %v2500 = vadd.f32 %v2451, %v2499
      %2501 = vmatmul.bf16.gmra.mxu0 %v1827
      %v2502 = vpop.f32.mrf.mxu0
      %v2503 = vadd.f32 %v2454, %v2502
      %v2504 = vpop.f32.mrf.mxu0
      %v2505 = vadd.f32 %v2456, %v2504
      %2506 = vmatmul.bf16.gmra.mxu0 %v1830
      %v2507 = vpop.f32.mrf.mxu0
      %v2508 = vadd.f32 %v2459, %v2507
      %v2509 = vpop.f32.mrf.mxu0
      %v2510 = vadd.f32 %v2461, %v2509
      %2511 = vmatmul.bf16.gmra.mxu0 %v1833
      %v2512 = vpop.f32.mrf.mxu0
      %v2513 = vadd.f32 %v2464, %v2512
      %v2514 = vpop.f32.mrf.mxu0
      %v2515 = vadd.f32 %v2466, %v2514
      %2516 = vmatmul.bf16.gmra.mxu0 %v1836
      %v2517 = vpop.f32.mrf.mxu0
      %v2518 = vadd.f32 %v2469, %v2517
      %v2519 = vpop.f32.mrf.mxu0
      %v2520 = vadd.f32 %v2471, %v2519
      %2521 = vmatmul.bf16.gmra.mxu0 %v1839
      %v2522 = vpop.f32.mrf.mxu0
      %v2523 = vadd.f32 %v2474, %v2522
      %v2524 = vpop.f32.mrf.mxu0
      %v2525 = vadd.f32 %v2476, %v2524
      %2526 = vdwg.mxu0
      %2527 = vmatpush.bf16.msra.mxu0 %v1454
      %2528 = vmatpush.bf16.msra.mxu0 %v1450
      %2529 = vmatpush.bf16.msra.mxu0 %v1446
      %2530 = vmatpush.bf16.msra.mxu0 %v1442
      %2531 = vmatpush.bf16.msra.mxu0 %v1438
      %2532 = vmatpush.bf16.msra.mxu0 %v1434
      %2533 = vmatpush.bf16.msra.mxu0 %v1430
      %2534 = vmatpush.bf16.msra.mxu0 %v1426
      %2535 = vmatmul.bf16.gmra.mxu0 %v732
      %v2536 = vpop.f32.mrf.mxu0
      %v2537 = vadd.f32 %v550, %v2536
      %v2538 = vpop.f32.mrf.mxu0
      %v2539 = vadd.f32 %v550, %v2538
      %2540 = vmatmul.bf16.gmra.mxu0 %v739
      %v2541 = vpop.f32.mrf.mxu0
      %v2542 = vadd.f32 %v550, %v2541
      %v2543 = vpop.f32.mrf.mxu0
      %v2544 = vadd.f32 %v550, %v2543
      %2545 = vmatmul.bf16.gmra.mxu0 %v746
      %v2546 = vpop.f32.mrf.mxu0
      %v2547 = vadd.f32 %v550, %v2546
      %v2548 = vpop.f32.mrf.mxu0
      %v2549 = vadd.f32 %v550, %v2548
      %2550 = vmatmul.bf16.gmra.mxu0 %v753
      %v2551 = vpop.f32.mrf.mxu0
      %v2552 = vadd.f32 %v550, %v2551
      %v2553 = vpop.f32.mrf.mxu0
      %v2554 = vadd.f32 %v550, %v2553
      %2555 = vmatmul.bf16.gmra.mxu0 %v760
      %v2556 = vpop.f32.mrf.mxu0
      %v2557 = vadd.f32 %v550, %v2556
      %v2558 = vpop.f32.mrf.mxu0
      %v2559 = vadd.f32 %v550, %v2558
      %2560 = vmatmul.bf16.gmra.mxu0 %v767
      %v2561 = vpop.f32.mrf.mxu0
      %v2562 = vadd.f32 %v550, %v2561
      %v2563 = vpop.f32.mrf.mxu0
      %v2564 = vadd.f32 %v550, %v2563
      %2565 = vmatmul.bf16.gmra.mxu0 %v774
      %v2566 = vpop.f32.mrf.mxu0
      %v2567 = vadd.f32 %v550, %v2566
      %v2568 = vpop.f32.mrf.mxu0
      %v2569 = vadd.f32 %v550, %v2568
      %2570 = vmatmul.bf16.gmra.mxu0 %v781
      %v2571 = vpop.f32.mrf.mxu0
      %v2572 = vadd.f32 %v550, %v2571
      %v2573 = vpop.f32.mrf.mxu0
      %v2574 = vadd.f32 %v550, %v2573
      %2575 = vdwg.mxu0
      %2576 = vmatpush.bf16.msra.mxu0 %v1486
      %2577 = vmatpush.bf16.msra.mxu0 %v1482
      %2578 = vmatpush.bf16.msra.mxu0 %v1478
      %2579 = vmatpush.bf16.msra.mxu0 %v1474
      %2580 = vmatpush.bf16.msra.mxu0 %v1470
      %2581 = vmatpush.bf16.msra.mxu0 %v1466
      %2582 = vmatpush.bf16.msra.mxu0 %v1462
      %2583 = vmatpush.bf16.msra.mxu0 %v1458
      %2584 = vmatmul.bf16.gmra.mxu0 %v733
      %v2585 = vpop.f32.mrf.mxu0
      %v2586 = vadd.f32 %v2537, %v2585
      %v2587 = vpop.f32.mrf.mxu0
      %v2588 = vadd.f32 %v2539, %v2587
      %2589 = vmatmul.bf16.gmra.mxu0 %v740
      %v2590 = vpop.f32.mrf.mxu0
      %v2591 = vadd.f32 %v2542, %v2590
      %v2592 = vpop.f32.mrf.mxu0
      %v2593 = vadd.f32 %v2544, %v2592
      %2594 = vmatmul.bf16.gmra.mxu0 %v747
      %v2595 = vpop.f32.mrf.mxu0
      %v2596 = vadd.f32 %v2547, %v2595
      %v2597 = vpop.f32.mrf.mxu0
      %v2598 = vadd.f32 %v2549, %v2597
      %2599 = vmatmul.bf16.gmra.mxu0 %v754
      %v2600 = vpop.f32.mrf.mxu0
      %v2601 = vadd.f32 %v2552, %v2600
      %v2602 = vpop.f32.mrf.mxu0
      %v2603 = vadd.f32 %v2554, %v2602
      %2604 = vmatmul.bf16.gmra.mxu0 %v761
      %v2605 = vpop.f32.mrf.mxu0
      %v2606 = vadd.f32 %v2557, %v2605
      %v2607 = vpop.f32.mrf.mxu0
      %v2608 = vadd.f32 %v2559, %v2607
      %2609 = vmatmul.bf16.gmra.mxu0 %v768
      %v2610 = vpop.f32.mrf.mxu0
      %v2611 = vadd.f32 %v2562, %v2610
      %v2612 = vpop.f32.mrf.mxu0
      %v2613 = vadd.f32 %v2564, %v2612
      %2614 = vmatmul.bf16.gmra.mxu0 %v775
      %v2615 = vpop.f32.mrf.mxu0
      %v2616 = vadd.f32 %v2567, %v2615
      %v2617 = vpop.f32.mrf.mxu0
      %v2618 = vadd.f32 %v2569, %v2617
      %2619 = vmatmul.bf16.gmra.mxu0 %v782
      %v2620 = vpop.f32.mrf.mxu0
      %v2621 = vadd.f32 %v2572, %v2620
      %v2622 = vpop.f32.mrf.mxu0
      %v2623 = vadd.f32 %v2574, %v2622
      %2624 = vdwg.mxu0
      %2625 = vmatpush.bf16.msra.mxu0 %v1518
      %2626 = vmatpush.bf16.msra.mxu0 %v1514
      %2627 = vmatpush.bf16.msra.mxu0 %v1510
      %2628 = vmatpush.bf16.msra.mxu0 %v1506
      %2629 = vmatpush.bf16.msra.mxu0 %v1502
      %2630 = vmatpush.bf16.msra.mxu0 %v1498
      %2631 = vmatpush.bf16.msra.mxu0 %v1494
      %2632 = vmatpush.bf16.msra.mxu0 %v1490
      %2633 = vmatmul.bf16.gmra.mxu0 %v734
      %v2634 = vpop.f32.mrf.mxu0
      %v2635 = vadd.f32 %v2586, %v2634
      %v2636 = vpop.f32.mrf.mxu0
      %v2637 = vadd.f32 %v2588, %v2636
      %2638 = vmatmul.bf16.gmra.mxu0 %v741
      %v2639 = vpop.f32.mrf.mxu0
      %v2640 = vadd.f32 %v2591, %v2639
      %v2641 = vpop.f32.mrf.mxu0
      %v2642 = vadd.f32 %v2593, %v2641
      %2643 = vmatmul.bf16.gmra.mxu0 %v748
      %v2644 = vpop.f32.mrf.mxu0
      %v2645 = vadd.f32 %v2596, %v2644
      %v2646 = vpop.f32.mrf.mxu0
      %v2647 = vadd.f32 %v2598, %v2646
      %2648 = vmatmul.bf16.gmra.mxu0 %v755
      %v2649 = vpop.f32.mrf.mxu0
      %v2650 = vadd.f32 %v2601, %v2649
      %v2651 = vpop.f32.mrf.mxu0
      %v2652 = vadd.f32 %v2603, %v2651
      %2653 = vmatmul.bf16.gmra.mxu0 %v762
      %v2654 = vpop.f32.mrf.mxu0
      %v2655 = vadd.f32 %v2606, %v2654
      %v2656 = vpop.f32.mrf.mxu0
      %v2657 = vadd.f32 %v2608, %v2656
      %2658 = vmatmul.bf16.gmra.mxu0 %v769
      %v2659 = vpop.f32.mrf.mxu0
      %v2660 = vadd.f32 %v2611, %v2659
      %v2661 = vpop.f32.mrf.mxu0
      %v2662 = vadd.f32 %v2613, %v2661
      %2663 = vmatmul.bf16.gmra.mxu0 %v776
      %v2664 = vpop.f32.mrf.mxu0
      %v2665 = vadd.f32 %v2616, %v2664
      %v2666 = vpop.f32.mrf.mxu0
      %v2667 = vadd.f32 %v2618, %v2666
      %2668 = vmatmul.bf16.gmra.mxu0 %v783
      %v2669 = vpop.f32.mrf.mxu0
      %v2670 = vadd.f32 %v2621, %v2669
      %v2671 = vpop.f32.mrf.mxu0
      %v2672 = vadd.f32 %v2623, %v2671
      %2673 = vdwg.mxu0
      %2674 = vmatpush.bf16.msra.mxu0 %v1550
      %2675 = vmatpush.bf16.msra.mxu0 %v1546
      %2676 = vmatpush.bf16.msra.mxu0 %v1542
      %2677 = vmatpush.bf16.msra.mxu0 %v1538
      %2678 = vmatpush.bf16.msra.mxu0 %v1534
      %2679 = vmatpush.bf16.msra.mxu0 %v1530
      %2680 = vmatpush.bf16.msra.mxu0 %v1526
      %2681 = vmatpush.bf16.msra.mxu0 %v1522
      %2682 = vmatmul.bf16.gmra.mxu0 %v735
      %v2683 = vpop.f32.mrf.mxu0
      %v2684 = vadd.f32 %v2635, %v2683
      %v2685 = vpop.f32.mrf.mxu0
      %v2686 = vadd.f32 %v2637, %v2685
      %2687 = vmatmul.bf16.gmra.mxu0 %v742
      %v2688 = vpop.f32.mrf.mxu0
      %v2689 = vadd.f32 %v2640, %v2688
      %v2690 = vpop.f32.mrf.mxu0
      %v2691 = vadd.f32 %v2642, %v2690
      %2692 = vmatmul.bf16.gmra.mxu0 %v749
      %v2693 = vpop.f32.mrf.mxu0
      %v2694 = vadd.f32 %v2645, %v2693
      %v2695 = vpop.f32.mrf.mxu0
      %v2696 = vadd.f32 %v2647, %v2695
      %2697 = vmatmul.bf16.gmra.mxu0 %v756
      %v2698 = vpop.f32.mrf.mxu0
      %v2699 = vadd.f32 %v2650, %v2698
      %v2700 = vpop.f32.mrf.mxu0
      %v2701 = vadd.f32 %v2652, %v2700
      %2702 = vmatmul.bf16.gmra.mxu0 %v763
      %v2703 = vpop.f32.mrf.mxu0
      %v2704 = vadd.f32 %v2655, %v2703
      %v2705 = vpop.f32.mrf.mxu0
      %v2706 = vadd.f32 %v2657, %v2705
      %2707 = vmatmul.bf16.gmra.mxu0 %v770
      %v2708 = vpop.f32.mrf.mxu0
      %v2709 = vadd.f32 %v2660, %v2708
      %v2710 = vpop.f32.mrf.mxu0
      %v2711 = vadd.f32 %v2662, %v2710
      %2712 = vmatmul.bf16.gmra.mxu0 %v777
      %v2713 = vpop.f32.mrf.mxu0
      %v2714 = vadd.f32 %v2665, %v2713
      %v2715 = vpop.f32.mrf.mxu0
      %v2716 = vadd.f32 %v2667, %v2715
      %2717 = vmatmul.bf16.gmra.mxu0 %v784
      %v2718 = vpop.f32.mrf.mxu0
      %v2719 = vadd.f32 %v2670, %v2718
      %v2720 = vpop.f32.mrf.mxu0
      %v2721 = vadd.f32 %v2672, %v2720
      %2722 = vdwg.mxu0
      %2723 = vmatpush.bf16.msra.mxu0 %v1582
      %2724 = vmatpush.bf16.msra.mxu0 %v1578
      %2725 = vmatpush.bf16.msra.mxu0 %v1574
      %2726 = vmatpush.bf16.msra.mxu0 %v1570
      %2727 = vmatpush.bf16.msra.mxu0 %v1566
      %2728 = vmatpush.bf16.msra.mxu0 %v1562
      %2729 = vmatpush.bf16.msra.mxu0 %v1558
      %2730 = vmatpush.bf16.msra.mxu0 %v1554
      %2731 = vmatmul.bf16.gmra.mxu0 %v736
      %v2732 = vpop.f32.mrf.mxu0
      %v2733 = vadd.f32 %v2684, %v2732
      %v2734 = vpop.f32.mrf.mxu0
      %v2735 = vadd.f32 %v2686, %v2734
      %2736 = vmatmul.bf16.gmra.mxu0 %v743
      %v2737 = vpop.f32.mrf.mxu0
      %v2738 = vadd.f32 %v2689, %v2737
      %v2739 = vpop.f32.mrf.mxu0
      %v2740 = vadd.f32 %v2691, %v2739
      %2741 = vmatmul.bf16.gmra.mxu0 %v750
      %v2742 = vpop.f32.mrf.mxu0
      %v2743 = vadd.f32 %v2694, %v2742
      %v2744 = vpop.f32.mrf.mxu0
      %v2745 = vadd.f32 %v2696, %v2744
      %2746 = vmatmul.bf16.gmra.mxu0 %v757
      %v2747 = vpop.f32.mrf.mxu0
      %v2748 = vadd.f32 %v2699, %v2747
      %v2749 = vpop.f32.mrf.mxu0
      %v2750 = vadd.f32 %v2701, %v2749
      %2751 = vmatmul.bf16.gmra.mxu0 %v764
      %v2752 = vpop.f32.mrf.mxu0
      %v2753 = vadd.f32 %v2704, %v2752
      %v2754 = vpop.f32.mrf.mxu0
      %v2755 = vadd.f32 %v2706, %v2754
      %2756 = vmatmul.bf16.gmra.mxu0 %v771
      %v2757 = vpop.f32.mrf.mxu0
      %v2758 = vadd.f32 %v2709, %v2757
      %v2759 = vpop.f32.mrf.mxu0
      %v2760 = vadd.f32 %v2711, %v2759
      %2761 = vmatmul.bf16.gmra.mxu0 %v778
      %v2762 = vpop.f32.mrf.mxu0
      %v2763 = vadd.f32 %v2714, %v2762
      %v2764 = vpop.f32.mrf.mxu0
      %v2765 = vadd.f32 %v2716, %v2764
      %2766 = vmatmul.bf16.gmra.mxu0 %v785
      %v2767 = vpop.f32.mrf.mxu0
      %v2768 = vadd.f32 %v2719, %v2767
      %v2769 = vpop.f32.mrf.mxu0
      %v2770 = vadd.f32 %v2721, %v2769
      %2771 = vdwg.mxu0
      %2772 = vmatpush.bf16.msra.mxu0 %v1614
      %2773 = vmatpush.bf16.msra.mxu0 %v1610
      %2774 = vmatpush.bf16.msra.mxu0 %v1606
      %2775 = vmatpush.bf16.msra.mxu0 %v1602
      %2776 = vmatpush.bf16.msra.mxu0 %v1598
      %2777 = vmatpush.bf16.msra.mxu0 %v1594
      %2778 = vmatpush.bf16.msra.mxu0 %v1590
      %2779 = vmatpush.bf16.msra.mxu0 %v1586
      %2780 = vmatmul.bf16.gmra.mxu0 %v737
      %v2781 = vpop.f32.mrf.mxu0
      %v2782 = vadd.f32 %v2733, %v2781
      %v2783 = vpop.f32.mrf.mxu0
      %v2784 = vadd.f32 %v2735, %v2783
      %2785 = vmatmul.bf16.gmra.mxu0 %v744
      %v2786 = vpop.f32.mrf.mxu0
      %v2787 = vadd.f32 %v2738, %v2786
      %v2788 = vpop.f32.mrf.mxu0
      %v2789 = vadd.f32 %v2740, %v2788
      %2790 = vmatmul.bf16.gmra.mxu0 %v751
      %v2791 = vpop.f32.mrf.mxu0
      %v2792 = vadd.f32 %v2743, %v2791
      %v2793 = vpop.f32.mrf.mxu0
      %v2794 = vadd.f32 %v2745, %v2793
      %2795 = vmatmul.bf16.gmra.mxu0 %v758
      %v2796 = vpop.f32.mrf.mxu0
      %v2797 = vadd.f32 %v2748, %v2796
      %v2798 = vpop.f32.mrf.mxu0
      %v2799 = vadd.f32 %v2750, %v2798
      %2800 = vmatmul.bf16.gmra.mxu0 %v765
      %v2801 = vpop.f32.mrf.mxu0
      %v2802 = vadd.f32 %v2753, %v2801
      %v2803 = vpop.f32.mrf.mxu0
      %v2804 = vadd.f32 %v2755, %v2803
      %2805 = vmatmul.bf16.gmra.mxu0 %v772
      %v2806 = vpop.f32.mrf.mxu0
      %v2807 = vadd.f32 %v2758, %v2806
      %v2808 = vpop.f32.mrf.mxu0
      %v2809 = vadd.f32 %v2760, %v2808
      %2810 = vmatmul.bf16.gmra.mxu0 %v779
      %v2811 = vpop.f32.mrf.mxu0
      %v2812 = vadd.f32 %v2763, %v2811
      %v2813 = vpop.f32.mrf.mxu0
      %v2814 = vadd.f32 %v2765, %v2813
      %2815 = vmatmul.bf16.gmra.mxu0 %v786
      %v2816 = vpop.f32.mrf.mxu0
      %v2817 = vadd.f32 %v2768, %v2816
      %v2818 = vpop.f32.mrf.mxu0
      %v2819 = vadd.f32 %v2770, %v2818
      %2820 = vdwg.mxu0
      %2821 = vmatpush.bf16.msra.mxu0 0
      %2822 = vmatpush.bf16.msra.mxu0 0
      %2823 = vmatpush.bf16.msra.mxu0 0
      %2824 = vmatpush.bf16.msra.mxu0 0
      %2825 = vmatpush.bf16.msra.mxu0 0
      %2826 = vmatpush.bf16.msra.mxu0 0
      %2827 = vmatpush.bf16.msra.mxu0 0
      %2828 = vmatpush.bf16.msra.mxu0 %v1618
      %2829 = vmatmul.bf16.gmra.mxu0 %v1818
      %v2830 = vpop.f32.mrf.mxu0
      %v2831 = vadd.f32 %v2782, %v2830
      %v2832 = vpop.f32.mrf.mxu0
      %v2833 = vadd.f32 %v2784, %v2832
      %2834 = vmatmul.bf16.gmra.mxu0 %v1821
      %v2835 = vpop.f32.mrf.mxu0
      %v2836 = vadd.f32 %v2787, %v2835
      %v2837 = vpop.f32.mrf.mxu0
      %v2838 = vadd.f32 %v2789, %v2837
      %2839 = vmatmul.bf16.gmra.mxu0 %v1824
      %v2840 = vpop.f32.mrf.mxu0
      %v2841 = vadd.f32 %v2792, %v2840
      %v2842 = vpop.f32.mrf.mxu0
      %v2843 = vadd.f32 %v2794, %v2842
      %2844 = vmatmul.bf16.gmra.mxu0 %v1827
      %v2845 = vpop.f32.mrf.mxu0
      %v2846 = vadd.f32 %v2797, %v2845
      %v2847 = vpop.f32.mrf.mxu0
      %v2848 = vadd.f32 %v2799, %v2847
      %2849 = vmatmul.bf16.gmra.mxu0 %v1830
      %v2850 = vpop.f32.mrf.mxu0
      %v2851 = vadd.f32 %v2802, %v2850
      %v2852 = vpop.f32.mrf.mxu0
      %v2853 = vadd.f32 %v2804, %v2852
      %2854 = vmatmul.bf16.gmra.mxu0 %v1833
      %v2855 = vpop.f32.mrf.mxu0
      %v2856 = vadd.f32 %v2807, %v2855
      %v2857 = vpop.f32.mrf.mxu0
      %v2858 = vadd.f32 %v2809, %v2857
      %2859 = vmatmul.bf16.gmra.mxu0 %v1836
      %v2860 = vpop.f32.mrf.mxu0
      %v2861 = vadd.f32 %v2812, %v2860
      %v2862 = vpop.f32.mrf.mxu0
      %v2863 = vadd.f32 %v2814, %v2862
      %2864 = vmatmul.bf16.gmra.mxu0 %v1839
      %v2865 = vpop.f32.mrf.mxu0
      %v2866 = vadd.f32 %v2817, %v2865
      %v2867 = vpop.f32.mrf.mxu0
      %v2868 = vadd.f32 %v2819, %v2867
      %2869 = vdwg.mxu0
      %2870 = vmatpush.bf16.msra.mxu0 %v1455
      %2871 = vmatpush.bf16.msra.mxu0 %v1451
      %2872 = vmatpush.bf16.msra.mxu0 %v1447
      %2873 = vmatpush.bf16.msra.mxu0 %v1443
      %2874 = vmatpush.bf16.msra.mxu0 %v1439
      %2875 = vmatpush.bf16.msra.mxu0 %v1435
      %2876 = vmatpush.bf16.msra.mxu0 %v1431
      %2877 = vmatpush.bf16.msra.mxu0 %v1427
      %2878 = vmatmul.bf16.gmra.mxu0 %v732
      %v2879 = vpop.f32.mrf.mxu0
      %v2880 = vadd.f32 %v551, %v2879
      %v2881 = vpop.f32.mrf.mxu0
      %v2882 = vadd.f32 %v551, %v2881
      %2883 = vmatmul.bf16.gmra.mxu0 %v739
      %v2884 = vpop.f32.mrf.mxu0
      %v2885 = vadd.f32 %v551, %v2884
      %v2886 = vpop.f32.mrf.mxu0
      %v2887 = vadd.f32 %v551, %v2886
      %2888 = vmatmul.bf16.gmra.mxu0 %v746
      %v2889 = vpop.f32.mrf.mxu0
      %v2890 = vadd.f32 %v551, %v2889
      %v2891 = vpop.f32.mrf.mxu0
      %v2892 = vadd.f32 %v551, %v2891
      %2893 = vmatmul.bf16.gmra.mxu0 %v753
      %v2894 = vpop.f32.mrf.mxu0
      %v2895 = vadd.f32 %v551, %v2894
      %v2896 = vpop.f32.mrf.mxu0
      %v2897 = vadd.f32 %v551, %v2896
      %2898 = vmatmul.bf16.gmra.mxu0 %v760
      %v2899 = vpop.f32.mrf.mxu0
      %v2900 = vadd.f32 %v551, %v2899
      %v2901 = vpop.f32.mrf.mxu0
      %v2902 = vadd.f32 %v551, %v2901
      %2903 = vmatmul.bf16.gmra.mxu0 %v767
      %v2904 = vpop.f32.mrf.mxu0
      %v2905 = vadd.f32 %v551, %v2904
      %v2906 = vpop.f32.mrf.mxu0
      %v2907 = vadd.f32 %v551, %v2906
      %2908 = vmatmul.bf16.gmra.mxu0 %v774
      %v2909 = vpop.f32.mrf.mxu0
      %v2910 = vadd.f32 %v551, %v2909
      %v2911 = vpop.f32.mrf.mxu0
      %v2912 = vadd.f32 %v551, %v2911
      %2913 = vmatmul.bf16.gmra.mxu0 %v781
      %v2914 = vpop.f32.mrf.mxu0
      %v2915 = vadd.f32 %v551, %v2914
      %v2916 = vpop.f32.mrf.mxu0
      %v2917 = vadd.f32 %v551, %v2916
      %2918 = vdwg.mxu0
      %2919 = vmatpush.bf16.msra.mxu0 %v1487
      %2920 = vmatpush.bf16.msra.mxu0 %v1483
      %2921 = vmatpush.bf16.msra.mxu0 %v1479
      %2922 = vmatpush.bf16.msra.mxu0 %v1475
      %2923 = vmatpush.bf16.msra.mxu0 %v1471
      %2924 = vmatpush.bf16.msra.mxu0 %v1467
      %2925 = vmatpush.bf16.msra.mxu0 %v1463
      %2926 = vmatpush.bf16.msra.mxu0 %v1459
      %2927 = vmatmul.bf16.gmra.mxu0 %v733
      %v2928 = vpop.f32.mrf.mxu0
      %v2929 = vadd.f32 %v2880, %v2928
      %v2930 = vpop.f32.mrf.mxu0
      %v2931 = vadd.f32 %v2882, %v2930
      %2932 = vmatmul.bf16.gmra.mxu0 %v740
      %v2933 = vpop.f32.mrf.mxu0
      %v2934 = vadd.f32 %v2885, %v2933
      %v2935 = vpop.f32.mrf.mxu0
      %v2936 = vadd.f32 %v2887, %v2935
      %2937 = vmatmul.bf16.gmra.mxu0 %v747
      %v2938 = vpop.f32.mrf.mxu0
      %v2939 = vadd.f32 %v2890, %v2938
      %v2940 = vpop.f32.mrf.mxu0
      %v2941 = vadd.f32 %v2892, %v2940
      %2942 = vmatmul.bf16.gmra.mxu0 %v754
      %v2943 = vpop.f32.mrf.mxu0
      %v2944 = vadd.f32 %v2895, %v2943
      %v2945 = vpop.f32.mrf.mxu0
      %v2946 = vadd.f32 %v2897, %v2945
      %2947 = vmatmul.bf16.gmra.mxu0 %v761
      %v2948 = vpop.f32.mrf.mxu0
      %v2949 = vadd.f32 %v2900, %v2948
      %v2950 = vpop.f32.mrf.mxu0
      %v2951 = vadd.f32 %v2902, %v2950
      %2952 = vmatmul.bf16.gmra.mxu0 %v768
      %v2953 = vpop.f32.mrf.mxu0
      %v2954 = vadd.f32 %v2905, %v2953
      %v2955 = vpop.f32.mrf.mxu0
      %v2956 = vadd.f32 %v2907, %v2955
      %2957 = vmatmul.bf16.gmra.mxu0 %v775
      %v2958 = vpop.f32.mrf.mxu0
      %v2959 = vadd.f32 %v2910, %v2958
      %v2960 = vpop.f32.mrf.mxu0
      %v2961 = vadd.f32 %v2912, %v2960
      %2962 = vmatmul.bf16.gmra.mxu0 %v782
      %v2963 = vpop.f32.mrf.mxu0
      %v2964 = vadd.f32 %v2915, %v2963
      %v2965 = vpop.f32.mrf.mxu0
      %v2966 = vadd.f32 %v2917, %v2965
      %2967 = vdwg.mxu0
      %2968 = vmatpush.bf16.msra.mxu0 %v1519
      %2969 = vmatpush.bf16.msra.mxu0 %v1515
      %2970 = vmatpush.bf16.msra.mxu0 %v1511
      %2971 = vmatpush.bf16.msra.mxu0 %v1507
      %2972 = vmatpush.bf16.msra.mxu0 %v1503
      %2973 = vmatpush.bf16.msra.mxu0 %v1499
      %2974 = vmatpush.bf16.msra.mxu0 %v1495
      %2975 = vmatpush.bf16.msra.mxu0 %v1491
      %2976 = vmatmul.bf16.gmra.mxu0 %v734
      %v2977 = vpop.f32.mrf.mxu0
      %v2978 = vadd.f32 %v2929, %v2977
      %v2979 = vpop.f32.mrf.mxu0
      %v2980 = vadd.f32 %v2931, %v2979
      %2981 = vmatmul.bf16.gmra.mxu0 %v741
      %v2982 = vpop.f32.mrf.mxu0
      %v2983 = vadd.f32 %v2934, %v2982
      %v2984 = vpop.f32.mrf.mxu0
      %v2985 = vadd.f32 %v2936, %v2984
      %2986 = vmatmul.bf16.gmra.mxu0 %v748
      %v2987 = vpop.f32.mrf.mxu0
      %v2988 = vadd.f32 %v2939, %v2987
      %v2989 = vpop.f32.mrf.mxu0
      %v2990 = vadd.f32 %v2941, %v2989
      %2991 = vmatmul.bf16.gmra.mxu0 %v755
      %v2992 = vpop.f32.mrf.mxu0
      %v2993 = vadd.f32 %v2944, %v2992
      %v2994 = vpop.f32.mrf.mxu0
      %v2995 = vadd.f32 %v2946, %v2994
      %2996 = vmatmul.bf16.gmra.mxu0 %v762
      %v2997 = vpop.f32.mrf.mxu0
      %v2998 = vadd.f32 %v2949, %v2997
      %v2999 = vpop.f32.mrf.mxu0
      %v3000 = vadd.f32 %v2951, %v2999
      %3001 = vmatmul.bf16.gmra.mxu0 %v769
      %v3002 = vpop.f32.mrf.mxu0
      %v3003 = vadd.f32 %v2954, %v3002
      %v3004 = vpop.f32.mrf.mxu0
      %v3005 = vadd.f32 %v2956, %v3004
      %3006 = vmatmul.bf16.gmra.mxu0 %v776
      %v3007 = vpop.f32.mrf.mxu0
      %v3008 = vadd.f32 %v2959, %v3007
      %v3009 = vpop.f32.mrf.mxu0
      %v3010 = vadd.f32 %v2961, %v3009
      %3011 = vmatmul.bf16.gmra.mxu0 %v783
      %v3012 = vpop.f32.mrf.mxu0
      %v3013 = vadd.f32 %v2964, %v3012
      %v3014 = vpop.f32.mrf.mxu0
      %v3015 = vadd.f32 %v2966, %v3014
      %3016 = vdwg.mxu0
      %3017 = vmatpush.bf16.msra.mxu0 %v1551
      %3018 = vmatpush.bf16.msra.mxu0 %v1547
      %3019 = vmatpush.bf16.msra.mxu0 %v1543
      %3020 = vmatpush.bf16.msra.mxu0 %v1539
      %3021 = vmatpush.bf16.msra.mxu0 %v1535
      %3022 = vmatpush.bf16.msra.mxu0 %v1531
      %3023 = vmatpush.bf16.msra.mxu0 %v1527
      %3024 = vmatpush.bf16.msra.mxu0 %v1523
      %3025 = vmatmul.bf16.gmra.mxu0 %v735
      %v3026 = vpop.f32.mrf.mxu0
      %v3027 = vadd.f32 %v2978, %v3026
      %v3028 = vpop.f32.mrf.mxu0
      %v3029 = vadd.f32 %v2980, %v3028
      %3030 = vmatmul.bf16.gmra.mxu0 %v742
      %v3031 = vpop.f32.mrf.mxu0
      %v3032 = vadd.f32 %v2983, %v3031
      %v3033 = vpop.f32.mrf.mxu0
      %v3034 = vadd.f32 %v2985, %v3033
      %3035 = vmatmul.bf16.gmra.mxu0 %v749
      %v3036 = vpop.f32.mrf.mxu0
      %v3037 = vadd.f32 %v2988, %v3036
      %v3038 = vpop.f32.mrf.mxu0
      %v3039 = vadd.f32 %v2990, %v3038
      %3040 = vmatmul.bf16.gmra.mxu0 %v756
      %v3041 = vpop.f32.mrf.mxu0
      %v3042 = vadd.f32 %v2993, %v3041
      %v3043 = vpop.f32.mrf.mxu0
      %v3044 = vadd.f32 %v2995, %v3043
      %3045 = vmatmul.bf16.gmra.mxu0 %v763
      %v3046 = vpop.f32.mrf.mxu0
      %v3047 = vadd.f32 %v2998, %v3046
      %v3048 = vpop.f32.mrf.mxu0
      %v3049 = vadd.f32 %v3000, %v3048
      %3050 = vmatmul.bf16.gmra.mxu0 %v770
      %v3051 = vpop.f32.mrf.mxu0
      %v3052 = vadd.f32 %v3003, %v3051
      %v3053 = vpop.f32.mrf.mxu0
      %v3054 = vadd.f32 %v3005, %v3053
      %3055 = vmatmul.bf16.gmra.mxu0 %v777
      %v3056 = vpop.f32.mrf.mxu0
      %v3057 = vadd.f32 %v3008, %v3056
      %v3058 = vpop.f32.mrf.mxu0
      %v3059 = vadd.f32 %v3010, %v3058
      %3060 = vmatmul.bf16.gmra.mxu0 %v784
      %v3061 = vpop.f32.mrf.mxu0
      %v3062 = vadd.f32 %v3013, %v3061
      %v3063 = vpop.f32.mrf.mxu0
      %v3064 = vadd.f32 %v3015, %v3063
      %3065 = vdwg.mxu0
      %3066 = vmatpush.bf16.msra.mxu0 %v1583
      %3067 = vmatpush.bf16.msra.mxu0 %v1579
      %3068 = vmatpush.bf16.msra.mxu0 %v1575
      %3069 = vmatpush.bf16.msra.mxu0 %v1571
      %3070 = vmatpush.bf16.msra.mxu0 %v1567
      %3071 = vmatpush.bf16.msra.mxu0 %v1563
      %3072 = vmatpush.bf16.msra.mxu0 %v1559
      %3073 = vmatpush.bf16.msra.mxu0 %v1555
      %3074 = vmatmul.bf16.gmra.mxu0 %v736
      %v3075 = vpop.f32.mrf.mxu0
      %v3076 = vadd.f32 %v3027, %v3075
      %v3077 = vpop.f32.mrf.mxu0
      %v3078 = vadd.f32 %v3029, %v3077
      %3079 = vmatmul.bf16.gmra.mxu0 %v743
      %v3080 = vpop.f32.mrf.mxu0
      %v3081 = vadd.f32 %v3032, %v3080
      %v3082 = vpop.f32.mrf.mxu0
      %v3083 = vadd.f32 %v3034, %v3082
      %3084 = vmatmul.bf16.gmra.mxu0 %v750
      %v3085 = vpop.f32.mrf.mxu0
      %v3086 = vadd.f32 %v3037, %v3085
      %v3087 = vpop.f32.mrf.mxu0
      %v3088 = vadd.f32 %v3039, %v3087
      %3089 = vmatmul.bf16.gmra.mxu0 %v757
      %v3090 = vpop.f32.mrf.mxu0
      %v3091 = vadd.f32 %v3042, %v3090
      %v3092 = vpop.f32.mrf.mxu0
      %v3093 = vadd.f32 %v3044, %v3092
      %3094 = vmatmul.bf16.gmra.mxu0 %v764
      %v3095 = vpop.f32.mrf.mxu0
      %v3096 = vadd.f32 %v3047, %v3095
      %v3097 = vpop.f32.mrf.mxu0
      %v3098 = vadd.f32 %v3049, %v3097
      %3099 = vmatmul.bf16.gmra.mxu0 %v771
      %v3100 = vpop.f32.mrf.mxu0
      %v3101 = vadd.f32 %v3052, %v3100
      %v3102 = vpop.f32.mrf.mxu0
      %v3103 = vadd.f32 %v3054, %v3102
      %3104 = vmatmul.bf16.gmra.mxu0 %v778
      %v3105 = vpop.f32.mrf.mxu0
      %v3106 = vadd.f32 %v3057, %v3105
      %v3107 = vpop.f32.mrf.mxu0
      %v3108 = vadd.f32 %v3059, %v3107
      %3109 = vmatmul.bf16.gmra.mxu0 %v785
      %v3110 = vpop.f32.mrf.mxu0
      %v3111 = vadd.f32 %v3062, %v3110
      %v3112 = vpop.f32.mrf.mxu0
      %v3113 = vadd.f32 %v3064, %v3112
      %3114 = vdwg.mxu0
      %3115 = vmatpush.bf16.msra.mxu0 %v1615
      %3116 = vmatpush.bf16.msra.mxu0 %v1611
      %3117 = vmatpush.bf16.msra.mxu0 %v1607
      %3118 = vmatpush.bf16.msra.mxu0 %v1603
      %3119 = vmatpush.bf16.msra.mxu0 %v1599
      %3120 = vmatpush.bf16.msra.mxu0 %v1595
      %3121 = vmatpush.bf16.msra.mxu0 %v1591
      %3122 = vmatpush.bf16.msra.mxu0 %v1587
      %3123 = vmatmul.bf16.gmra.mxu0 %v737
      %v3124 = vpop.f32.mrf.mxu0
      %v3125 = vadd.f32 %v3076, %v3124
      %v3126 = vpop.f32.mrf.mxu0
      %v3127 = vadd.f32 %v3078, %v3126
      %3128 = vmatmul.bf16.gmra.mxu0 %v744
      %v3129 = vpop.f32.mrf.mxu0
      %v3130 = vadd.f32 %v3081, %v3129
      %v3131 = vpop.f32.mrf.mxu0
      %v3132 = vadd.f32 %v3083, %v3131
      %3133 = vmatmul.bf16.gmra.mxu0 %v751
      %v3134 = vpop.f32.mrf.mxu0
      %v3135 = vadd.f32 %v3086, %v3134
      %v3136 = vpop.f32.mrf.mxu0
      %v3137 = vadd.f32 %v3088, %v3136
      %3138 = vmatmul.bf16.gmra.mxu0 %v758
      %v3139 = vpop.f32.mrf.mxu0
      %v3140 = vadd.f32 %v3091, %v3139
      %v3141 = vpop.f32.mrf.mxu0
      %v3142 = vadd.f32 %v3093, %v3141
      %3143 = vmatmul.bf16.gmra.mxu0 %v765
      %v3144 = vpop.f32.mrf.mxu0
      %v3145 = vadd.f32 %v3096, %v3144
      %v3146 = vpop.f32.mrf.mxu0
      %v3147 = vadd.f32 %v3098, %v3146
      %3148 = vmatmul.bf16.gmra.mxu0 %v772
      %v3149 = vpop.f32.mrf.mxu0
      %v3150 = vadd.f32 %v3101, %v3149
      %v3151 = vpop.f32.mrf.mxu0
      %v3152 = vadd.f32 %v3103, %v3151
      %3153 = vmatmul.bf16.gmra.mxu0 %v779
      %v3154 = vpop.f32.mrf.mxu0
      %v3155 = vadd.f32 %v3106, %v3154
      %v3156 = vpop.f32.mrf.mxu0
      %v3157 = vadd.f32 %v3108, %v3156
      %3158 = vmatmul.bf16.gmra.mxu0 %v786
      %v3159 = vpop.f32.mrf.mxu0
      %v3160 = vadd.f32 %v3111, %v3159
      %v3161 = vpop.f32.mrf.mxu0
      %v3162 = vadd.f32 %v3113, %v3161
      %3163 = vdwg.mxu0
      %3164 = vmatpush.bf16.msra.mxu0 0
      %3165 = vmatpush.bf16.msra.mxu0 0
      %3166 = vmatpush.bf16.msra.mxu0 0
      %3167 = vmatpush.bf16.msra.mxu0 0
      %3168 = vmatpush.bf16.msra.mxu0 0
      %3169 = vmatpush.bf16.msra.mxu0 0
      %3170 = vmatpush.bf16.msra.mxu0 0
      %3171 = vmatpush.bf16.msra.mxu0 %v1619
      %3172 = vmatmul.bf16.gmra.mxu0 %v1818
      %v3173 = vpop.f32.mrf.mxu0
      %v3174 = vadd.f32 %v3125, %v3173
      %v3175 = vpop.f32.mrf.mxu0
      %v3176 = vadd.f32 %v3127, %v3175
      %3177 = vmatmul.bf16.gmra.mxu0 %v1821
      %v3178 = vpop.f32.mrf.mxu0
      %v3179 = vadd.f32 %v3130, %v3178
      %v3180 = vpop.f32.mrf.mxu0
      %v3181 = vadd.f32 %v3132, %v3180
      %3182 = vmatmul.bf16.gmra.mxu0 %v1824
      %v3183 = vpop.f32.mrf.mxu0
      %v3184 = vadd.f32 %v3135, %v3183
      %v3185 = vpop.f32.mrf.mxu0
      %v3186 = vadd.f32 %v3137, %v3185
      %3187 = vmatmul.bf16.gmra.mxu0 %v1827
      %v3188 = vpop.f32.mrf.mxu0
      %v3189 = vadd.f32 %v3140, %v3188
      %v3190 = vpop.f32.mrf.mxu0
      %v3191 = vadd.f32 %v3142, %v3190
      %3192 = vmatmul.bf16.gmra.mxu0 %v1830
      %v3193 = vpop.f32.mrf.mxu0
      %v3194 = vadd.f32 %v3145, %v3193
      %v3195 = vpop.f32.mrf.mxu0
      %v3196 = vadd.f32 %v3147, %v3195
      %3197 = vmatmul.bf16.gmra.mxu0 %v1833
      %v3198 = vpop.f32.mrf.mxu0
      %v3199 = vadd.f32 %v3150, %v3198
      %v3200 = vpop.f32.mrf.mxu0
      %v3201 = vadd.f32 %v3152, %v3200
      %3202 = vmatmul.bf16.gmra.mxu0 %v1836
      %v3203 = vpop.f32.mrf.mxu0
      %v3204 = vadd.f32 %v3155, %v3203
      %v3205 = vpop.f32.mrf.mxu0
      %v3206 = vadd.f32 %v3157, %v3205
      %3207 = vmatmul.bf16.gmra.mxu0 %v1839
      %v3208 = vpop.f32.mrf.mxu0
      %v3209 = vadd.f32 %v3160, %v3208
      %v3210 = vpop.f32.mrf.mxu0
      %v3211 = vadd.f32 %v3162, %v3210
      %3212 = vdwg.mxu0
      %v3213 = vmax.f32 %v2145, 0.0
      %v3214 = vmax.f32 %v2488, 0.0
      %v3215 = vmax.f32 %v2831, 0.0
      %v3216 = vmax.f32 %v3174, 0.0
      %v3217 = vmax.f32 %v2147, 0.0
      %v3218 = vmax.f32 %v2490, 0.0
      %v3219 = vmax.f32 %v2833, 0.0
      %v3220 = vmax.f32 %v3176, 0.0
      %v3221 = vmax.f32 %v2150, 0.0
      %v3222 = vmax.f32 %v2493, 0.0
      %v3223 = vmax.f32 %v2836, 0.0
      %v3224 = vmax.f32 %v3179, 0.0
      %v3225 = vmax.f32 %v2152, 0.0
      %v3226 = vmax.f32 %v2495, 0.0
      %v3227 = vmax.f32 %v2838, 0.0
      %v3228 = vmax.f32 %v3181, 0.0
      %v3229 = vmax.f32 %v2155, 0.0
      %v3230 = vmax.f32 %v2498, 0.0
      %v3231 = vmax.f32 %v2841, 0.0
      %v3232 = vmax.f32 %v3184, 0.0
      %v3233 = vmax.f32 %v2157, 0.0
      %v3234 = vmax.f32 %v2500, 0.0
      %v3235 = vmax.f32 %v2843, 0.0
      %v3236 = vmax.f32 %v3186, 0.0
      %v3237 = vmax.f32 %v2160, 0.0
      %v3238 = vmax.f32 %v2503, 0.0
      %v3239 = vmax.f32 %v2846, 0.0
      %v3240 = vmax.f32 %v3189, 0.0
      %v3241 = vmax.f32 %v2162, 0.0
      %v3242 = vmax.f32 %v2505, 0.0
      %v3243 = vmax.f32 %v2848, 0.0
      %v3244 = vmax.f32 %v3191, 0.0
      %v3245 = vmax.f32 %v2165, 0.0
      %v3246 = vmax.f32 %v2508, 0.0
      %v3247 = vmax.f32 %v2851, 0.0
      %v3248 = vmax.f32 %v3194, 0.0
      %v3249 = vmax.f32 %v2167, 0.0
      %v3250 = vmax.f32 %v2510, 0.0
      %v3251 = vmax.f32 %v2853, 0.0
      %v3252 = vmax.f32 %v3196, 0.0
      %v3253 = vmax.f32 %v2170, 0.0
      %v3254 = vmax.f32 %v2513, 0.0
      %v3255 = vmax.f32 %v2856, 0.0
      %v3256 = vmax.f32 %v3199, 0.0
      %v3257 = vmax.f32 %v2172, 0.0
      %v3258 = vmax.f32 %v2515, 0.0
      %v3259 = vmax.f32 %v2858, 0.0
      %v3260 = vmax.f32 %v3201, 0.0
      %v3261 = vmax.f32 %v2175, 0.0
      %v3262 = vmax.f32 %v2518, 0.0
      %v3263 = vmax.f32 %v2861, 0.0
      %v3264 = vmax.f32 %v3204, 0.0
      %v3265 = vmax.f32 %v2177, 0.0
      %v3266 = vmax.f32 %v2520, 0.0
      %v3267 = vmax.f32 %v2863, 0.0
      %v3268 = vmax.f32 %v3206, 0.0
      %v3269 = vmax.f32 %v2180, 0.0
      %v3270 = vmax.f32 %v2523, 0.0
      %v3271 = vmax.f32 %v2866, 0.0
      %v3272 = vmax.f32 %v3209, 0.0
      %v3273 = vmax.f32 %v2182, 0.0
      %v3274 = vmax.f32 %v2525, 0.0
      %v3275 = vmax.f32 %v2868, 0.0
      %v3276 = vmax.f32 %v3211, 0.0
      %v3277 = vpack.c.bf16 %v3217, %v3213
      %v3278 = vpack.c.bf16 %v3218, %v3214
      %v3279 = vpack.c.bf16 %v3219, %v3215
      %v3280 = vpack.c.bf16 %v3220, %v3216
      %v3281 = vpack.c.bf16 %v3225, %v3221
      %v3282 = vpack.c.bf16 %v3226, %v3222
      %v3283 = vpack.c.bf16 %v3227, %v3223
      %v3284 = vpack.c.bf16 %v3228, %v3224
      %v3285 = vpack.c.bf16 %v3233, %v3229
      %v3286 = vpack.c.bf16 %v3234, %v3230
      %v3287 = vpack.c.bf16 %v3235, %v3231
      %v3288 = vpack.c.bf16 %v3236, %v3232
      %v3289 = vpack.c.bf16 %v3241, %v3237
      %v3290 = vpack.c.bf16 %v3242, %v3238
      %v3291 = vpack.c.bf16 %v3243, %v3239
      %v3292 = vpack.c.bf16 %v3244, %v3240
      %v3293 = vpack.c.bf16 %v3249, %v3245
      %v3294 = vpack.c.bf16 %v3250, %v3246
      %v3295 = vpack.c.bf16 %v3251, %v3247
      %v3296 = vpack.c.bf16 %v3252, %v3248
      %v3297 = vpack.c.bf16 %v3257, %v3253
      %v3298 = vpack.c.bf16 %v3258, %v3254
      %v3299 = vpack.c.bf16 %v3259, %v3255
      %v3300 = vpack.c.bf16 %v3260, %v3256
      %v3301 = vpack.c.bf16 %v3265, %v3261
      %v3302 = vpack.c.bf16 %v3266, %v3262
      %v3303 = vpack.c.bf16 %v3267, %v3263
      %v3304 = vpack.c.bf16 %v3268, %v3264
      %v3305 = vpack.c.bf16 %v3273, %v3269
      %v3306 = vpack.c.bf16 %v3274, %v3270
      %v3307 = vpack.c.bf16 %v3275, %v3271
      %v3308 = vpack.c.bf16 %v3276, %v3272
      %v3309 = vld [vmem:[%s3] sm:$0xff]
      %v3310 = vld [vmem:[%s3 + $0x8] sm:$0xff]
      %v3311 = vld [vmem:[%s3 + $0x10] sm:$0xff]
      %v3312 = vld [vmem:[%s3 + $0x18] sm:$0xff]
      %v3313 = vld [vmem:[%s3 + $0x20] sm:$0xff]
      %v3314 = vld [vmem:[%s3 + $0x28] sm:$0xff]
      %v3315 = vld [vmem:[%s3 + $0x30] sm:$0xff]
      %v3316 = vld [vmem:[%s3 + $0x38] sm:$0xff]
      %v3317 = vld [vmem:[%s3 + $0x40] sm:$0xff]
      %v3318 = vld [vmem:[%s3 + $0x48] sm:$0xff]
      %v3319 = vld [vmem:[%s3 + $0x50] sm:$0xff]
      %v3320 = vld [vmem:[%s3 + $0x58] sm:$0xff]
      %v3321 = vld [vmem:[%s3 + $0x60] sm:$0xff]
      %v3322 = vld [vmem:[%s3 + $0x68] sm:$0xff]
      %v3323 = vld [vmem:[%s3 + $0x70] sm:$0xff]
      %v3324 = vld [vmem:[%s3 + $0x78] sm:$0xff]
      %v3325 = vld [vmem:[%s3 + $0x80] sm:$0xff]
      %v3326 = vld [vmem:[%s3 + $0x88] sm:$0xff]
      %v3327 = vld [vmem:[%s3 + $0x90] sm:$0xff]
      %v3328 = vld [vmem:[%s3 + $0x98] sm:$0xff]
      %v3329 = vld [vmem:[%s3 + $0xa0] sm:$0xff]
      %v3330 = vld [vmem:[%s3 + $0xa8] sm:$0xff]
      %v3331 = vld [vmem:[%s3 + $0xb0] sm:$0xff]
      %v3332 = vld [vmem:[%s3 + $0xb8] sm:$0xff]
      %v3333 = vld [vmem:[%s3 + $0xc0] sm:$0xff]
      %v3334 = vld [vmem:[%s3 + $0xc8] sm:$0xff]
      %v3335 = vld [vmem:[%s3 + $0xd0] sm:$0xff]
      %v3336 = vld [vmem:[%s3 + $0xd8] sm:$0xff]
      %v3337 = vld [vmem:[%s3 + $0xe0] sm:$0xff]
      %v3338 = vld [vmem:[%s3 + $0xe8] sm:$0xff]
      %v3339 = vld [vmem:[%s3 + $0xf0] sm:$0xff]
      %v3340 = vld [vmem:[%s3 + $0xf8] sm:$0xff]
      %v3341 = vld [vmem:[%s3 + $0x100] sm:$0xff]
      %v3342 = vld [vmem:[%s3 + $0x108] sm:$0xff]
      %v3343 = vld [vmem:[%s3 + $0x110] sm:$0xff]
      %v3344 = vld [vmem:[%s3 + $0x118] sm:$0xff]
      %v3345 = vld [vmem:[%s3 + $0x120] sm:$0xff]
      %v3346 = vld [vmem:[%s3 + $0x128] sm:$0xff]
      %v3347 = vld [vmem:[%s3 + $0x130] sm:$0xff]
      %v3348 = vld [vmem:[%s3 + $0x138] sm:$0xff]
      %v3349 = vld [vmem:[%s3 + $0x140] sm:$0xff]
      %v3350 = vld [vmem:[%s3 + $0x148] sm:$0xff]
      %v3351 = vld [vmem:[%s3 + $0x150] sm:$0xff]
      %v3352 = vld [vmem:[%s3 + $0x158] sm:$0xff]
      %v3353 = vld [vmem:[%s3 + $0x160] sm:$0xff]
      %v3354 = vld [vmem:[%s3 + $0x168] sm:$0xff]
      %v3355 = vld [vmem:[%s3 + $0x170] sm:$0xff]
      %v3356 = vld [vmem:[%s3 + $0x178] sm:$0xff]
      %v3357 = vld [vmem:[%s3 + $0x180] sm:$0xff]
      %v3358 = vld [vmem:[%s3 + $0x188] sm:$0xff]
      %v3359 = vld [vmem:[%s3 + $0x190] sm:$0xff]
      %v3360 = vld [vmem:[%s3 + $0x198] sm:$0xff]
      %v3361 = vld [vmem:[%s3 + $0x1a0] sm:$0xff]
      %v3362 = vld [vmem:[%s3 + $0x1a8] sm:$0xff]
      %v3363 = vld [vmem:[%s3 + $0x1b0] sm:$0xff]
      %v3364 = vld [vmem:[%s3 + $0x1b8] sm:$0xff]
      %v3365 = vld [vmem:[%s3 + $0x1c0] sm:$0xff]
      %v3366 = vld [vmem:[%s3 + $0x1c8] sm:$0xff]
      %v3367 = vld [vmem:[%s3 + $0x1d0] sm:$0xff]
      %v3368 = vld [vmem:[%s3 + $0x1d8] sm:$0xff]
      %v3369 = vld [vmem:[%s3 + $0x1e0] sm:$0xff]
      %v3370 = vld [vmem:[%s3 + $0x1e8] sm:$0xff]
      %v3371 = vld [vmem:[%s3 + $0x1f0] sm:$0xff]
      %v3372 = vld [vmem:[%s3 + $0x1f8] sm:$0xff]
      %v3373 = vld [vmem:[%s3 + $0x200] sm:$0xff]
      %v3374 = vld [vmem:[%s3 + $0x208] sm:$0xff]
      %v3375 = vld [vmem:[%s3 + $0x210] sm:$0xff]
      %v3376 = vld [vmem:[%s3 + $0x218] sm:$0xff]
      %v3377 = vld [vmem:[%s3 + $0x220] sm:$0xff]
      %v3378 = vld [vmem:[%s3 + $0x228] sm:$0xff]
      %v3379 = vld [vmem:[%s3 + $0x230] sm:$0xff]
      %v3380 = vld [vmem:[%s3 + $0x238] sm:$0xff]
      %v3381 = vld [vmem:[%s3 + $0x240] sm:$0xff]
      %v3382 = vld [vmem:[%s3 + $0x248] sm:$0xff]
      %v3383 = vld [vmem:[%s3 + $0x250] sm:$0xff]
      %v3384 = vld [vmem:[%s3 + $0x258] sm:$0xff]
      %v3385 = vld [vmem:[%s3 + $0x260] sm:$0xff]
      %v3386 = vld [vmem:[%s3 + $0x268] sm:$0xff]
      %v3387 = vld [vmem:[%s3 + $0x270] sm:$0xff]
      %v3388 = vld [vmem:[%s3 + $0x278] sm:$0xff]
      %v3389 = vld [vmem:[%s3 + $0x280] sm:$0xff]
      %v3390 = vld [vmem:[%s3 + $0x288] sm:$0xff]
      %v3391 = vld [vmem:[%s3 + $0x290] sm:$0xff]
      %v3392 = vld [vmem:[%s3 + $0x298] sm:$0xff]
      %v3393 = vld [vmem:[%s3 + $0x2a0] sm:$0xff]
      %v3394 = vld [vmem:[%s3 + $0x2a8] sm:$0xff]
      %v3395 = vld [vmem:[%s3 + $0x2b0] sm:$0xff]
      %v3396 = vld [vmem:[%s3 + $0x2b8] sm:$0xff]
      %v3397 = vld [vmem:[%s3 + $0x2c0] sm:$0xff]
      %v3398 = vld [vmem:[%s3 + $0x2c8] sm:$0xff]
      %v3399 = vld [vmem:[%s3 + $0x2d0] sm:$0xff]
      %v3400 = vld [vmem:[%s3 + $0x2d8] sm:$0xff]
      %v3401 = vld [vmem:[%s3 + $0x2e0] sm:$0xff]
      %v3402 = vld [vmem:[%s3 + $0x2e8] sm:$0xff]
      %v3403 = vld [vmem:[%s3 + $0x2f0] sm:$0xff]
      %v3404 = vld [vmem:[%s3 + $0x2f8] sm:$0xff]
      %v3405 = vld [vmem:[%s3 + $0x300] sm:$0xff]
      %v3406 = vld [vmem:[%s3 + $0x308] sm:$0xff]
      %v3407 = vld [vmem:[%s3 + $0x310] sm:$0xff]
      %v3408 = vld [vmem:[%s3 + $0x318] sm:$0xff]
      %v3409 = vld [vmem:[%s3 + $0x320] sm:$0xff]
      %v3410 = vld [vmem:[%s3 + $0x328] sm:$0xff]
      %v3411 = vld [vmem:[%s3 + $0x330] sm:$0xff]
      %v3412 = vld [vmem:[%s3 + $0x338] sm:$0xff]
      %v3413 = vld [vmem:[%s3 + $0x340] sm:$0xff]
      %v3414 = vld [vmem:[%s3 + $0x348] sm:$0xff]
      %v3415 = vld [vmem:[%s3 + $0x350] sm:$0xff]
      %v3416 = vld [vmem:[%s3 + $0x358] sm:$0xff]
      %v3417 = vld [vmem:[%s3 + $0x360] sm:$0xff]
      %v3418 = vld [vmem:[%s3 + $0x368] sm:$0xff]
      %v3419 = vld [vmem:[%s3 + $0x370] sm:$0xff]
      %v3420 = vld [vmem:[%s3 + $0x378] sm:$0xff]
      %v3421 = vld [vmem:[%s3 + $0x380] sm:$0xff]
      %v3422 = vld [vmem:[%s3 + $0x388] sm:$0xff]
      %v3423 = vld [vmem:[%s3 + $0x390] sm:$0xff]
      %v3424 = vld [vmem:[%s3 + $0x398] sm:$0xff]
      %v3425 = vld [vmem:[%s3 + $0x3a0] sm:$0xff]
      %v3426 = vld [vmem:[%s3 + $0x3a8] sm:$0xff]
      %v3427 = vld [vmem:[%s3 + $0x3b0] sm:$0xff]
      %v3428 = vld [vmem:[%s3 + $0x3b8] sm:$0xff]
      %v3429 = vld [vmem:[%s3 + $0x3c0] sm:$0xff]
      %v3430 = vld [vmem:[%s3 + $0x3c8] sm:$0xff]
      %v3431 = vld [vmem:[%s3 + $0x3d0] sm:$0xff]
      %v3432 = vld [vmem:[%s3 + $0x3d8] sm:$0xff]
      %v3433 = vld [vmem:[%s3 + $0x3e0] sm:$0xff]
      %v3434 = vld [vmem:[%s3 + $0x3e8] sm:$0xff]
      %v3435 = vld [vmem:[%s3 + $0x3f0] sm:$0xff]
      %v3436 = vld [vmem:[%s3 + $0x3f8] sm:$0xff]
      %v3437 = vld [vmem:[%s4] sm:$0xf]
      %v3439 = vperm.slane %v3437, 0
      %v3440 = vperm.slane %v3437, 1
      %v3441 = vperm.slane %v3437, 2
      %v3442 = vperm.slane %v3437, 3
      %v3575 = vunpack.c.l.b16 %v3309
      %v3576 = vunpack.c.h.b16 %v3309
      %v3577 = vunpack.c.l.b16 %v3310
      %v3578 = vunpack.c.h.b16 %v3310
      %v3579 = vunpack.c.l.b16 %v3311
      %v3580 = vunpack.c.h.b16 %v3311
      %v3581 = vunpack.c.l.b16 %v3312
      %v3582 = vunpack.c.h.b16 %v3312
      %v3583 = vunpack.c.l.b16 %v3313
      %v3584 = vunpack.c.h.b16 %v3313
      %v3585 = vunpack.c.l.b16 %v3314
      %v3586 = vunpack.c.h.b16 %v3314
      %v3587 = vunpack.c.l.b16 %v3315
      %v3588 = vunpack.c.h.b16 %v3315
      %v3589 = vunpack.c.l.b16 %v3316
      %v3590 = vunpack.c.h.b16 %v3316
      %v3591 = vunpack.c.l.b16 %v3317
      %v3592 = vunpack.c.h.b16 %v3317
      %v3593 = vunpack.c.l.b16 %v3318
      %v3594 = vunpack.c.h.b16 %v3318
      %v3595 = vunpack.c.l.b16 %v3319
      %v3596 = vunpack.c.h.b16 %v3319
      %v3597 = vunpack.c.l.b16 %v3320
      %v3598 = vunpack.c.h.b16 %v3320
      %v3599 = vunpack.c.l.b16 %v3321
      %v3600 = vunpack.c.h.b16 %v3321
      %v3601 = vunpack.c.l.b16 %v3322
      %v3602 = vunpack.c.h.b16 %v3322
      %v3603 = vunpack.c.l.b16 %v3323
      %v3604 = vunpack.c.h.b16 %v3323
      %v3605 = vunpack.c.l.b16 %v3324
      %v3606 = vunpack.c.h.b16 %v3324
      %v3607 = vunpack.c.l.b16 %v3325
      %v3608 = vunpack.c.h.b16 %v3325
      %v3609 = vunpack.c.l.b16 %v3326
      %v3610 = vunpack.c.h.b16 %v3326
      %v3611 = vunpack.c.l.b16 %v3327
      %v3612 = vunpack.c.h.b16 %v3327
      %v3613 = vunpack.c.l.b16 %v3328
      %v3614 = vunpack.c.h.b16 %v3328
      %v3615 = vunpack.c.l.b16 %v3329
      %v3616 = vunpack.c.h.b16 %v3329
      %v3617 = vunpack.c.l.b16 %v3330
      %v3618 = vunpack.c.h.b16 %v3330
      %v3619 = vunpack.c.l.b16 %v3331
      %v3620 = vunpack.c.h.b16 %v3331
      %v3621 = vunpack.c.l.b16 %v3332
      %v3622 = vunpack.c.h.b16 %v3332
      %v3623 = vunpack.c.l.b16 %v3333
      %v3624 = vunpack.c.h.b16 %v3333
      %v3625 = vunpack.c.l.b16 %v3334
      %v3626 = vunpack.c.h.b16 %v3334
      %v3627 = vunpack.c.l.b16 %v3335
      %v3628 = vunpack.c.h.b16 %v3335
      %v3629 = vunpack.c.l.b16 %v3336
      %v3630 = vunpack.c.h.b16 %v3336
      %v3631 = vunpack.c.l.b16 %v3337
      %v3632 = vunpack.c.h.b16 %v3337
      %v3633 = vunpack.c.l.b16 %v3338
      %v3634 = vunpack.c.h.b16 %v3338
      %v3635 = vunpack.c.l.b16 %v3339
      %v3636 = vunpack.c.h.b16 %v3339
      %v3637 = vunpack.c.l.b16 %v3340
      %v3638 = vunpack.c.h.b16 %v3340
      %v3639 = vunpack.c.l.b16 %v3341
      %v3640 = vunpack.c.h.b16 %v3341
      %v3641 = vunpack.c.l.b16 %v3342
      %v3642 = vunpack.c.h.b16 %v3342
      %v3643 = vunpack.c.l.b16 %v3343
      %v3644 = vunpack.c.h.b16 %v3343
      %v3645 = vunpack.c.l.b16 %v3344
      %v3646 = vunpack.c.h.b16 %v3344
      %v3647 = vunpack.c.l.b16 %v3345
      %v3648 = vunpack.c.h.b16 %v3345
      %v3649 = vunpack.c.l.b16 %v3346
      %v3650 = vunpack.c.h.b16 %v3346
      %v3651 = vunpack.c.l.b16 %v3347
      %v3652 = vunpack.c.h.b16 %v3347
      %v3653 = vunpack.c.l.b16 %v3348
      %v3654 = vunpack.c.h.b16 %v3348
      %v3655 = vunpack.c.l.b16 %v3349
      %v3656 = vunpack.c.h.b16 %v3349
      %v3657 = vunpack.c.l.b16 %v3350
      %v3658 = vunpack.c.h.b16 %v3350
      %v3659 = vunpack.c.l.b16 %v3351
      %v3660 = vunpack.c.h.b16 %v3351
      %v3661 = vunpack.c.l.b16 %v3352
      %v3662 = vunpack.c.h.b16 %v3352
      %v3663 = vunpack.c.l.b16 %v3353
      %v3664 = vunpack.c.h.b16 %v3353
      %v3665 = vunpack.c.l.b16 %v3354
      %v3666 = vunpack.c.h.b16 %v3354
      %v3667 = vunpack.c.l.b16 %v3355
      %v3668 = vunpack.c.h.b16 %v3355
      %v3669 = vunpack.c.l.b16 %v3356
      %v3670 = vunpack.c.h.b16 %v3356
      %v3671 = vunpack.c.l.b16 %v3357
      %v3672 = vunpack.c.h.b16 %v3357
      %v3673 = vunpack.c.l.b16 %v3358
      %v3674 = vunpack.c.h.b16 %v3358
      %v3675 = vunpack.c.l.b16 %v3359
      %v3676 = vunpack.c.h.b16 %v3359
      %v3677 = vunpack.c.l.b16 %v3360
      %v3678 = vunpack.c.h.b16 %v3360
      %v3679 = vunpack.c.l.b16 %v3361
      %v3680 = vunpack.c.h.b16 %v3361
      %v3681 = vunpack.c.l.b16 %v3362
      %v3682 = vunpack.c.h.b16 %v3362
      %v3683 = vunpack.c.l.b16 %v3363
      %v3684 = vunpack.c.h.b16 %v3363
      %v3685 = vunpack.c.l.b16 %v3364
      %v3686 = vunpack.c.h.b16 %v3364
      %v3687 = vunpack.c.l.b16 %v3365
      %v3688 = vunpack.c.h.b16 %v3365
      %v3689 = vunpack.c.l.b16 %v3366
      %v3690 = vunpack.c.h.b16 %v3366
      %v3691 = vunpack.c.l.b16 %v3367
      %v3692 = vunpack.c.h.b16 %v3367
      %v3693 = vunpack.c.l.b16 %v3368
      %v3694 = vunpack.c.h.b16 %v3368
      %v3695 = vunpack.c.l.b16 %v3369
      %v3696 = vunpack.c.h.b16 %v3369
      %v3697 = vunpack.c.l.b16 %v3370
      %v3698 = vunpack.c.h.b16 %v3370
      %v3699 = vunpack.c.l.b16 %v3371
      %v3700 = vunpack.c.h.b16 %v3371
      %v3701 = vunpack.c.l.b16 %v3372
      %v3702 = vunpack.c.h.b16 %v3372
      %v3703 = vunpack.c.l.b16 %v3373
      %v3704 = vunpack.c.h.b16 %v3373
      %v3705 = vunpack.c.l.b16 %v3374
      %v3706 = vunpack.c.h.b16 %v3374
      %v3707 = vunpack.c.l.b16 %v3375
      %v3708 = vunpack.c.h.b16 %v3375
      %v3709 = vunpack.c.l.b16 %v3376
      %v3710 = vunpack.c.h.b16 %v3376
      %v3711 = vunpack.c.l.b16 %v3377
      %v3712 = vunpack.c.h.b16 %v3377
      %v3713 = vunpack.c.l.b16 %v3378
      %v3714 = vunpack.c.h.b16 %v3378
      %v3715 = vunpack.c.l.b16 %v3379
      %v3716 = vunpack.c.h.b16 %v3379
      %v3717 = vunpack.c.l.b16 %v3380
      %v3718 = vunpack.c.h.b16 %v3380
      %v3719 = vunpack.c.l.b16 %v3381
      %v3720 = vunpack.c.h.b16 %v3381
      %v3721 = vunpack.c.l.b16 %v3382
      %v3722 = vunpack.c.h.b16 %v3382
      %v3723 = vunpack.c.l.b16 %v3383
      %v3724 = vunpack.c.h.b16 %v3383
      %v3725 = vunpack.c.l.b16 %v3384
      %v3726 = vunpack.c.h.b16 %v3384
      %v3727 = vunpack.c.l.b16 %v3385
      %v3728 = vunpack.c.h.b16 %v3385
      %v3729 = vunpack.c.l.b16 %v3386
      %v3730 = vunpack.c.h.b16 %v3386
      %v3731 = vunpack.c.l.b16 %v3387
      %v3732 = vunpack.c.h.b16 %v3387
      %v3733 = vunpack.c.l.b16 %v3388
      %v3734 = vunpack.c.h.b16 %v3388
      %v3735 = vunpack.c.l.b16 %v3389
      %v3736 = vunpack.c.h.b16 %v3389
      %v3737 = vunpack.c.l.b16 %v3390
      %v3738 = vunpack.c.h.b16 %v3390
      %v3739 = vunpack.c.l.b16 %v3391
      %v3740 = vunpack.c.h.b16 %v3391
      %v3741 = vunpack.c.l.b16 %v3392
      %v3742 = vunpack.c.h.b16 %v3392
      %v3743 = vunpack.c.l.b16 %v3393
      %v3744 = vunpack.c.h.b16 %v3393
      %v3745 = vunpack.c.l.b16 %v3394
      %v3746 = vunpack.c.h.b16 %v3394
      %v3747 = vunpack.c.l.b16 %v3395
      %v3748 = vunpack.c.h.b16 %v3395
      %v3749 = vunpack.c.l.b16 %v3396
      %v3750 = vunpack.c.h.b16 %v3396
      %v3751 = vunpack.c.l.b16 %v3397
      %v3752 = vunpack.c.h.b16 %v3397
      %v3753 = vunpack.c.l.b16 %v3398
      %v3754 = vunpack.c.h.b16 %v3398
      %v3755 = vunpack.c.l.b16 %v3399
      %v3756 = vunpack.c.h.b16 %v3399
      %v3757 = vunpack.c.l.b16 %v3400
      %v3758 = vunpack.c.h.b16 %v3400
      %v3759 = vunpack.c.l.b16 %v3401
      %v3760 = vunpack.c.h.b16 %v3401
      %v3761 = vunpack.c.l.b16 %v3402
      %v3762 = vunpack.c.h.b16 %v3402
      %v3763 = vunpack.c.l.b16 %v3403
      %v3764 = vunpack.c.h.b16 %v3403
      %v3765 = vunpack.c.l.b16 %v3404
      %v3766 = vunpack.c.h.b16 %v3404
      %v3767 = vunpack.c.l.b16 %v3405
      %v3768 = vunpack.c.h.b16 %v3405
      %v3769 = vunpack.c.l.b16 %v3406
      %v3770 = vunpack.c.h.b16 %v3406
      %v3771 = vunpack.c.l.b16 %v3407
      %v3772 = vunpack.c.h.b16 %v3407
      %v3773 = vunpack.c.l.b16 %v3408
      %v3774 = vunpack.c.h.b16 %v3408
      %v3775 = vunpack.c.l.b16 %v3409
      %v3776 = vunpack.c.h.b16 %v3409
      %v3777 = vunpack.c.l.b16 %v3410
      %v3778 = vunpack.c.h.b16 %v3410
      %v3779 = vunpack.c.l.b16 %v3411
      %v3780 = vunpack.c.h.b16 %v3411
      %v3781 = vunpack.c.l.b16 %v3412
      %v3782 = vunpack.c.h.b16 %v3412
      %v3783 = vunpack.c.l.b16 %v3413
      %v3784 = vunpack.c.h.b16 %v3413
      %v3785 = vunpack.c.l.b16 %v3414
      %v3786 = vunpack.c.h.b16 %v3414
      %v3787 = vunpack.c.l.b16 %v3415
      %v3788 = vunpack.c.h.b16 %v3415
      %v3789 = vunpack.c.l.b16 %v3416
      %v3790 = vunpack.c.h.b16 %v3416
      %v3791 = vunpack.c.l.b16 %v3417
      %v3792 = vunpack.c.h.b16 %v3417
      %v3793 = vunpack.c.l.b16 %v3418
      %v3794 = vunpack.c.h.b16 %v3418
      %v3795 = vunpack.c.l.b16 %v3419
      %v3796 = vunpack.c.h.b16 %v3419
      %v3797 = vunpack.c.l.b16 %v3420
      %v3798 = vunpack.c.h.b16 %v3420
      %v3799 = vunpack.c.l.b16 %v3421
      %v3800 = vunpack.c.h.b16 %v3421
      %v3801 = vunpack.c.l.b16 %v3422
      %v3802 = vunpack.c.h.b16 %v3422
      %v3803 = vunpack.c.l.b16 %v3423
      %v3804 = vunpack.c.h.b16 %v3423
      %v3805 = vunpack.c.l.b16 %v3424
      %v3806 = vunpack.c.h.b16 %v3424
      %v3807 = vunpack.c.l.b16 %v3425
      %v3808 = vunpack.c.h.b16 %v3425
      %v3809 = vunpack.c.l.b16 %v3426
      %v3810 = vunpack.c.h.b16 %v3426
      %v3811 = vunpack.c.l.b16 %v3427
      %v3812 = vunpack.c.h.b16 %v3427
      %v3813 = vunpack.c.l.b16 %v3428
      %v3814 = vunpack.c.h.b16 %v3428
      %v3815 = vunpack.c.l.b16 %v3429
      %v3816 = vunpack.c.h.b16 %v3429
      %v3817 = vunpack.c.l.b16 %v3430
      %v3818 = vunpack.c.h.b16 %v3430
      %v3819 = vunpack.c.l.b16 %v3431
      %v3820 = vunpack.c.h.b16 %v3431
      %v3821 = vunpack.c.l.b16 %v3432
      %v3822 = vunpack.c.h.b16 %v3432
      %v3823 = vunpack.c.l.b16 %v3433
      %v3824 = vunpack.c.h.b16 %v3433
      %v3825 = vunpack.c.l.b16 %v3434
      %v3826 = vunpack.c.h.b16 %v3434
      %v3827 = vunpack.c.l.b16 %v3435
      %v3828 = vunpack.c.h.b16 %v3435
      %v3829 = vunpack.c.l.b16 %v3436
      %v3830 = vunpack.c.h.b16 %v3436
      %v3831 = vpack.c.b16 %v3579, %v3575
      %v3832 = vpack.c.b16 %v3580, %v3576
      %v3833 = vpack.c.b16 %v3581, %v3577
      %v3834 = vpack.c.b16 %v3582, %v3578
      %v3835 = vpack.c.b16 %v3587, %v3583
      %v3836 = vpack.c.b16 %v3588, %v3584
      %v3837 = vpack.c.b16 %v3589, %v3585
      %v3838 = vpack.c.b16 %v3590, %v3586
      %v3839 = vpack.c.b16 %v3595, %v3591
      %v3840 = vpack.c.b16 %v3596, %v3592
      %v3841 = vpack.c.b16 %v3597, %v3593
      %v3842 = vpack.c.b16 %v3598, %v3594
      %v3843 = vpack.c.b16 %v3603, %v3599
      %v3844 = vpack.c.b16 %v3604, %v3600
      %v3845 = vpack.c.b16 %v3605, %v3601
      %v3846 = vpack.c.b16 %v3606, %v3602
      %v3847 = vpack.c.b16 %v3611, %v3607
      %v3848 = vpack.c.b16 %v3612, %v3608
      %v3849 = vpack.c.b16 %v3613, %v3609
      %v3850 = vpack.c.b16 %v3614, %v3610
      %v3851 = vpack.c.b16 %v3619, %v3615
      %v3852 = vpack.c.b16 %v3620, %v3616
      %v3853 = vpack.c.b16 %v3621, %v3617
      %v3854 = vpack.c.b16 %v3622, %v3618
      %v3855 = vpack.c.b16 %v3627, %v3623
      %v3856 = vpack.c.b16 %v3628, %v3624
      %v3857 = vpack.c.b16 %v3629, %v3625
      %v3858 = vpack.c.b16 %v3630, %v3626
      %v3859 = vpack.c.b16 %v3635, %v3631
      %v3860 = vpack.c.b16 %v3636, %v3632
      %v3861 = vpack.c.b16 %v3637, %v3633
      %v3862 = vpack.c.b16 %v3638, %v3634
      %v3863 = vpack.c.b16 %v3643, %v3639
      %v3864 = vpack.c.b16 %v3644, %v3640
      %v3865 = vpack.c.b16 %v3645, %v3641
      %v3866 = vpack.c.b16 %v3646, %v3642
      %v3867 = vpack.c.b16 %v3651, %v3647
      %v3868 = vpack.c.b16 %v3652, %v3648
      %v3869 = vpack.c.b16 %v3653, %v3649
      %v3870 = vpack.c.b16 %v3654, %v3650
      %v3871 = vpack.c.b16 %v3659, %v3655
      %v3872 = vpack.c.b16 %v3660, %v3656
      %v3873 = vpack.c.b16 %v3661, %v3657
      %v3874 = vpack.c.b16 %v3662, %v3658
      %v3875 = vpack.c.b16 %v3667, %v3663
      %v3876 = vpack.c.b16 %v3668, %v3664
      %v3877 = vpack.c.b16 %v3669, %v3665
      %v3878 = vpack.c.b16 %v3670, %v3666
      %v3879 = vpack.c.b16 %v3675, %v3671
      %v3880 = vpack.c.b16 %v3676, %v3672
      %v3881 = vpack.c.b16 %v3677, %v3673
      %v3882 = vpack.c.b16 %v3678, %v3674
      %v3883 = vpack.c.b16 %v3683, %v3679
      %v3884 = vpack.c.b16 %v3684, %v3680
      %v3885 = vpack.c.b16 %v3685, %v3681
      %v3886 = vpack.c.b16 %v3686, %v3682
      %v3887 = vpack.c.b16 %v3691, %v3687
      %v3888 = vpack.c.b16 %v3692, %v3688
      %v3889 = vpack.c.b16 %v3693, %v3689
      %v3890 = vpack.c.b16 %v3694, %v3690
      %v3891 = vpack.c.b16 %v3699, %v3695
      %v3892 = vpack.c.b16 %v3700, %v3696
      %v3893 = vpack.c.b16 %v3701, %v3697
      %v3894 = vpack.c.b16 %v3702, %v3698
      %v3895 = vpack.c.b16 %v3707, %v3703
      %v3896 = vpack.c.b16 %v3708, %v3704
      %v3897 = vpack.c.b16 %v3709, %v3705
      %v3898 = vpack.c.b16 %v3710, %v3706
      %v3899 = vpack.c.b16 %v3715, %v3711
      %v3900 = vpack.c.b16 %v3716, %v3712
      %v3901 = vpack.c.b16 %v3717, %v3713
      %v3902 = vpack.c.b16 %v3718, %v3714
      %v3903 = vpack.c.b16 %v3723, %v3719
      %v3904 = vpack.c.b16 %v3724, %v3720
      %v3905 = vpack.c.b16 %v3725, %v3721
      %v3906 = vpack.c.b16 %v3726, %v3722
      %v3907 = vpack.c.b16 %v3731, %v3727
      %v3908 = vpack.c.b16 %v3732, %v3728
      %v3909 = vpack.c.b16 %v3733, %v3729
      %v3910 = vpack.c.b16 %v3734, %v3730
      %v3911 = vpack.c.b16 %v3739, %v3735
      %v3912 = vpack.c.b16 %v3740, %v3736
      %v3913 = vpack.c.b16 %v3741, %v3737
      %v3914 = vpack.c.b16 %v3742, %v3738
      %v3915 = vpack.c.b16 %v3747, %v3743
      %v3916 = vpack.c.b16 %v3748, %v3744
      %v3917 = vpack.c.b16 %v3749, %v3745
      %v3918 = vpack.c.b16 %v3750, %v3746
      %v3919 = vpack.c.b16 %v3755, %v3751
      %v3920 = vpack.c.b16 %v3756, %v3752
      %v3921 = vpack.c.b16 %v3757, %v3753
      %v3922 = vpack.c.b16 %v3758, %v3754
      %v3923 = vpack.c.b16 %v3763, %v3759
      %v3924 = vpack.c.b16 %v3764, %v3760
      %v3925 = vpack.c.b16 %v3765, %v3761
      %v3926 = vpack.c.b16 %v3766, %v3762
      %v3927 = vpack.c.b16 %v3771, %v3767
      %v3928 = vpack.c.b16 %v3772, %v3768
      %v3929 = vpack.c.b16 %v3773, %v3769
      %v3930 = vpack.c.b16 %v3774, %v3770
      %v3931 = vpack.c.b16 %v3779, %v3775
      %v3932 = vpack.c.b16 %v3780, %v3776
      %v3933 = vpack.c.b16 %v3781, %v3777
      %v3934 = vpack.c.b16 %v3782, %v3778
      %v3935 = vpack.c.b16 %v3787, %v3783
      %v3936 = vpack.c.b16 %v3788, %v3784
      %v3937 = vpack.c.b16 %v3789, %v3785
      %v3938 = vpack.c.b16 %v3790, %v3786
      %v3939 = vpack.c.b16 %v3795, %v3791
      %v3940 = vpack.c.b16 %v3796, %v3792
      %v3941 = vpack.c.b16 %v3797, %v3793
      %v3942 = vpack.c.b16 %v3798, %v3794
      %v3943 = vpack.c.b16 %v3803, %v3799
      %v3944 = vpack.c.b16 %v3804, %v3800
      %v3945 = vpack.c.b16 %v3805, %v3801
      %v3946 = vpack.c.b16 %v3806, %v3802
      %v3947 = vpack.c.b16 %v3811, %v3807
      %v3948 = vpack.c.b16 %v3812, %v3808
      %v3949 = vpack.c.b16 %v3813, %v3809
      %v3950 = vpack.c.b16 %v3814, %v3810
      %v3951 = vpack.c.b16 %v3819, %v3815
      %v3952 = vpack.c.b16 %v3820, %v3816
      %v3953 = vpack.c.b16 %v3821, %v3817
      %v3954 = vpack.c.b16 %v3822, %v3818
      %v3955 = vpack.c.b16 %v3827, %v3823
      %v3956 = vpack.c.b16 %v3828, %v3824
      %v3957 = vpack.c.b16 %v3829, %v3825
      %v3958 = vpack.c.b16 %v3830, %v3826
      %4087 = vmatpush.bf16.msra.mxu0 %v3859
      %4088 = vmatpush.bf16.msra.mxu0 %v3855
      %4089 = vmatpush.bf16.msra.mxu0 %v3851
      %4090 = vmatpush.bf16.msra.mxu0 %v3847
      %4091 = vmatpush.bf16.msra.mxu0 %v3843
      %4092 = vmatpush.bf16.msra.mxu0 %v3839
      %4093 = vmatpush.bf16.msra.mxu0 %v3835
      %4094 = vmatpush.bf16.msra.mxu0 %v3831
      %4095 = vmatmul.bf16.gmra.mxu0 %v3277
      %v4096 = vpop.f32.mrf.mxu0
      %v4097 = vadd.f32 %v3439, %v4096
      %v4098 = vpop.f32.mrf.mxu0
      %v4099 = vadd.f32 %v3439, %v4098
      %4100 = vmatmul.bf16.gmra.mxu0 %v3281
      %v4101 = vpop.f32.mrf.mxu0
      %v4102 = vadd.f32 %v3439, %v4101
      %v4103 = vpop.f32.mrf.mxu0
      %v4104 = vadd.f32 %v3439, %v4103
      %4105 = vmatmul.bf16.gmra.mxu0 %v3285
      %v4106 = vpop.f32.mrf.mxu0
      %v4107 = vadd.f32 %v3439, %v4106
      %v4108 = vpop.f32.mrf.mxu0
      %v4109 = vadd.f32 %v3439, %v4108
      %4110 = vmatmul.bf16.gmra.mxu0 %v3289
      %v4111 = vpop.f32.mrf.mxu0
      %v4112 = vadd.f32 %v3439, %v4111
      %v4113 = vpop.f32.mrf.mxu0
      %v4114 = vadd.f32 %v3439, %v4113
      %4115 = vmatmul.bf16.gmra.mxu0 %v3293
      %v4116 = vpop.f32.mrf.mxu0
      %v4117 = vadd.f32 %v3439, %v4116
      %v4118 = vpop.f32.mrf.mxu0
      %v4119 = vadd.f32 %v3439, %v4118
      %4120 = vmatmul.bf16.gmra.mxu0 %v3297
      %v4121 = vpop.f32.mrf.mxu0
      %v4122 = vadd.f32 %v3439, %v4121
      %v4123 = vpop.f32.mrf.mxu0
      %v4124 = vadd.f32 %v3439, %v4123
      %4125 = vmatmul.bf16.gmra.mxu0 %v3301
      %v4126 = vpop.f32.mrf.mxu0
      %v4127 = vadd.f32 %v3439, %v4126
      %v4128 = vpop.f32.mrf.mxu0
      %v4129 = vadd.f32 %v3439, %v4128
      %4130 = vmatmul.bf16.gmra.mxu0 %v3305
      %v4131 = vpop.f32.mrf.mxu0
      %v4132 = vadd.f32 %v3439, %v4131
      %v4133 = vpop.f32.mrf.mxu0
      %v4134 = vadd.f32 %v3439, %v4133
      %4135 = vdwg.mxu0
      %4136 = vmatpush.bf16.msra.mxu0 %v3891
      %4137 = vmatpush.bf16.msra.mxu0 %v3887
      %4138 = vmatpush.bf16.msra.mxu0 %v3883
      %4139 = vmatpush.bf16.msra.mxu0 %v3879
      %4140 = vmatpush.bf16.msra.mxu0 %v3875
      %4141 = vmatpush.bf16.msra.mxu0 %v3871
      %4142 = vmatpush.bf16.msra.mxu0 %v3867
      %4143 = vmatpush.bf16.msra.mxu0 %v3863
      %4144 = vmatmul.bf16.gmra.mxu0 %v3278
      %v4145 = vpop.f32.mrf.mxu0
      %v4146 = vadd.f32 %v4097, %v4145
      %v4147 = vpop.f32.mrf.mxu0
      %v4148 = vadd.f32 %v4099, %v4147
      %4149 = vmatmul.bf16.gmra.mxu0 %v3282
      %v4150 = vpop.f32.mrf.mxu0
      %v4151 = vadd.f32 %v4102, %v4150
      %v4152 = vpop.f32.mrf.mxu0
      %v4153 = vadd.f32 %v4104, %v4152
      %4154 = vmatmul.bf16.gmra.mxu0 %v3286
      %v4155 = vpop.f32.mrf.mxu0
      %v4156 = vadd.f32 %v4107, %v4155
      %v4157 = vpop.f32.mrf.mxu0
      %v4158 = vadd.f32 %v4109, %v4157
      %4159 = vmatmul.bf16.gmra.mxu0 %v3290
      %v4160 = vpop.f32.mrf.mxu0
      %v4161 = vadd.f32 %v4112, %v4160
      %v4162 = vpop.f32.mrf.mxu0
      %v4163 = vadd.f32 %v4114, %v4162
      %4164 = vmatmul.bf16.gmra.mxu0 %v3294
      %v4165 = vpop.f32.mrf.mxu0
      %v4166 = vadd.f32 %v4117, %v4165
      %v4167 = vpop.f32.mrf.mxu0
      %v4168 = vadd.f32 %v4119, %v4167
      %4169 = vmatmul.bf16.gmra.mxu0 %v3298
      %v4170 = vpop.f32.mrf.mxu0
      %v4171 = vadd.f32 %v4122, %v4170
      %v4172 = vpop.f32.mrf.mxu0
      %v4173 = vadd.f32 %v4124, %v4172
      %4174 = vmatmul.bf16.gmra.mxu0 %v3302
      %v4175 = vpop.f32.mrf.mxu0
      %v4176 = vadd.f32 %v4127, %v4175
      %v4177 = vpop.f32.mrf.mxu0
      %v4178 = vadd.f32 %v4129, %v4177
      %4179 = vmatmul.bf16.gmra.mxu0 %v3306
      %v4180 = vpop.f32.mrf.mxu0
      %v4181 = vadd.f32 %v4132, %v4180
      %v4182 = vpop.f32.mrf.mxu0
      %v4183 = vadd.f32 %v4134, %v4182
      %4184 = vdwg.mxu0
      %4185 = vmatpush.bf16.msra.mxu0 %v3923
      %4186 = vmatpush.bf16.msra.mxu0 %v3919
      %4187 = vmatpush.bf16.msra.mxu0 %v3915
      %4188 = vmatpush.bf16.msra.mxu0 %v3911
      %4189 = vmatpush.bf16.msra.mxu0 %v3907
      %4190 = vmatpush.bf16.msra.mxu0 %v3903
      %4191 = vmatpush.bf16.msra.mxu0 %v3899
      %4192 = vmatpush.bf16.msra.mxu0 %v3895
      %4193 = vmatmul.bf16.gmra.mxu0 %v3279
      %v4194 = vpop.f32.mrf.mxu0
      %v4195 = vadd.f32 %v4146, %v4194
      %v4196 = vpop.f32.mrf.mxu0
      %v4197 = vadd.f32 %v4148, %v4196
      %4198 = vmatmul.bf16.gmra.mxu0 %v3283
      %v4199 = vpop.f32.mrf.mxu0
      %v4200 = vadd.f32 %v4151, %v4199
      %v4201 = vpop.f32.mrf.mxu0
      %v4202 = vadd.f32 %v4153, %v4201
      %4203 = vmatmul.bf16.gmra.mxu0 %v3287
      %v4204 = vpop.f32.mrf.mxu0
      %v4205 = vadd.f32 %v4156, %v4204
      %v4206 = vpop.f32.mrf.mxu0
      %v4207 = vadd.f32 %v4158, %v4206
      %4208 = vmatmul.bf16.gmra.mxu0 %v3291
      %v4209 = vpop.f32.mrf.mxu0
      %v4210 = vadd.f32 %v4161, %v4209
      %v4211 = vpop.f32.mrf.mxu0
      %v4212 = vadd.f32 %v4163, %v4211
      %4213 = vmatmul.bf16.gmra.mxu0 %v3295
      %v4214 = vpop.f32.mrf.mxu0
      %v4215 = vadd.f32 %v4166, %v4214
      %v4216 = vpop.f32.mrf.mxu0
      %v4217 = vadd.f32 %v4168, %v4216
      %4218 = vmatmul.bf16.gmra.mxu0 %v3299
      %v4219 = vpop.f32.mrf.mxu0
      %v4220 = vadd.f32 %v4171, %v4219
      %v4221 = vpop.f32.mrf.mxu0
      %v4222 = vadd.f32 %v4173, %v4221
      %4223 = vmatmul.bf16.gmra.mxu0 %v3303
      %v4224 = vpop.f32.mrf.mxu0
      %v4225 = vadd.f32 %v4176, %v4224
      %v4226 = vpop.f32.mrf.mxu0
      %v4227 = vadd.f32 %v4178, %v4226
      %4228 = vmatmul.bf16.gmra.mxu0 %v3307
      %v4229 = vpop.f32.mrf.mxu0
      %v4230 = vadd.f32 %v4181, %v4229
      %v4231 = vpop.f32.mrf.mxu0
      %v4232 = vadd.f32 %v4183, %v4231
      %4233 = vdwg.mxu0
      %4234 = vmatpush.bf16.msra.mxu0 %v3955
      %4235 = vmatpush.bf16.msra.mxu0 %v3951
      %4236 = vmatpush.bf16.msra.mxu0 %v3947
      %4237 = vmatpush.bf16.msra.mxu0 %v3943
      %4238 = vmatpush.bf16.msra.mxu0 %v3939
      %4239 = vmatpush.bf16.msra.mxu0 %v3935
      %4240 = vmatpush.bf16.msra.mxu0 %v3931
      %4241 = vmatpush.bf16.msra.mxu0 %v3927
      %4242 = vmatmul.bf16.gmra.mxu0 %v3280
      %v4243 = vpop.f32.mrf.mxu0
      %v4244 = vadd.f32 %v4195, %v4243
      %v4245 = vpop.f32.mrf.mxu0
      %v4246 = vadd.f32 %v4197, %v4245
      %4247 = vmatmul.bf16.gmra.mxu0 %v3284
      %v4248 = vpop.f32.mrf.mxu0
      %v4249 = vadd.f32 %v4200, %v4248
      %v4250 = vpop.f32.mrf.mxu0
      %v4251 = vadd.f32 %v4202, %v4250
      %4252 = vmatmul.bf16.gmra.mxu0 %v3288
      %v4253 = vpop.f32.mrf.mxu0
      %v4254 = vadd.f32 %v4205, %v4253
      %v4255 = vpop.f32.mrf.mxu0
      %v4256 = vadd.f32 %v4207, %v4255
      %4257 = vmatmul.bf16.gmra.mxu0 %v3292
      %v4258 = vpop.f32.mrf.mxu0
      %v4259 = vadd.f32 %v4210, %v4258
      %v4260 = vpop.f32.mrf.mxu0
      %v4261 = vadd.f32 %v4212, %v4260
      %4262 = vmatmul.bf16.gmra.mxu0 %v3296
      %v4263 = vpop.f32.mrf.mxu0
      %v4264 = vadd.f32 %v4215, %v4263
      %v4265 = vpop.f32.mrf.mxu0
      %v4266 = vadd.f32 %v4217, %v4265
      %4267 = vmatmul.bf16.gmra.mxu0 %v3300
      %v4268 = vpop.f32.mrf.mxu0
      %v4269 = vadd.f32 %v4220, %v4268
      %v4270 = vpop.f32.mrf.mxu0
      %v4271 = vadd.f32 %v4222, %v4270
      %4272 = vmatmul.bf16.gmra.mxu0 %v3304
      %v4273 = vpop.f32.mrf.mxu0
      %v4274 = vadd.f32 %v4225, %v4273
      %v4275 = vpop.f32.mrf.mxu0
      %v4276 = vadd.f32 %v4227, %v4275
      %4277 = vmatmul.bf16.gmra.mxu0 %v3308
      %v4278 = vpop.f32.mrf.mxu0
      %v4279 = vadd.f32 %v4230, %v4278
      %v4280 = vpop.f32.mrf.mxu0
      %v4281 = vadd.f32 %v4232, %v4280
      %4282 = vdwg.mxu0
      %4283 = vmatpush.bf16.msra.mxu0 %v3860
      %4284 = vmatpush.bf16.msra.mxu0 %v3856
      %4285 = vmatpush.bf16.msra.mxu0 %v3852
      %4286 = vmatpush.bf16.msra.mxu0 %v3848
      %4287 = vmatpush.bf16.msra.mxu0 %v3844
      %4288 = vmatpush.bf16.msra.mxu0 %v3840
      %4289 = vmatpush.bf16.msra.mxu0 %v3836
      %4290 = vmatpush.bf16.msra.mxu0 %v3832
      %4291 = vmatmul.bf16.gmra.mxu0 %v3277
      %v4292 = vpop.f32.mrf.mxu0
      %v4293 = vadd.f32 %v3440, %v4292
      %v4294 = vpop.f32.mrf.mxu0
      %v4295 = vadd.f32 %v3440, %v4294
      %4296 = vmatmul.bf16.gmra.mxu0 %v3281
      %v4297 = vpop.f32.mrf.mxu0
      %v4298 = vadd.f32 %v3440, %v4297
      %v4299 = vpop.f32.mrf.mxu0
      %v4300 = vadd.f32 %v3440, %v4299
      %4301 = vmatmul.bf16.gmra.mxu0 %v3285
      %v4302 = vpop.f32.mrf.mxu0
      %v4303 = vadd.f32 %v3440, %v4302
      %v4304 = vpop.f32.mrf.mxu0
      %v4305 = vadd.f32 %v3440, %v4304
      %4306 = vmatmul.bf16.gmra.mxu0 %v3289
      %v4307 = vpop.f32.mrf.mxu0
      %v4308 = vadd.f32 %v3440, %v4307
      %v4309 = vpop.f32.mrf.mxu0
      %v4310 = vadd.f32 %v3440, %v4309
      %4311 = vmatmul.bf16.gmra.mxu0 %v3293
      %v4312 = vpop.f32.mrf.mxu0
      %v4313 = vadd.f32 %v3440, %v4312
      %v4314 = vpop.f32.mrf.mxu0
      %v4315 = vadd.f32 %v3440, %v4314
      %4316 = vmatmul.bf16.gmra.mxu0 %v3297
      %v4317 = vpop.f32.mrf.mxu0
      %v4318 = vadd.f32 %v3440, %v4317
      %v4319 = vpop.f32.mrf.mxu0
      %v4320 = vadd.f32 %v3440, %v4319
      %4321 = vmatmul.bf16.gmra.mxu0 %v3301
      %v4322 = vpop.f32.mrf.mxu0
      %v4323 = vadd.f32 %v3440, %v4322
      %v4324 = vpop.f32.mrf.mxu0
      %v4325 = vadd.f32 %v3440, %v4324
      %4326 = vmatmul.bf16.gmra.mxu0 %v3305
      %v4327 = vpop.f32.mrf.mxu0
      %v4328 = vadd.f32 %v3440, %v4327
      %v4329 = vpop.f32.mrf.mxu0
      %v4330 = vadd.f32 %v3440, %v4329
      %4331 = vdwg.mxu0
      %4332 = vmatpush.bf16.msra.mxu0 %v3892
      %4333 = vmatpush.bf16.msra.mxu0 %v3888
      %4334 = vmatpush.bf16.msra.mxu0 %v3884
      %4335 = vmatpush.bf16.msra.mxu0 %v3880
      %4336 = vmatpush.bf16.msra.mxu0 %v3876
      %4337 = vmatpush.bf16.msra.mxu0 %v3872
      %4338 = vmatpush.bf16.msra.mxu0 %v3868
      %4339 = vmatpush.bf16.msra.mxu0 %v3864
      %4340 = vmatmul.bf16.gmra.mxu0 %v3278
      %v4341 = vpop.f32.mrf.mxu0
      %v4342 = vadd.f32 %v4293, %v4341
      %v4343 = vpop.f32.mrf.mxu0
      %v4344 = vadd.f32 %v4295, %v4343
      %4345 = vmatmul.bf16.gmra.mxu0 %v3282
      %v4346 = vpop.f32.mrf.mxu0
      %v4347 = vadd.f32 %v4298, %v4346
      %v4348 = vpop.f32.mrf.mxu0
      %v4349 = vadd.f32 %v4300, %v4348
      %4350 = vmatmul.bf16.gmra.mxu0 %v3286
      %v4351 = vpop.f32.mrf.mxu0
      %v4352 = vadd.f32 %v4303, %v4351
      %v4353 = vpop.f32.mrf.mxu0
      %v4354 = vadd.f32 %v4305, %v4353
      %4355 = vmatmul.bf16.gmra.mxu0 %v3290
      %v4356 = vpop.f32.mrf.mxu0
      %v4357 = vadd.f32 %v4308, %v4356
      %v4358 = vpop.f32.mrf.mxu0
      %v4359 = vadd.f32 %v4310, %v4358
      %4360 = vmatmul.bf16.gmra.mxu0 %v3294
      %v4361 = vpop.f32.mrf.mxu0
      %v4362 = vadd.f32 %v4313, %v4361
      %v4363 = vpop.f32.mrf.mxu0
      %v4364 = vadd.f32 %v4315, %v4363
      %4365 = vmatmul.bf16.gmra.mxu0 %v3298
      %v4366 = vpop.f32.mrf.mxu0
      %v4367 = vadd.f32 %v4318, %v4366
      %v4368 = vpop.f32.mrf.mxu0
      %v4369 = vadd.f32 %v4320, %v4368
      %4370 = vmatmul.bf16.gmra.mxu0 %v3302
      %v4371 = vpop.f32.mrf.mxu0
      %v4372 = vadd.f32 %v4323, %v4371
      %v4373 = vpop.f32.mrf.mxu0
      %v4374 = vadd.f32 %v4325, %v4373
      %4375 = vmatmul.bf16.gmra.mxu0 %v3306
      %v4376 = vpop.f32.mrf.mxu0
      %v4377 = vadd.f32 %v4328, %v4376
      %v4378 = vpop.f32.mrf.mxu0
      %v4379 = vadd.f32 %v4330, %v4378
      %4380 = vdwg.mxu0
      %4381 = vmatpush.bf16.msra.mxu0 %v3924
      %4382 = vmatpush.bf16.msra.mxu0 %v3920
      %4383 = vmatpush.bf16.msra.mxu0 %v3916
      %4384 = vmatpush.bf16.msra.mxu0 %v3912
      %4385 = vmatpush.bf16.msra.mxu0 %v3908
      %4386 = vmatpush.bf16.msra.mxu0 %v3904
      %4387 = vmatpush.bf16.msra.mxu0 %v3900
      %4388 = vmatpush.bf16.msra.mxu0 %v3896
      %4389 = vmatmul.bf16.gmra.mxu0 %v3279
      %v4390 = vpop.f32.mrf.mxu0
      %v4391 = vadd.f32 %v4342, %v4390
      %v4392 = vpop.f32.mrf.mxu0
      %v4393 = vadd.f32 %v4344, %v4392
      %4394 = vmatmul.bf16.gmra.mxu0 %v3283
      %v4395 = vpop.f32.mrf.mxu0
      %v4396 = vadd.f32 %v4347, %v4395
      %v4397 = vpop.f32.mrf.mxu0
      %v4398 = vadd.f32 %v4349, %v4397
      %4399 = vmatmul.bf16.gmra.mxu0 %v3287
      %v4400 = vpop.f32.mrf.mxu0
      %v4401 = vadd.f32 %v4352, %v4400
      %v4402 = vpop.f32.mrf.mxu0
      %v4403 = vadd.f32 %v4354, %v4402
      %4404 = vmatmul.bf16.gmra.mxu0 %v3291
      %v4405 = vpop.f32.mrf.mxu0
      %v4406 = vadd.f32 %v4357, %v4405
      %v4407 = vpop.f32.mrf.mxu0
      %v4408 = vadd.f32 %v4359, %v4407
      %4409 = vmatmul.bf16.gmra.mxu0 %v3295
      %v4410 = vpop.f32.mrf.mxu0
      %v4411 = vadd.f32 %v4362, %v4410
      %v4412 = vpop.f32.mrf.mxu0
      %v4413 = vadd.f32 %v4364, %v4412
      %4414 = vmatmul.bf16.gmra.mxu0 %v3299
      %v4415 = vpop.f32.mrf.mxu0
      %v4416 = vadd.f32 %v4367, %v4415
      %v4417 = vpop.f32.mrf.mxu0
      %v4418 = vadd.f32 %v4369, %v4417
      %4419 = vmatmul.bf16.gmra.mxu0 %v3303
      %v4420 = vpop.f32.mrf.mxu0
      %v4421 = vadd.f32 %v4372, %v4420
      %v4422 = vpop.f32.mrf.mxu0
      %v4423 = vadd.f32 %v4374, %v4422
      %4424 = vmatmul.bf16.gmra.mxu0 %v3307
      %v4425 = vpop.f32.mrf.mxu0
      %v4426 = vadd.f32 %v4377, %v4425
      %v4427 = vpop.f32.mrf.mxu0
      %v4428 = vadd.f32 %v4379, %v4427
      %4429 = vdwg.mxu0
      %4430 = vmatpush.bf16.msra.mxu0 %v3956
      %4431 = vmatpush.bf16.msra.mxu0 %v3952
      %4432 = vmatpush.bf16.msra.mxu0 %v3948
      %4433 = vmatpush.bf16.msra.mxu0 %v3944
      %4434 = vmatpush.bf16.msra.mxu0 %v3940
      %4435 = vmatpush.bf16.msra.mxu0 %v3936
      %4436 = vmatpush.bf16.msra.mxu0 %v3932
      %4437 = vmatpush.bf16.msra.mxu0 %v3928
      %4438 = vmatmul.bf16.gmra.mxu0 %v3280
      %v4439 = vpop.f32.mrf.mxu0
      %v4440 = vadd.f32 %v4391, %v4439
      %v4441 = vpop.f32.mrf.mxu0
      %v4442 = vadd.f32 %v4393, %v4441
      %4443 = vmatmul.bf16.gmra.mxu0 %v3284
      %v4444 = vpop.f32.mrf.mxu0
      %v4445 = vadd.f32 %v4396, %v4444
      %v4446 = vpop.f32.mrf.mxu0
      %v4447 = vadd.f32 %v4398, %v4446
      %4448 = vmatmul.bf16.gmra.mxu0 %v3288
      %v4449 = vpop.f32.mrf.mxu0
      %v4450 = vadd.f32 %v4401, %v4449
      %v4451 = vpop.f32.mrf.mxu0
      %v4452 = vadd.f32 %v4403, %v4451
      %4453 = vmatmul.bf16.gmra.mxu0 %v3292
      %v4454 = vpop.f32.mrf.mxu0
      %v4455 = vadd.f32 %v4406, %v4454
      %v4456 = vpop.f32.mrf.mxu0
      %v4457 = vadd.f32 %v4408, %v4456
      %4458 = vmatmul.bf16.gmra.mxu0 %v3296
      %v4459 = vpop.f32.mrf.mxu0
      %v4460 = vadd.f32 %v4411, %v4459
      %v4461 = vpop.f32.mrf.mxu0
      %v4462 = vadd.f32 %v4413, %v4461
      %4463 = vmatmul.bf16.gmra.mxu0 %v3300
      %v4464 = vpop.f32.mrf.mxu0
      %v4465 = vadd.f32 %v4416, %v4464
      %v4466 = vpop.f32.mrf.mxu0
      %v4467 = vadd.f32 %v4418, %v4466
      %4468 = vmatmul.bf16.gmra.mxu0 %v3304
      %v4469 = vpop.f32.mrf.mxu0
      %v4470 = vadd.f32 %v4421, %v4469
      %v4471 = vpop.f32.mrf.mxu0
      %v4472 = vadd.f32 %v4423, %v4471
      %4473 = vmatmul.bf16.gmra.mxu0 %v3308
      %v4474 = vpop.f32.mrf.mxu0
      %v4475 = vadd.f32 %v4426, %v4474
      %v4476 = vpop.f32.mrf.mxu0
      %v4477 = vadd.f32 %v4428, %v4476
      %4478 = vdwg.mxu0
      %4479 = vmatpush.bf16.msra.mxu0 %v3861
      %4480 = vmatpush.bf16.msra.mxu0 %v3857
      %4481 = vmatpush.bf16.msra.mxu0 %v3853
      %4482 = vmatpush.bf16.msra.mxu0 %v3849
      %4483 = vmatpush.bf16.msra.mxu0 %v3845
      %4484 = vmatpush.bf16.msra.mxu0 %v3841
      %4485 = vmatpush.bf16.msra.mxu0 %v3837
      %4486 = vmatpush.bf16.msra.mxu0 %v3833
      %4487 = vmatmul.bf16.gmra.mxu0 %v3277
      %v4488 = vpop.f32.mrf.mxu0
      %v4489 = vadd.f32 %v3441, %v4488
      %v4490 = vpop.f32.mrf.mxu0
      %v4491 = vadd.f32 %v3441, %v4490
      %4492 = vmatmul.bf16.gmra.mxu0 %v3281
      %v4493 = vpop.f32.mrf.mxu0
      %v4494 = vadd.f32 %v3441, %v4493
      %v4495 = vpop.f32.mrf.mxu0
      %v4496 = vadd.f32 %v3441, %v4495
      %4497 = vmatmul.bf16.gmra.mxu0 %v3285
      %v4498 = vpop.f32.mrf.mxu0
      %v4499 = vadd.f32 %v3441, %v4498
      %v4500 = vpop.f32.mrf.mxu0
      %v4501 = vadd.f32 %v3441, %v4500
      %4502 = vmatmul.bf16.gmra.mxu0 %v3289
      %v4503 = vpop.f32.mrf.mxu0
      %v4504 = vadd.f32 %v3441, %v4503
      %v4505 = vpop.f32.mrf.mxu0
      %v4506 = vadd.f32 %v3441, %v4505
      %4507 = vmatmul.bf16.gmra.mxu0 %v3293
      %v4508 = vpop.f32.mrf.mxu0
      %v4509 = vadd.f32 %v3441, %v4508
      %v4510 = vpop.f32.mrf.mxu0
      %v4511 = vadd.f32 %v3441, %v4510
      %4512 = vmatmul.bf16.gmra.mxu0 %v3297
      %v4513 = vpop.f32.mrf.mxu0
      %v4514 = vadd.f32 %v3441, %v4513
      %v4515 = vpop.f32.mrf.mxu0
      %v4516 = vadd.f32 %v3441, %v4515
      %4517 = vmatmul.bf16.gmra.mxu0 %v3301
      %v4518 = vpop.f32.mrf.mxu0
      %v4519 = vadd.f32 %v3441, %v4518
      %v4520 = vpop.f32.mrf.mxu0
      %v4521 = vadd.f32 %v3441, %v4520
      %4522 = vmatmul.bf16.gmra.mxu0 %v3305
      %v4523 = vpop.f32.mrf.mxu0
      %v4524 = vadd.f32 %v3441, %v4523
      %v4525 = vpop.f32.mrf.mxu0
      %v4526 = vadd.f32 %v3441, %v4525
      %4527 = vdwg.mxu0
      %4528 = vmatpush.bf16.msra.mxu0 %v3893
      %4529 = vmatpush.bf16.msra.mxu0 %v3889
      %4530 = vmatpush.bf16.msra.mxu0 %v3885
      %4531 = vmatpush.bf16.msra.mxu0 %v3881
      %4532 = vmatpush.bf16.msra.mxu0 %v3877
      %4533 = vmatpush.bf16.msra.mxu0 %v3873
      %4534 = vmatpush.bf16.msra.mxu0 %v3869
      %4535 = vmatpush.bf16.msra.mxu0 %v3865
      %4536 = vmatmul.bf16.gmra.mxu0 %v3278
      %v4537 = vpop.f32.mrf.mxu0
      %v4538 = vadd.f32 %v4489, %v4537
      %v4539 = vpop.f32.mrf.mxu0
      %v4540 = vadd.f32 %v4491, %v4539
      %4541 = vmatmul.bf16.gmra.mxu0 %v3282
      %v4542 = vpop.f32.mrf.mxu0
      %v4543 = vadd.f32 %v4494, %v4542
      %v4544 = vpop.f32.mrf.mxu0
      %v4545 = vadd.f32 %v4496, %v4544
      %4546 = vmatmul.bf16.gmra.mxu0 %v3286
      %v4547 = vpop.f32.mrf.mxu0
      %v4548 = vadd.f32 %v4499, %v4547
      %v4549 = vpop.f32.mrf.mxu0
      %v4550 = vadd.f32 %v4501, %v4549
      %4551 = vmatmul.bf16.gmra.mxu0 %v3290
      %v4552 = vpop.f32.mrf.mxu0
      %v4553 = vadd.f32 %v4504, %v4552
      %v4554 = vpop.f32.mrf.mxu0
      %v4555 = vadd.f32 %v4506, %v4554
      %4556 = vmatmul.bf16.gmra.mxu0 %v3294
      %v4557 = vpop.f32.mrf.mxu0
      %v4558 = vadd.f32 %v4509, %v4557
      %v4559 = vpop.f32.mrf.mxu0
      %v4560 = vadd.f32 %v4511, %v4559
      %4561 = vmatmul.bf16.gmra.mxu0 %v3298
      %v4562 = vpop.f32.mrf.mxu0
      %v4563 = vadd.f32 %v4514, %v4562
      %v4564 = vpop.f32.mrf.mxu0
      %v4565 = vadd.f32 %v4516, %v4564
      %4566 = vmatmul.bf16.gmra.mxu0 %v3302
      %v4567 = vpop.f32.mrf.mxu0
      %v4568 = vadd.f32 %v4519, %v4567
      %v4569 = vpop.f32.mrf.mxu0
      %v4570 = vadd.f32 %v4521, %v4569
      %4571 = vmatmul.bf16.gmra.mxu0 %v3306
      %v4572 = vpop.f32.mrf.mxu0
      %v4573 = vadd.f32 %v4524, %v4572
      %v4574 = vpop.f32.mrf.mxu0
      %v4575 = vadd.f32 %v4526, %v4574
      %4576 = vdwg.mxu0
      %4577 = vmatpush.bf16.msra.mxu0 %v3925
      %4578 = vmatpush.bf16.msra.mxu0 %v3921
      %4579 = vmatpush.bf16.msra.mxu0 %v3917
      %4580 = vmatpush.bf16.msra.mxu0 %v3913
      %4581 = vmatpush.bf16.msra.mxu0 %v3909
      %4582 = vmatpush.bf16.msra.mxu0 %v3905
      %4583 = vmatpush.bf16.msra.mxu0 %v3901
      %4584 = vmatpush.bf16.msra.mxu0 %v3897
      %4585 = vmatmul.bf16.gmra.mxu0 %v3279
      %v4586 = vpop.f32.mrf.mxu0
      %v4587 = vadd.f32 %v4538, %v4586
      %v4588 = vpop.f32.mrf.mxu0
      %v4589 = vadd.f32 %v4540, %v4588
      %4590 = vmatmul.bf16.gmra.mxu0 %v3283
      %v4591 = vpop.f32.mrf.mxu0
      %v4592 = vadd.f32 %v4543, %v4591
      %v4593 = vpop.f32.mrf.mxu0
      %v4594 = vadd.f32 %v4545, %v4593
      %4595 = vmatmul.bf16.gmra.mxu0 %v3287
      %v4596 = vpop.f32.mrf.mxu0
      %v4597 = vadd.f32 %v4548, %v4596
      %v4598 = vpop.f32.mrf.mxu0
      %v4599 = vadd.f32 %v4550, %v4598
      %4600 = vmatmul.bf16.gmra.mxu0 %v3291
      %v4601 = vpop.f32.mrf.mxu0
      %v4602 = vadd.f32 %v4553, %v4601
      %v4603 = vpop.f32.mrf.mxu0
      %v4604 = vadd.f32 %v4555, %v4603
      %4605 = vmatmul.bf16.gmra.mxu0 %v3295
      %v4606 = vpop.f32.mrf.mxu0
      %v4607 = vadd.f32 %v4558, %v4606
      %v4608 = vpop.f32.mrf.mxu0
      %v4609 = vadd.f32 %v4560, %v4608
      %4610 = vmatmul.bf16.gmra.mxu0 %v3299
      %v4611 = vpop.f32.mrf.mxu0
      %v4612 = vadd.f32 %v4563, %v4611
      %v4613 = vpop.f32.mrf.mxu0
      %v4614 = vadd.f32 %v4565, %v4613
      %4615 = vmatmul.bf16.gmra.mxu0 %v3303
      %v4616 = vpop.f32.mrf.mxu0
      %v4617 = vadd.f32 %v4568, %v4616
      %v4618 = vpop.f32.mrf.mxu0
      %v4619 = vadd.f32 %v4570, %v4618
      %4620 = vmatmul.bf16.gmra.mxu0 %v3307
      %v4621 = vpop.f32.mrf.mxu0
      %v4622 = vadd.f32 %v4573, %v4621
      %v4623 = vpop.f32.mrf.mxu0
      %v4624 = vadd.f32 %v4575, %v4623
      %4625 = vdwg.mxu0
      %4626 = vmatpush.bf16.msra.mxu0 %v3957
      %4627 = vmatpush.bf16.msra.mxu0 %v3953
      %4628 = vmatpush.bf16.msra.mxu0 %v3949
      %4629 = vmatpush.bf16.msra.mxu0 %v3945
      %4630 = vmatpush.bf16.msra.mxu0 %v3941
      %4631 = vmatpush.bf16.msra.mxu0 %v3937
      %4632 = vmatpush.bf16.msra.mxu0 %v3933
      %4633 = vmatpush.bf16.msra.mxu0 %v3929
      %4634 = vmatmul.bf16.gmra.mxu0 %v3280
      %v4635 = vpop.f32.mrf.mxu0
      %v4636 = vadd.f32 %v4587, %v4635
      %v4637 = vpop.f32.mrf.mxu0
      %v4638 = vadd.f32 %v4589, %v4637
      %4639 = vmatmul.bf16.gmra.mxu0 %v3284
      %v4640 = vpop.f32.mrf.mxu0
      %v4641 = vadd.f32 %v4592, %v4640
      %v4642 = vpop.f32.mrf.mxu0
      %v4643 = vadd.f32 %v4594, %v4642
      %4644 = vmatmul.bf16.gmra.mxu0 %v3288
      %v4645 = vpop.f32.mrf.mxu0
      %v4646 = vadd.f32 %v4597, %v4645
      %v4647 = vpop.f32.mrf.mxu0
      %v4648 = vadd.f32 %v4599, %v4647
      %4649 = vmatmul.bf16.gmra.mxu0 %v3292
      %v4650 = vpop.f32.mrf.mxu0
      %v4651 = vadd.f32 %v4602, %v4650
      %v4652 = vpop.f32.mrf.mxu0
      %v4653 = vadd.f32 %v4604, %v4652
      %4654 = vmatmul.bf16.gmra.mxu0 %v3296
      %v4655 = vpop.f32.mrf.mxu0
      %v4656 = vadd.f32 %v4607, %v4655
      %v4657 = vpop.f32.mrf.mxu0
      %v4658 = vadd.f32 %v4609, %v4657
      %4659 = vmatmul.bf16.gmra.mxu0 %v3300
      %v4660 = vpop.f32.mrf.mxu0
      %v4661 = vadd.f32 %v4612, %v4660
      %v4662 = vpop.f32.mrf.mxu0
      %v4663 = vadd.f32 %v4614, %v4662
      %4664 = vmatmul.bf16.gmra.mxu0 %v3304
      %v4665 = vpop.f32.mrf.mxu0
      %v4666 = vadd.f32 %v4617, %v4665
      %v4667 = vpop.f32.mrf.mxu0
      %v4668 = vadd.f32 %v4619, %v4667
      %4669 = vmatmul.bf16.gmra.mxu0 %v3308
      %v4670 = vpop.f32.mrf.mxu0
      %v4671 = vadd.f32 %v4622, %v4670
      %v4672 = vpop.f32.mrf.mxu0
      %v4673 = vadd.f32 %v4624, %v4672
      %4674 = vdwg.mxu0
      %4675 = vmatpush.bf16.msra.mxu0 %v3862
      %4676 = vmatpush.bf16.msra.mxu0 %v3858
      %4677 = vmatpush.bf16.msra.mxu0 %v3854
      %4678 = vmatpush.bf16.msra.mxu0 %v3850
      %4679 = vmatpush.bf16.msra.mxu0 %v3846
      %4680 = vmatpush.bf16.msra.mxu0 %v3842
      %4681 = vmatpush.bf16.msra.mxu0 %v3838
      %4682 = vmatpush.bf16.msra.mxu0 %v3834
      %4683 = vmatmul.bf16.gmra.mxu0 %v3277
      %v4684 = vpop.f32.mrf.mxu0
      %v4685 = vadd.f32 %v3442, %v4684
      %v4686 = vpop.f32.mrf.mxu0
      %v4687 = vadd.f32 %v3442, %v4686
      %4688 = vmatmul.bf16.gmra.mxu0 %v3281
      %v4689 = vpop.f32.mrf.mxu0
      %v4690 = vadd.f32 %v3442, %v4689
      %v4691 = vpop.f32.mrf.mxu0
      %v4692 = vadd.f32 %v3442, %v4691
      %4693 = vmatmul.bf16.gmra.mxu0 %v3285
      %v4694 = vpop.f32.mrf.mxu0
      %v4695 = vadd.f32 %v3442, %v4694
      %v4696 = vpop.f32.mrf.mxu0
      %v4697 = vadd.f32 %v3442, %v4696
      %4698 = vmatmul.bf16.gmra.mxu0 %v3289
      %v4699 = vpop.f32.mrf.mxu0
      %v4700 = vadd.f32 %v3442, %v4699
      %v4701 = vpop.f32.mrf.mxu0
      %v4702 = vadd.f32 %v3442, %v4701
      %4703 = vmatmul.bf16.gmra.mxu0 %v3293
      %v4704 = vpop.f32.mrf.mxu0
      %v4705 = vadd.f32 %v3442, %v4704
      %v4706 = vpop.f32.mrf.mxu0
      %v4707 = vadd.f32 %v3442, %v4706
      %4708 = vmatmul.bf16.gmra.mxu0 %v3297
      %v4709 = vpop.f32.mrf.mxu0
      %v4710 = vadd.f32 %v3442, %v4709
      %v4711 = vpop.f32.mrf.mxu0
      %v4712 = vadd.f32 %v3442, %v4711
      %4713 = vmatmul.bf16.gmra.mxu0 %v3301
      %v4714 = vpop.f32.mrf.mxu0
      %v4715 = vadd.f32 %v3442, %v4714
      %v4716 = vpop.f32.mrf.mxu0
      %v4717 = vadd.f32 %v3442, %v4716
      %4718 = vmatmul.bf16.gmra.mxu0 %v3305
      %v4719 = vpop.f32.mrf.mxu0
      %v4720 = vadd.f32 %v3442, %v4719
      %v4721 = vpop.f32.mrf.mxu0
      %v4722 = vadd.f32 %v3442, %v4721
      %4723 = vdwg.mxu0
      %4724 = vmatpush.bf16.msra.mxu0 %v3894
      %4725 = vmatpush.bf16.msra.mxu0 %v3890
      %4726 = vmatpush.bf16.msra.mxu0 %v3886
      %4727 = vmatpush.bf16.msra.mxu0 %v3882
      %4728 = vmatpush.bf16.msra.mxu0 %v3878
      %4729 = vmatpush.bf16.msra.mxu0 %v3874
      %4730 = vmatpush.bf16.msra.mxu0 %v3870
      %4731 = vmatpush.bf16.msra.mxu0 %v3866
      %4732 = vmatmul.bf16.gmra.mxu0 %v3278
      %v4733 = vpop.f32.mrf.mxu0
      %v4734 = vadd.f32 %v4685, %v4733
      %v4735 = vpop.f32.mrf.mxu0
      %v4736 = vadd.f32 %v4687, %v4735
      %4737 = vmatmul.bf16.gmra.mxu0 %v3282
      %v4738 = vpop.f32.mrf.mxu0
      %v4739 = vadd.f32 %v4690, %v4738
      %v4740 = vpop.f32.mrf.mxu0
      %v4741 = vadd.f32 %v4692, %v4740
      %4742 = vmatmul.bf16.gmra.mxu0 %v3286
      %v4743 = vpop.f32.mrf.mxu0
      %v4744 = vadd.f32 %v4695, %v4743
      %v4745 = vpop.f32.mrf.mxu0
      %v4746 = vadd.f32 %v4697, %v4745
      %4747 = vmatmul.bf16.gmra.mxu0 %v3290
      %v4748 = vpop.f32.mrf.mxu0
      %v4749 = vadd.f32 %v4700, %v4748
      %v4750 = vpop.f32.mrf.mxu0
      %v4751 = vadd.f32 %v4702, %v4750
      %4752 = vmatmul.bf16.gmra.mxu0 %v3294
      %v4753 = vpop.f32.mrf.mxu0
      %v4754 = vadd.f32 %v4705, %v4753
      %v4755 = vpop.f32.mrf.mxu0
      %v4756 = vadd.f32 %v4707, %v4755
      %4757 = vmatmul.bf16.gmra.mxu0 %v3298
      %v4758 = vpop.f32.mrf.mxu0
      %v4759 = vadd.f32 %v4710, %v4758
      %v4760 = vpop.f32.mrf.mxu0
      %v4761 = vadd.f32 %v4712, %v4760
      %4762 = vmatmul.bf16.gmra.mxu0 %v3302
      %v4763 = vpop.f32.mrf.mxu0
      %v4764 = vadd.f32 %v4715, %v4763
      %v4765 = vpop.f32.mrf.mxu0
      %v4766 = vadd.f32 %v4717, %v4765
      %4767 = vmatmul.bf16.gmra.mxu0 %v3306
      %v4768 = vpop.f32.mrf.mxu0
      %v4769 = vadd.f32 %v4720, %v4768
      %v4770 = vpop.f32.mrf.mxu0
      %v4771 = vadd.f32 %v4722, %v4770
      %4772 = vdwg.mxu0
      %4773 = vmatpush.bf16.msra.mxu0 %v3926
      %4774 = vmatpush.bf16.msra.mxu0 %v3922
      %4775 = vmatpush.bf16.msra.mxu0 %v3918
      %4776 = vmatpush.bf16.msra.mxu0 %v3914
      %4777 = vmatpush.bf16.msra.mxu0 %v3910
      %4778 = vmatpush.bf16.msra.mxu0 %v3906
      %4779 = vmatpush.bf16.msra.mxu0 %v3902
      %4780 = vmatpush.bf16.msra.mxu0 %v3898
      %4781 = vmatmul.bf16.gmra.mxu0 %v3279
      %v4782 = vpop.f32.mrf.mxu0
      %v4783 = vadd.f32 %v4734, %v4782
      %v4784 = vpop.f32.mrf.mxu0
      %v4785 = vadd.f32 %v4736, %v4784
      %4786 = vmatmul.bf16.gmra.mxu0 %v3283
      %v4787 = vpop.f32.mrf.mxu0
      %v4788 = vadd.f32 %v4739, %v4787
      %v4789 = vpop.f32.mrf.mxu0
      %v4790 = vadd.f32 %v4741, %v4789
      %4791 = vmatmul.bf16.gmra.mxu0 %v3287
      %v4792 = vpop.f32.mrf.mxu0
      %v4793 = vadd.f32 %v4744, %v4792
      %v4794 = vpop.f32.mrf.mxu0
      %v4795 = vadd.f32 %v4746, %v4794
      %4796 = vmatmul.bf16.gmra.mxu0 %v3291
      %v4797 = vpop.f32.mrf.mxu0
      %v4798 = vadd.f32 %v4749, %v4797
      %v4799 = vpop.f32.mrf.mxu0
      %v4800 = vadd.f32 %v4751, %v4799
      %4801 = vmatmul.bf16.gmra.mxu0 %v3295
      %v4802 = vpop.f32.mrf.mxu0
      %v4803 = vadd.f32 %v4754, %v4802
      %v4804 = vpop.f32.mrf.mxu0
      %v4805 = vadd.f32 %v4756, %v4804
      %4806 = vmatmul.bf16.gmra.mxu0 %v3299
      %v4807 = vpop.f32.mrf.mxu0
      %v4808 = vadd.f32 %v4759, %v4807
      %v4809 = vpop.f32.mrf.mxu0
      %v4810 = vadd.f32 %v4761, %v4809
      %4811 = vmatmul.bf16.gmra.mxu0 %v3303
      %v4812 = vpop.f32.mrf.mxu0
      %v4813 = vadd.f32 %v4764, %v4812
      %v4814 = vpop.f32.mrf.mxu0
      %v4815 = vadd.f32 %v4766, %v4814
      %4816 = vmatmul.bf16.gmra.mxu0 %v3307
      %v4817 = vpop.f32.mrf.mxu0
      %v4818 = vadd.f32 %v4769, %v4817
      %v4819 = vpop.f32.mrf.mxu0
      %v4820 = vadd.f32 %v4771, %v4819
      %4821 = vdwg.mxu0
      %4822 = vmatpush.bf16.msra.mxu0 %v3958
      %4823 = vmatpush.bf16.msra.mxu0 %v3954
      %4824 = vmatpush.bf16.msra.mxu0 %v3950
      %4825 = vmatpush.bf16.msra.mxu0 %v3946
      %4826 = vmatpush.bf16.msra.mxu0 %v3942
      %4827 = vmatpush.bf16.msra.mxu0 %v3938
      %4828 = vmatpush.bf16.msra.mxu0 %v3934
      %4829 = vmatpush.bf16.msra.mxu0 %v3930
      %4830 = vmatmul.bf16.gmra.mxu0 %v3280
      %v4831 = vpop.f32.mrf.mxu0
      %v4832 = vadd.f32 %v4783, %v4831
      %v4833 = vpop.f32.mrf.mxu0
      %v4834 = vadd.f32 %v4785, %v4833
      %4835 = vmatmul.bf16.gmra.mxu0 %v3284
      %v4836 = vpop.f32.mrf.mxu0
      %v4837 = vadd.f32 %v4788, %v4836
      %v4838 = vpop.f32.mrf.mxu0
      %v4839 = vadd.f32 %v4790, %v4838
      %4840 = vmatmul.bf16.gmra.mxu0 %v3288
      %v4841 = vpop.f32.mrf.mxu0
      %v4842 = vadd.f32 %v4793, %v4841
      %v4843 = vpop.f32.mrf.mxu0
      %v4844 = vadd.f32 %v4795, %v4843
      %4845 = vmatmul.bf16.gmra.mxu0 %v3292
      %v4846 = vpop.f32.mrf.mxu0
      %v4847 = vadd.f32 %v4798, %v4846
      %v4848 = vpop.f32.mrf.mxu0
      %v4849 = vadd.f32 %v4800, %v4848
      %4850 = vmatmul.bf16.gmra.mxu0 %v3296
      %v4851 = vpop.f32.mrf.mxu0
      %v4852 = vadd.f32 %v4803, %v4851
      %v4853 = vpop.f32.mrf.mxu0
      %v4854 = vadd.f32 %v4805, %v4853
      %4855 = vmatmul.bf16.gmra.mxu0 %v3300
      %v4856 = vpop.f32.mrf.mxu0
      %v4857 = vadd.f32 %v4808, %v4856
      %v4858 = vpop.f32.mrf.mxu0
      %v4859 = vadd.f32 %v4810, %v4858
      %4860 = vmatmul.bf16.gmra.mxu0 %v3304
      %v4861 = vpop.f32.mrf.mxu0
      %v4862 = vadd.f32 %v4813, %v4861
      %v4863 = vpop.f32.mrf.mxu0
      %v4864 = vadd.f32 %v4815, %v4863
      %4865 = vmatmul.bf16.gmra.mxu0 %v3308
      %v4866 = vpop.f32.mrf.mxu0
      %v4867 = vadd.f32 %v4818, %v4866
      %v4868 = vpop.f32.mrf.mxu0
      %v4869 = vadd.f32 %v4820, %v4868
      %4870 = vdwg.mxu0
      %v4871 = vmax.f32 %v4244, 0.0
      %v4872 = vmax.f32 %v4440, 0.0
      %v4873 = vmax.f32 %v4636, 0.0
      %v4874 = vmax.f32 %v4832, 0.0
      %v4875 = vmax.f32 %v4246, 0.0
      %v4876 = vmax.f32 %v4442, 0.0
      %v4877 = vmax.f32 %v4638, 0.0
      %v4878 = vmax.f32 %v4834, 0.0
      %v4879 = vmax.f32 %v4249, 0.0
      %v4880 = vmax.f32 %v4445, 0.0
      %v4881 = vmax.f32 %v4641, 0.0
      %v4882 = vmax.f32 %v4837, 0.0
      %v4883 = vmax.f32 %v4251, 0.0
      %v4884 = vmax.f32 %v4447, 0.0
      %v4885 = vmax.f32 %v4643, 0.0
      %v4886 = vmax.f32 %v4839, 0.0
      %v4887 = vmax.f32 %v4254, 0.0
      %v4888 = vmax.f32 %v4450, 0.0
      %v4889 = vmax.f32 %v4646, 0.0
      %v4890 = vmax.f32 %v4842, 0.0
      %v4891 = vmax.f32 %v4256, 0.0
      %v4892 = vmax.f32 %v4452, 0.0
      %v4893 = vmax.f32 %v4648, 0.0
      %v4894 = vmax.f32 %v4844, 0.0
      %v4895 = vmax.f32 %v4259, 0.0
      %v4896 = vmax.f32 %v4455, 0.0
      %v4897 = vmax.f32 %v4651, 0.0
      %v4898 = vmax.f32 %v4847, 0.0
      %v4899 = vmax.f32 %v4261, 0.0
      %v4900 = vmax.f32 %v4457, 0.0
      %v4901 = vmax.f32 %v4653, 0.0
      %v4902 = vmax.f32 %v4849, 0.0
      %v4903 = vmax.f32 %v4264, 0.0
      %v4904 = vmax.f32 %v4460, 0.0
      %v4905 = vmax.f32 %v4656, 0.0
      %v4906 = vmax.f32 %v4852, 0.0
      %v4907 = vmax.f32 %v4266, 0.0
      %v4908 = vmax.f32 %v4462, 0.0
      %v4909 = vmax.f32 %v4658, 0.0
      %v4910 = vmax.f32 %v4854, 0.0
      %v4911 = vmax.f32 %v4269, 0.0
      %v4912 = vmax.f32 %v4465, 0.0
      %v4913 = vmax.f32 %v4661, 0.0
      %v4914 = vmax.f32 %v4857, 0.0
      %v4915 = vmax.f32 %v4271, 0.0
      %v4916 = vmax.f32 %v4467, 0.0
      %v4917 = vmax.f32 %v4663, 0.0
      %v4918 = vmax.f32 %v4859, 0.0
      %v4919 = vmax.f32 %v4274, 0.0
      %v4920 = vmax.f32 %v4470, 0.0
      %v4921 = vmax.f32 %v4666, 0.0
      %v4922 = vmax.f32 %v4862, 0.0
      %v4923 = vmax.f32 %v4276, 0.0
      %v4924 = vmax.f32 %v4472, 0.0
      %v4925 = vmax.f32 %v4668, 0.0
      %v4926 = vmax.f32 %v4864, 0.0
      %v4927 = vmax.f32 %v4279, 0.0
      %v4928 = vmax.f32 %v4475, 0.0
      %v4929 = vmax.f32 %v4671, 0.0
      %v4930 = vmax.f32 %v4867, 0.0
      %v4931 = vmax.f32 %v4281, 0.0
      %v4932 = vmax.f32 %v4477, 0.0
      %v4933 = vmax.f32 %v4673, 0.0
      %v4934 = vmax.f32 %v4869, 0.0
      %v4935 = vpack.c.bf16 %v4875, %v4871
      %v4936 = vpack.c.bf16 %v4876, %v4872
      %v4937 = vpack.c.bf16 %v4877, %v4873
      %v4938 = vpack.c.bf16 %v4878, %v4874
      %v4939 = vpack.c.bf16 %v4883, %v4879
      %v4940 = vpack.c.bf16 %v4884, %v4880
      %v4941 = vpack.c.bf16 %v4885, %v4881
      %v4942 = vpack.c.bf16 %v4886, %v4882
      %v4943 = vpack.c.bf16 %v4891, %v4887
      %v4944 = vpack.c.bf16 %v4892, %v4888
      %v4945 = vpack.c.bf16 %v4893, %v4889
      %v4946 = vpack.c.bf16 %v4894, %v4890
      %v4947 = vpack.c.bf16 %v4899, %v4895
      %v4948 = vpack.c.bf16 %v4900, %v4896
      %v4949 = vpack.c.bf16 %v4901, %v4897
      %v4950 = vpack.c.bf16 %v4902, %v4898
      %v4951 = vpack.c.bf16 %v4907, %v4903
      %v4952 = vpack.c.bf16 %v4908, %v4904
      %v4953 = vpack.c.bf16 %v4909, %v4905
      %v4954 = vpack.c.bf16 %v4910, %v4906
      %v4955 = vpack.c.bf16 %v4915, %v4911
      %v4956 = vpack.c.bf16 %v4916, %v4912
      %v4957 = vpack.c.bf16 %v4917, %v4913
      %v4958 = vpack.c.bf16 %v4918, %v4914
      %v4959 = vpack.c.bf16 %v4923, %v4919
      %v4960 = vpack.c.bf16 %v4924, %v4920
      %v4961 = vpack.c.bf16 %v4925, %v4921
      %v4962 = vpack.c.bf16 %v4926, %v4922
      %v4963 = vpack.c.bf16 %v4931, %v4927
      %v4964 = vpack.c.bf16 %v4932, %v4928
      %v4965 = vpack.c.bf16 %v4933, %v4929
      %v4966 = vpack.c.bf16 %v4934, %v4930
      %v4967 = vld [vmem:[%s5] sm:$0xf]
      %v4968 = vld [vmem:[%s5 + $0x4] sm:$0xf]
      %v4969 = vld [vmem:[%s5 + $0x8] sm:$0xf]
      %v4970 = vld [vmem:[%s5 + $0xc] sm:$0xf]
      %v4971 = vld [vmem:[%s5 + $0x10] sm:$0xf]
      %v4972 = vld [vmem:[%s5 + $0x14] sm:$0xf]
      %v4973 = vld [vmem:[%s5 + $0x18] sm:$0xf]
      %v4974 = vld [vmem:[%s5 + $0x1c] sm:$0xf]
      %v4975 = vld [vmem:[%s5 + $0x20] sm:$0xf]
      %v4976 = vld [vmem:[%s5 + $0x24] sm:$0xf]
      %v4977 = vld [vmem:[%s5 + $0x28] sm:$0xf]
      %v4978 = vld [vmem:[%s5 + $0x2c] sm:$0xf]
      %v4979 = vld [vmem:[%s5 + $0x30] sm:$0xf]
      %v4980 = vld [vmem:[%s5 + $0x34] sm:$0xf]
      %v4981 = vld [vmem:[%s5 + $0x38] sm:$0xf]
      %v4982 = vld [vmem:[%s5 + $0x3c] sm:$0xf]
      %v4983 = vld [vmem:[%s5 + $0x40] sm:$0xf]
      %v4984 = vld [vmem:[%s5 + $0x44] sm:$0xf]
      %v4985 = vld [vmem:[%s5 + $0x48] sm:$0xf]
      %v4986 = vld [vmem:[%s5 + $0x4c] sm:$0xf]
      %v4987 = vld [vmem:[%s5 + $0x50] sm:$0xf]
      %v4988 = vld [vmem:[%s5 + $0x54] sm:$0xf]
      %v4989 = vld [vmem:[%s5 + $0x58] sm:$0xf]
      %v4990 = vld [vmem:[%s5 + $0x5c] sm:$0xf]
      %v4991 = vld [vmem:[%s5 + $0x60] sm:$0xf]
      %v4992 = vld [vmem:[%s5 + $0x64] sm:$0xf]
      %v4993 = vld [vmem:[%s5 + $0x68] sm:$0xf]
      %v4994 = vld [vmem:[%s5 + $0x6c] sm:$0xf]
      %v4995 = vld [vmem:[%s5 + $0x70] sm:$0xf]
      %v4996 = vld [vmem:[%s5 + $0x74] sm:$0xf]
      %v4997 = vld [vmem:[%s5 + $0x78] sm:$0xf]
      %v4998 = vld [vmem:[%s5 + $0x7c] sm:$0xf]
      %v4999 = vld [vmem:[%s5 + $0x80] sm:$0xf]
      %v5000 = vld [vmem:[%s5 + $0x84] sm:$0xf]
      %v5001 = vld [vmem:[%s5 + $0x88] sm:$0xf]
      %v5002 = vld [vmem:[%s5 + $0x8c] sm:$0xf]
      %v5003 = vld [vmem:[%s5 + $0x90] sm:$0xf]
      %v5004 = vld [vmem:[%s5 + $0x94] sm:$0xf]
      %v5005 = vld [vmem:[%s5 + $0x98] sm:$0xf]
      %v5006 = vld [vmem:[%s5 + $0x9c] sm:$0xf]
      %v5007 = vld [vmem:[%s5 + $0xa0] sm:$0xf]
      %v5008 = vld [vmem:[%s5 + $0xa4] sm:$0xf]
      %v5009 = vld [vmem:[%s5 + $0xa8] sm:$0xf]
      %v5010 = vld [vmem:[%s5 + $0xac] sm:$0xf]
      %v5011 = vld [vmem:[%s5 + $0xb0] sm:$0xf]
      %v5012 = vld [vmem:[%s5 + $0xb4] sm:$0xf]
      %v5013 = vld [vmem:[%s5 + $0xb8] sm:$0xf]
      %v5014 = vld [vmem:[%s5 + $0xbc] sm:$0xf]
      %v5015 = vld [vmem:[%s5 + $0xc0] sm:$0xf]
      %v5016 = vld [vmem:[%s5 + $0xc4] sm:$0xf]
      %v5017 = vld [vmem:[%s5 + $0xc8] sm:$0xf]
      %v5018 = vld [vmem:[%s5 + $0xcc] sm:$0xf]
      %v5019 = vld [vmem:[%s5 + $0xd0] sm:$0xf]
      %v5020 = vld [vmem:[%s5 + $0xd4] sm:$0xf]
      %v5021 = vld [vmem:[%s5 + $0xd8] sm:$0xf]
      %v5022 = vld [vmem:[%s5 + $0xdc] sm:$0xf]
      %v5023 = vld [vmem:[%s5 + $0xe0] sm:$0xf]
      %v5024 = vld [vmem:[%s5 + $0xe4] sm:$0xf]
      %v5025 = vld [vmem:[%s5 + $0xe8] sm:$0xf]
      %v5026 = vld [vmem:[%s5 + $0xec] sm:$0xf]
      %v5027 = vld [vmem:[%s5 + $0xf0] sm:$0xf]
      %v5028 = vld [vmem:[%s5 + $0xf4] sm:$0xf]
      %v5029 = vld [vmem:[%s5 + $0xf8] sm:$0xf]
      %v5030 = vld [vmem:[%s5 + $0xfc] sm:$0xf]
      %v5031 = vld [vmem:[%s6] sm:$0x1]
      %v5033 = vperm.slane %v5031, 0
      %v5099 = vunpack.c.l.b16 %v4967
      %v5100 = vunpack.c.l.b16 %v4968
      %v5101 = vunpack.c.l.b16 %v4969
      %v5102 = vunpack.c.l.b16 %v4970
      %v5103 = vunpack.c.l.b16 %v4971
      %v5104 = vunpack.c.l.b16 %v4972
      %v5105 = vunpack.c.l.b16 %v4973
      %v5106 = vunpack.c.l.b16 %v4974
      %v5107 = vunpack.c.l.b16 %v4975
      %v5108 = vunpack.c.l.b16 %v4976
      %v5109 = vunpack.c.l.b16 %v4977
      %v5110 = vunpack.c.l.b16 %v4978
      %v5111 = vunpack.c.l.b16 %v4979
      %v5112 = vunpack.c.l.b16 %v4980
      %v5113 = vunpack.c.l.b16 %v4981
      %v5114 = vunpack.c.l.b16 %v4982
      %v5115 = vunpack.c.l.b16 %v4983
      %v5116 = vunpack.c.l.b16 %v4984
      %v5117 = vunpack.c.l.b16 %v4985
      %v5118 = vunpack.c.l.b16 %v4986
      %v5119 = vunpack.c.l.b16 %v4987
      %v5120 = vunpack.c.l.b16 %v4988
      %v5121 = vunpack.c.l.b16 %v4989
      %v5122 = vunpack.c.l.b16 %v4990
      %v5123 = vunpack.c.l.b16 %v4991
      %v5124 = vunpack.c.l.b16 %v4992
      %v5125 = vunpack.c.l.b16 %v4993
      %v5126 = vunpack.c.l.b16 %v4994
      %v5127 = vunpack.c.l.b16 %v4995
      %v5128 = vunpack.c.l.b16 %v4996
      %v5129 = vunpack.c.l.b16 %v4997
      %v5130 = vunpack.c.l.b16 %v4998
      %v5131 = vunpack.c.l.b16 %v4999
      %v5132 = vunpack.c.l.b16 %v5000
      %v5133 = vunpack.c.l.b16 %v5001
      %v5134 = vunpack.c.l.b16 %v5002
      %v5135 = vunpack.c.l.b16 %v5003
      %v5136 = vunpack.c.l.b16 %v5004
      %v5137 = vunpack.c.l.b16 %v5005
      %v5138 = vunpack.c.l.b16 %v5006
      %v5139 = vunpack.c.l.b16 %v5007
      %v5140 = vunpack.c.l.b16 %v5008
      %v5141 = vunpack.c.l.b16 %v5009
      %v5142 = vunpack.c.l.b16 %v5010
      %v5143 = vunpack.c.l.b16 %v5011
      %v5144 = vunpack.c.l.b16 %v5012
      %v5145 = vunpack.c.l.b16 %v5013
      %v5146 = vunpack.c.l.b16 %v5014
      %v5147 = vunpack.c.l.b16 %v5015
      %v5148 = vunpack.c.l.b16 %v5016
      %v5149 = vunpack.c.l.b16 %v5017
      %v5150 = vunpack.c.l.b16 %v5018
      %v5151 = vunpack.c.l.b16 %v5019
      %v5152 = vunpack.c.l.b16 %v5020
      %v5153 = vunpack.c.l.b16 %v5021
      %v5154 = vunpack.c.l.b16 %v5022
      %v5155 = vunpack.c.l.b16 %v5023
      %v5156 = vunpack.c.l.b16 %v5024
      %v5157 = vunpack.c.l.b16 %v5025
      %v5158 = vunpack.c.l.b16 %v5026
      %v5159 = vunpack.c.l.b16 %v5027
      %v5160 = vunpack.c.l.b16 %v5028
      %v5161 = vunpack.c.l.b16 %v5029
      %v5162 = vunpack.c.l.b16 %v5030
      %v5163 = vpack.c.b16 %v5100, %v5099
      %v5164 = vpack.c.b16 %v5102, %v5101
      %v5165 = vpack.c.b16 %v5104, %v5103
      %v5166 = vpack.c.b16 %v5106, %v5105
      %v5167 = vpack.c.b16 %v5108, %v5107
      %v5168 = vpack.c.b16 %v5110, %v5109
      %v5169 = vpack.c.b16 %v5112, %v5111
      %v5170 = vpack.c.b16 %v5114, %v5113
      %v5171 = vpack.c.b16 %v5116, %v5115
      %v5172 = vpack.c.b16 %v5118, %v5117
      %v5173 = vpack.c.b16 %v5120, %v5119
      %v5174 = vpack.c.b16 %v5122, %v5121
      %v5175 = vpack.c.b16 %v5124, %v5123
      %v5176 = vpack.c.b16 %v5126, %v5125
      %v5177 = vpack.c.b16 %v5128, %v5127
      %v5178 = vpack.c.b16 %v5130, %v5129
      %v5179 = vpack.c.b16 %v5132, %v5131
      %v5180 = vpack.c.b16 %v5134, %v5133
      %v5181 = vpack.c.b16 %v5136, %v5135
      %v5182 = vpack.c.b16 %v5138, %v5137
      %v5183 = vpack.c.b16 %v5140, %v5139
      %v5184 = vpack.c.b16 %v5142, %v5141
      %v5185 = vpack.c.b16 %v5144, %v5143
      %v5186 = vpack.c.b16 %v5146, %v5145
      %v5187 = vpack.c.b16 %v5148, %v5147
      %v5188 = vpack.c.b16 %v5150, %v5149
      %v5189 = vpack.c.b16 %v5152, %v5151
      %v5190 = vpack.c.b16 %v5154, %v5153
      %v5191 = vpack.c.b16 %v5156, %v5155
      %v5192 = vpack.c.b16 %v5158, %v5157
      %v5193 = vpack.c.b16 %v5160, %v5159
      %v5194 = vpack.c.b16 %v5162, %v5161
      %5227 = vmatpush.bf16.msra.mxu0 %v5170
      %5228 = vmatpush.bf16.msra.mxu0 %v5169
      %5229 = vmatpush.bf16.msra.mxu0 %v5168
      %5230 = vmatpush.bf16.msra.mxu0 %v5167
      %5231 = vmatpush.bf16.msra.mxu0 %v5166
      %5232 = vmatpush.bf16.msra.mxu0 %v5165
      %5233 = vmatpush.bf16.msra.mxu0 %v5164
      %5234 = vmatpush.bf16.msra.mxu0 %v5163
      %5235 = vmatmul.bf16.gmra.mxu0 %v4935
      %v5236 = vpop.f32.mrf.mxu0
      %v5237 = vadd.f32 %v5033, %v5236
      %v5238 = vpop.f32.mrf.mxu0
      %v5239 = vadd.f32 %v5033, %v5238
      %5240 = vmatmul.bf16.gmra.mxu0 %v4939
      %v5241 = vpop.f32.mrf.mxu0
      %v5242 = vadd.f32 %v5033, %v5241
      %v5243 = vpop.f32.mrf.mxu0
      %v5244 = vadd.f32 %v5033, %v5243
      %5245 = vmatmul.bf16.gmra.mxu0 %v4943
      %v5246 = vpop.f32.mrf.mxu0
      %v5247 = vadd.f32 %v5033, %v5246
      %v5248 = vpop.f32.mrf.mxu0
      %v5249 = vadd.f32 %v5033, %v5248
      %5250 = vmatmul.bf16.gmra.mxu0 %v4947
      %v5251 = vpop.f32.mrf.mxu0
      %v5252 = vadd.f32 %v5033, %v5251
      %v5253 = vpop.f32.mrf.mxu0
      %v5254 = vadd.f32 %v5033, %v5253
      %5255 = vmatmul.bf16.gmra.mxu0 %v4951
      %v5256 = vpop.f32.mrf.mxu0
      %v5257 = vadd.f32 %v5033, %v5256
      %v5258 = vpop.f32.mrf.mxu0
      %v5259 = vadd.f32 %v5033, %v5258
      %5260 = vmatmul.bf16.gmra.mxu0 %v4955
      %v5261 = vpop.f32.mrf.mxu0
      %v5262 = vadd.f32 %v5033, %v5261
      %v5263 = vpop.f32.mrf.mxu0
      %v5264 = vadd.f32 %v5033, %v5263
      %5265 = vmatmul.bf16.gmra.mxu0 %v4959
      %v5266 = vpop.f32.mrf.mxu0
      %v5267 = vadd.f32 %v5033, %v5266
      %v5268 = vpop.f32.mrf.mxu0
      %v5269 = vadd.f32 %v5033, %v5268
      %5270 = vmatmul.bf16.gmra.mxu0 %v4963
      %v5271 = vpop.f32.mrf.mxu0
      %v5272 = vadd.f32 %v5033, %v5271
      %v5273 = vpop.f32.mrf.mxu0
      %v5274 = vadd.f32 %v5033, %v5273
      %5275 = vdwg.mxu0
      %5276 = vmatpush.bf16.msra.mxu0 %v5178
      %5277 = vmatpush.bf16.msra.mxu0 %v5177
      %5278 = vmatpush.bf16.msra.mxu0 %v5176
      %5279 = vmatpush.bf16.msra.mxu0 %v5175
      %5280 = vmatpush.bf16.msra.mxu0 %v5174
      %5281 = vmatpush.bf16.msra.mxu0 %v5173
      %5282 = vmatpush.bf16.msra.mxu0 %v5172
      %5283 = vmatpush.bf16.msra.mxu0 %v5171
      %5284 = vmatmul.bf16.gmra.mxu0 %v4936
      %v5285 = vpop.f32.mrf.mxu0
      %v5286 = vadd.f32 %v5237, %v5285
      %v5287 = vpop.f32.mrf.mxu0
      %v5288 = vadd.f32 %v5239, %v5287
      %5289 = vmatmul.bf16.gmra.mxu0 %v4940
      %v5290 = vpop.f32.mrf.mxu0
      %v5291 = vadd.f32 %v5242, %v5290
      %v5292 = vpop.f32.mrf.mxu0
      %v5293 = vadd.f32 %v5244, %v5292
      %5294 = vmatmul.bf16.gmra.mxu0 %v4944
      %v5295 = vpop.f32.mrf.mxu0
      %v5296 = vadd.f32 %v5247, %v5295
      %v5297 = vpop.f32.mrf.mxu0
      %v5298 = vadd.f32 %v5249, %v5297
      %5299 = vmatmul.bf16.gmra.mxu0 %v4948
      %v5300 = vpop.f32.mrf.mxu0
      %v5301 = vadd.f32 %v5252, %v5300
      %v5302 = vpop.f32.mrf.mxu0
      %v5303 = vadd.f32 %v5254, %v5302
      %5304 = vmatmul.bf16.gmra.mxu0 %v4952
      %v5305 = vpop.f32.mrf.mxu0
      %v5306 = vadd.f32 %v5257, %v5305
      %v5307 = vpop.f32.mrf.mxu0
      %v5308 = vadd.f32 %v5259, %v5307
      %5309 = vmatmul.bf16.gmra.mxu0 %v4956
      %v5310 = vpop.f32.mrf.mxu0
      %v5311 = vadd.f32 %v5262, %v5310
      %v5312 = vpop.f32.mrf.mxu0
      %v5313 = vadd.f32 %v5264, %v5312
      %5314 = vmatmul.bf16.gmra.mxu0 %v4960
      %v5315 = vpop.f32.mrf.mxu0
      %v5316 = vadd.f32 %v5267, %v5315
      %v5317 = vpop.f32.mrf.mxu0
      %v5318 = vadd.f32 %v5269, %v5317
      %5319 = vmatmul.bf16.gmra.mxu0 %v4964
      %v5320 = vpop.f32.mrf.mxu0
      %v5321 = vadd.f32 %v5272, %v5320
      %v5322 = vpop.f32.mrf.mxu0
      %v5323 = vadd.f32 %v5274, %v5322
      %5324 = vdwg.mxu0
      %5325 = vmatpush.bf16.msra.mxu0 %v5186
      %5326 = vmatpush.bf16.msra.mxu0 %v5185
      %5327 = vmatpush.bf16.msra.mxu0 %v5184
      %5328 = vmatpush.bf16.msra.mxu0 %v5183
      %5329 = vmatpush.bf16.msra.mxu0 %v5182
      %5330 = vmatpush.bf16.msra.mxu0 %v5181
      %5331 = vmatpush.bf16.msra.mxu0 %v5180
      %5332 = vmatpush.bf16.msra.mxu0 %v5179
      %5333 = vmatmul.bf16.gmra.mxu0 %v4937
      %v5334 = vpop.f32.mrf.mxu0
      %v5335 = vadd.f32 %v5286, %v5334
      %v5336 = vpop.f32.mrf.mxu0
      %v5337 = vadd.f32 %v5288, %v5336
      %5338 = vmatmul.bf16.gmra.mxu0 %v4941
      %v5339 = vpop.f32.mrf.mxu0
      %v5340 = vadd.f32 %v5291, %v5339
      %v5341 = vpop.f32.mrf.mxu0
      %v5342 = vadd.f32 %v5293, %v5341
      %5343 = vmatmul.bf16.gmra.mxu0 %v4945
      %v5344 = vpop.f32.mrf.mxu0
      %v5345 = vadd.f32 %v5296, %v5344
      %v5346 = vpop.f32.mrf.mxu0
      %v5347 = vadd.f32 %v5298, %v5346
      %5348 = vmatmul.bf16.gmra.mxu0 %v4949
      %v5349 = vpop.f32.mrf.mxu0
      %v5350 = vadd.f32 %v5301, %v5349
      %v5351 = vpop.f32.mrf.mxu0
      %v5352 = vadd.f32 %v5303, %v5351
      %5353 = vmatmul.bf16.gmra.mxu0 %v4953
      %v5354 = vpop.f32.mrf.mxu0
      %v5355 = vadd.f32 %v5306, %v5354
      %v5356 = vpop.f32.mrf.mxu0
      %v5357 = vadd.f32 %v5308, %v5356
      %5358 = vmatmul.bf16.gmra.mxu0 %v4957
      %v5359 = vpop.f32.mrf.mxu0
      %v5360 = vadd.f32 %v5311, %v5359
      %v5361 = vpop.f32.mrf.mxu0
      %v5362 = vadd.f32 %v5313, %v5361
      %5363 = vmatmul.bf16.gmra.mxu0 %v4961
      %v5364 = vpop.f32.mrf.mxu0
      %v5365 = vadd.f32 %v5316, %v5364
      %v5366 = vpop.f32.mrf.mxu0
      %v5367 = vadd.f32 %v5318, %v5366
      %5368 = vmatmul.bf16.gmra.mxu0 %v4965
      %v5369 = vpop.f32.mrf.mxu0
      %v5370 = vadd.f32 %v5321, %v5369
      %v5371 = vpop.f32.mrf.mxu0
      %v5372 = vadd.f32 %v5323, %v5371
      %5373 = vdwg.mxu0
      %5374 = vmatpush.bf16.msra.mxu0 %v5194
      %5375 = vmatpush.bf16.msra.mxu0 %v5193
      %5376 = vmatpush.bf16.msra.mxu0 %v5192
      %5377 = vmatpush.bf16.msra.mxu0 %v5191
      %5378 = vmatpush.bf16.msra.mxu0 %v5190
      %5379 = vmatpush.bf16.msra.mxu0 %v5189
      %5380 = vmatpush.bf16.msra.mxu0 %v5188
      %5381 = vmatpush.bf16.msra.mxu0 %v5187
      %5382 = vmatmul.bf16.gmra.mxu0 %v4938
      %v5383 = vpop.f32.mrf.mxu0
      %v5384 = vadd.f32 %v5335, %v5383
      %v5385 = vpop.f32.mrf.mxu0
      %v5386 = vadd.f32 %v5337, %v5385
      %5387 = vmatmul.bf16.gmra.mxu0 %v4942
      %v5388 = vpop.f32.mrf.mxu0
      %v5389 = vadd.f32 %v5340, %v5388
      %v5390 = vpop.f32.mrf.mxu0
      %v5391 = vadd.f32 %v5342, %v5390
      %5392 = vmatmul.bf16.gmra.mxu0 %v4946
      %v5393 = vpop.f32.mrf.mxu0
      %v5394 = vadd.f32 %v5345, %v5393
      %v5395 = vpop.f32.mrf.mxu0
      %v5396 = vadd.f32 %v5347, %v5395
      %5397 = vmatmul.bf16.gmra.mxu0 %v4950
      %v5398 = vpop.f32.mrf.mxu0
      %v5399 = vadd.f32 %v5350, %v5398
      %v5400 = vpop.f32.mrf.mxu0
      %v5401 = vadd.f32 %v5352, %v5400
      %5402 = vmatmul.bf16.gmra.mxu0 %v4954
      %v5403 = vpop.f32.mrf.mxu0
      %v5404 = vadd.f32 %v5355, %v5403
      %v5405 = vpop.f32.mrf.mxu0
      %v5406 = vadd.f32 %v5357, %v5405
      %5407 = vmatmul.bf16.gmra.mxu0 %v4958
      %v5408 = vpop.f32.mrf.mxu0
      %v5409 = vadd.f32 %v5360, %v5408
      %v5410 = vpop.f32.mrf.mxu0
      %v5411 = vadd.f32 %v5362, %v5410
      %5412 = vmatmul.bf16.gmra.mxu0 %v4962
      %v5413 = vpop.f32.mrf.mxu0
      %v5414 = vadd.f32 %v5365, %v5413
      %v5415 = vpop.f32.mrf.mxu0
      %v5416 = vadd.f32 %v5367, %v5415
      %5417 = vmatmul.bf16.gmra.mxu0 %v4966
      %v5418 = vpop.f32.mrf.mxu0
      %v5419 = vadd.f32 %v5370, %v5418
      %v5420 = vpop.f32.mrf.mxu0
      %v5421 = vadd.f32 %v5372, %v5420
      %5422 = vdwg.mxu0
      %v5423 = vpack.c.bf16 %v5384, %v5384
      %v5424 = vpack.c.bf16 %v5386, %v5386
      %v5425 = vpack.c.bf16 %v5389, %v5389
      %v5426 = vpack.c.bf16 %v5391, %v5391
      %v5427 = vpack.c.bf16 %v5394, %v5394
      %v5428 = vpack.c.bf16 %v5396, %v5396
      %v5429 = vpack.c.bf16 %v5399, %v5399
      %v5430 = vpack.c.bf16 %v5401, %v5401
      %v5431 = vpack.c.bf16 %v5404, %v5404
      %v5432 = vpack.c.bf16 %v5406, %v5406
      %v5433 = vpack.c.bf16 %v5409, %v5409
      %v5434 = vpack.c.bf16 %v5411, %v5411
      %v5435 = vpack.c.bf16 %v5414, %v5414
      %v5436 = vpack.c.bf16 %v5416, %v5416
      %v5437 = vpack.c.bf16 %v5419, %v5419
      %v5438 = vpack.c.bf16 %v5421, %v5421
      %5439 = vst [vmem:[%s283] sm:$0xf] %v5423
      %5440 = vst [vmem:[%s283 + $0x4] sm:$0xf] %v5424
      %5441 = vst [vmem:[%s283 + $0x8] sm:$0xf] %v5425
      %5442 = vst [vmem:[%s283 + $0xc] sm:$0xf] %v5426
      %5443 = vst [vmem:[%s283 + $0x10] sm:$0xf] %v5427
      %5444 = vst [vmem:[%s283 + $0x14] sm:$0xf] %v5428
      %5445 = vst [vmem:[%s283 + $0x18] sm:$0xf] %v5429
      %5446 = vst [vmem:[%s283 + $0x1c] sm:$0xf] %v5430
      %5447 = vst [vmem:[%s283 + $0x20] sm:$0xf] %v5431
      %5448 = vst [vmem:[%s283 + $0x24] sm:$0xf] %v5432
      %5449 = vst [vmem:[%s283 + $0x28] sm:$0xf] %v5433
      %5450 = vst [vmem:[%s283 + $0x2c] sm:$0xf] %v5434
      %5451 = vst [vmem:[%s283 + $0x30] sm:$0xf] %v5435
      %5452 = vst [vmem:[%s283 + $0x34] sm:$0xf] %v5436
      %5453 = vst [vmem:[%s283 + $0x38] sm:$0xf] %v5437
      %5454 = vst [vmem:[%s283 + $0x3c] sm:$0xf] %v5438
      %s5455 = smul.u32 16, %s18
      %p5456 = scmp.lt.s32.totalorder %s5455, 31
      %s5457 = scalar_select %p5456, %s5455, 31
      %s5458 = smul.addr %s5457, 4
      %s5459 = scalar_lea.vmem %s7, %s5458
      // Predicated region
      $region49: #{mlp_forward.1} parent=47 // pred_check
        %p5460 = pneg %p188
      $region50: #{mlp_forward.1} parent=47 // pred_check_branch
        %5462 = sbr.rel (%p5460) target = $region52
      $region51: #{mlp_forward.1} parent=47 // pred_region
        %s5463 = smul.u32 16, %s18
      $region52: #{mlp_forward.1} parent=47 // pred_fallthru
        _
    $region48: #{mlp_forward.1} parent=5 // pred_fallthru
      _
    %p5464 = scmp.le.s32.totalorder 2, %s13
    // Predicated region
    $region53: #{mlp_forward.1} parent=5 // pred_check
      %p5465 = pneg %p5464
    $region54: #{mlp_forward.1} parent=5 // pred_check_branch
      %5467 = sbr.rel (%p5465) target = $region56
    $region55: #{mlp_forward.1} parent=5 // pred_region
      %s5468 = ssub.s32 %s13, 2
      // Predicated region
      $region57: #{mlp_forward.1} parent=55 // pred_check
        %p5469 = pneg %p194
      $region58: #{mlp_forward.1} parent=55 // pred_check_branch
        %5471 = sbr.rel (%p5469) target = $region60
      $region59: #{mlp_forward.1} parent=55 // pred_region
        %s5472 = smul.u32 16, %s19
        %p5473 = scmp.lt.s32.totalorder %s5472, 31
        %s5474 = scalar_select %p5473, %s5472, 31
        %s5475 = smul.addr %s5474, 4
        %s5476 = scalar_lea.vmem %s7, %s5475
      $region60: #{mlp_forward.1} parent=55 // pred_fallthru
        _
    $region56: #{mlp_forward.1} parent=5 // pred_fallthru
      _
  $region6: #{mlp_forward.1} parent=0 // loop_footer
    %s17 = sadd.s32 1, %s13
  $region7: #{mlp_forward.1} parent=0 // loop_footer_branch
    %12 = sbr.rel target = $region3
  $region8: #{mlp_forward.1} parent=0 // loop_exit
    _

</llo_original>
